<compile_context>
chip_gen: v7x
topology: tpu7x:2x2x1
jax: 0.10.0
libtpu: 0.0.40
codegen_flags: <defaults>
</compile_context>

<pallas_src>
import functools

import jax
import jax.numpy as jnp
from jax import lax
from jax.experimental import pallas as pl
from jax.experimental.pallas import tpu as pltpu

LN_EPS = 1e-6          # partial(nn.LayerNorm, eps=1e-06)
NEG_INF = -1e30        # stand-in for float('-inf') in the attention mask
O_PAD = 128            # lane-dense padding of the 3-wide pcl head output


def _round_up(x, m):
    return ((x + m - 1) // m) * m


# ----------------------------------------------------------------------------
# math helpers (pure jnp; usable both in-kernel and in the JAX reference)
# ----------------------------------------------------------------------------
def _layernorm(x, g, b):
    mu = jnp.mean(x, axis=-1, keepdims=True)
    var = jnp.mean(jnp.square(x - mu), axis=-1, keepdims=True)
    return (x - mu) * lax.rsqrt(var + LN_EPS) * g + b


def _gelu_tanh(x):
    # tanh-approx GELU (EUP tanh); |err| vs exact erf GELU < ~3e-3.
    c = 0.7978845608028654  # sqrt(2/pi)
    return 0.5 * x * (1.0 + jnp.tanh(c * (x + 0.044715 * x * x * x)))


# ----------------------------------------------------------------------------
# fused decoder kernel: grid=(B, depth); activation + mask resident in VMEM
# ----------------------------------------------------------------------------
def _decoder_kernel(N_pad, P1, P1_pad, P, P_pad, H, depth,
                    x_ref,
                    ln1g_ref, ln1b_ref, wqkv_ref, bqkv_ref, wproj_ref, bproj_ref,
                    ln2g_ref, ln2b_ref, w1_ref, b1_ref, w2_ref, b2_ref,
                    normg_ref, normb_ref, pclw_ref, pclb_ref,
                    o_ref,
                    x_s, mask_s, ao_s):
    l = pl.program_id(1)
    D = x_s.shape[-1]
    hd = D // H
    f32 = jnp.float32
    bf16 = jnp.bfloat16

    # ---- layer 0 of each batch: load activation + build the mask ONCE ------
    # (must run per batch element: with the "parallel" batch axis each core
    #  owns its own scratch buffers)
    @pl.when(l == 0)
    def _():
        x_s[...] = x_ref[0]
        rows = lax.broadcasted_iota(jnp.int32, (N_pad, N_pad), 0)
        cols = lax.broadcasted_iota(jnp.int32, (N_pad, N_pad), 1)
        # padded columns (alignment padding) are always masked; unseen (point)
        # columns are masked except their own diagonal — matches the PyTorch mask.
        pad_col = ((cols >= P1) & (cols < P1_pad)) | (cols >= P1_pad + P)
        unseen = (cols >= P1_pad) & (cols < P1_pad + P) & (rows != cols)
        mask_s[...] = jnp.where(pad_col | unseen, NEG_INF, 0.0).astype(f32)

    x = x_s[...]                                   # (N_pad, D) resident activation
    mask = mask_s[...]                             # (N_pad, N_pad)

    # ---- attention branch ----------------------------------------------------
    h = _layernorm(x, ln1g_ref[0], ln1b_ref[0])
    # fused, lane-dense QKV projection (scale already folded into the Q part)
    qkv = (jnp.dot(h.astype(bf16), wqkv_ref[0], preferred_element_type=f32)
           + bqkv_ref[0])                          # (N_pad, 3D), f32

    # per-head score / PV dots on static lane slices; per-head outputs land in
    # the (N_pad, D) scratch so the output projection is ONE full-width matmul.
    for hh in range(H):                            # static, small H
        qh = qkv[:, hh * hd:(hh + 1) * hd]
        kh = qkv[:, D + hh * hd:D + (hh + 1) * hd]
        vh = qkv[:, 2 * D + hh * hd:2 * D + (hh + 1) * hd]
        s = lax.dot_general(qh, kh, (((1,), (1,)), ((), ())),
                            preferred_element_type=f32)          # (N_pad, N_pad)
        s = s + mask
        s = s - jnp.max(s, axis=-1, keepdims=True)
        p = jnp.exp(s)
        p = p * pl.reciprocal(jnp.sum(p, axis=-1, keepdims=True), approx=True)
        ao_s[:, hh * hd:(hh + 1) * hd] = jnp.dot(p, vh, preferred_element_type=f32)

    attn = (jnp.dot(ao_s[...].astype(bf16), wproj_ref[0], preferred_element_type=f32)
            + bproj_ref[0])
    x = x + attn

    # ---- MLP branch ----------------------------------------------------------
    h2 = _layernorm(x, ln2g_ref[0], ln2b_ref[0])
    m = jnp.dot(h2.astype(bf16), w1_ref[0], preferred_element_type=f32) + b1_ref[0]
    m = _gelu_tanh(m)
    x = x + jnp.dot(m.astype(bf16), w2_ref[0], preferred_element_type=f32) + b2_ref[0]

    x_s[...] = x

    # ---- last layer: final LayerNorm + pcl head over the POINT rows only ----
    @pl.when(l == depth - 1)
    def _():
        pts = x[P1_pad:P1_pad + P_pad]             # 8-aligned static slice
        hf = _layernorm(pts, normg_ref[...], normb_ref[...])
        o_ref[0] = (jnp.dot(hf, pclw_ref[...], preferred_element_type=f32)
                    + pclb_ref[...]).astype(o_ref.dtype)


# ----------------------------------------------------------------------------
# wrapper: embed + pad in XLA, stack per-layer weights (bf16), one pallas_call
# ----------------------------------------------------------------------------
def mae_decoder_forward(x, params, cfg):
    f32 = jnp.float32
    bf16 = jnp.bfloat16
    B, P1, E = x.shape
    D = cfg["decoder_embed_dim"]
    P = cfg["point_num"]
    H = cfg["num_heads"]
    L = cfg["depth"]
    Hm = int(D * cfg["mlp_ratio"])
    hd = D // H
    assert D % H == 0
    assert params["point_embed"].shape[1] == D, "point_dim must equal decoder_embed_dim"

    # point rows start on an 8-sublane boundary so the epilogue slice is aligned
    P1_pad = _round_up(P1, 8)
    P_pad = _round_up(P, 8)
    N_pad = P1_pad + P_pad

    # decoder_embed + pos embed (tiny one-off matmul, kept out of the kernel so
    # its operands don't stay VMEM-resident across the depth loop — v7x budget)
    h_patch = (x.astype(f32) @ params["embed_w"] + params["embed_b"][None, None, :]
               + params["pos_embed"][None, :, :])                       # (B, P1, D)
    x_emb = jnp.zeros((B, N_pad, D), f32)
    x_emb = x_emb.at[:, :P1, :].set(h_patch)
    x_emb = x_emb.at[:, P1_pad:P1_pad + P, :].set(
        jnp.broadcast_to(params["point_embed"][None].astype(f32), (B, P, D)))

    scale = float(hd) ** -0.5

    def stack(fn, dtype=f32):
        return jnp.stack([fn(blk) for blk in params["blocks"]], axis=0).astype(dtype)

    # hd**-0.5 folded into the Q projection; streamed matmul weights in bf16
    wqkv_s = stack(lambda p: jnp.concatenate(
        [p["wqkv"][:, :D] * scale, p["wqkv"][:, D:]], axis=1), bf16)     # (L, D, 3D)
    bqkv_s = stack(lambda p: jnp.concatenate(
        [p["bqkv"][:D] * scale, p["bqkv"][D:]]).reshape(1, 3 * D))       # (L, 1, 3D)
    wproj_s = stack(lambda p: p["wproj"], bf16)                          # (L, D, D)
    bproj_s = stack(lambda p: p["bproj"].reshape(1, D))
    ln1g_s = stack(lambda p: p["ln1_g"].reshape(1, D))
    ln1b_s = stack(lambda p: p["ln1_b"].reshape(1, D))
    ln2g_s = stack(lambda p: p["ln2_g"].reshape(1, D))
    ln2b_s = stack(lambda p: p["ln2_b"].reshape(1, D))
    w1_s = stack(lambda p: p["w1"], bf16)                                # (L, D, Hm)
    b1_s = stack(lambda p: p["b1"].reshape(1, Hm))
    w2_s = stack(lambda p: p["w2"], bf16)                                # (L, Hm, D)
    b2_s = stack(lambda p: p["b2"].reshape(1, D))

    norm_g = params["norm_g"].reshape(1, D).astype(f32)
    norm_b = params["norm_b"].reshape(1, D).astype(f32)
    # lane-dense (128-wide) pcl head; real outputs live in columns 0..2
    pclw_pad = jnp.zeros((D, O_PAD), f32).at[:, :3].set(params["pcl_w"])
    pclb_pad = jnp.zeros((1, O_PAD), f32).at[0, :3].set(params["pcl_b"])

    def wspec(*dims):                              # per-layer (depth-streamed) block
        nd = len(dims)
        return pl.BlockSpec((1,) + tuple(dims), lambda b, l: (l,) + (0,) * nd)

    def cspec(*dims):                              # constant block
        nd = len(dims)
        return pl.BlockSpec(tuple(dims), lambda b, l: (0,) * nd)

    kernel = functools.partial(_decoder_kernel, N_pad, P1, P1_pad, P, P_pad, H, L)

    # VMEM budget derived from footprint (resident scratch + constants +
    # double-buffered bf16 per-layer weights + transient intermediates)
    per_layer_w = (D * 3 * D + D * D + D * Hm + Hm * D) * 2             # bf16 bytes
    per_layer_b = (3 * D + 9 * D + Hm) * 4
    resident = (2 * N_pad * D + N_pad * N_pad) * 4                      # x_s + ao_s + mask_s
    consts = (D * O_PAD + O_PAD + 2 * D) * 4
    io = (2 * N_pad * D + 2 * P_pad * O_PAD) * 4
    work = (N_pad * 3 * D + 2 * N_pad * N_pad + N_pad * Hm) * 4
    est = resident + consts + io + 2 * (per_layer_w + per_layer_b) + work
    vmem_limit = int(min(96 * 1024 * 1024, max(32 * 1024 * 1024, 2 * est)))

    out = pl.pallas_call(
        kernel,
        out_shape=jax.ShapeDtypeStruct((B, P_pad, O_PAD), f32),
        grid=(B, L),
        in_specs=[
            pl.BlockSpec((1, N_pad, D), lambda b, l: (b, 0, 0)),        # embedded tokens
            wspec(1, D), wspec(1, D),                                   # ln1 g/b
            wspec(D, 3 * D), wspec(1, 3 * D),                           # wqkv (bf16) / bqkv
            wspec(D, D), wspec(1, D),                                   # wproj (bf16) / bproj
            wspec(1, D), wspec(1, D),                                   # ln2 g/b
            wspec(D, Hm), wspec(1, Hm),                                 # w1 (bf16) / b1
            wspec(Hm, D), wspec(1, D),                                  # w2 (bf16) / b2
            cspec(1, D), cspec(1, D),                                   # final norm g/b
            cspec(D, O_PAD), cspec(1, O_PAD),                           # pcl head (lane-padded)
        ],
        out_specs=pl.BlockSpec((1, P_pad, O_PAD), lambda b, l: (b, 0, 0)),
        scratch_shapes=[
            pltpu.VMEM((N_pad, D), f32),         # resident activation
            pltpu.VMEM((N_pad, N_pad), f32),     # attention mask (built at l == 0)
            pltpu.VMEM((N_pad, D), f32),         # per-head attention output (pre out-proj)
        ],
        compiler_params=pltpu.CompilerParams(
            dimension_semantics=("parallel", "arbitrary"),
            vmem_limit_bytes=vmem_limit,
        ),
    )(x_emb,
      ln1g_s, ln1b_s, wqkv_s, bqkv_s, wproj_s, bproj_s,
      ln2g_s, ln2b_s, w1_s, b1_s, w2_s, b2_s,
      norm_g, norm_b, pclw_pad, pclb_pad)

    return out[:, :P, :3]


# ----------------------------------------------------------------------------
# parameter init (matches the PyTorch module's init scheme)
# ----------------------------------------------------------------------------
def get_2d_sincos_pos_embed(embed_dim, grid_size, cls_token=True):
    def sincos_1d(dim, pos):
        omega = jnp.arange(dim // 2, dtype=jnp.float32) / (dim / 2.0)
        omega = 1.0 / (10000.0 ** omega)
        out = pos[:, None] * omega[None, :]
        return jnp.concatenate([jnp.sin(out), jnp.cos(out)], axis=1)

    grid_h = jnp.arange(grid_size, dtype=jnp.float32)
    grid_w = jnp.arange(grid_size, dtype=jnp.float32)
    gw, gh = jnp.meshgrid(grid_w, grid_h)
    emb_h = sincos_1d(embed_dim // 2, gh.reshape(-1))
    emb_w = sincos_1d(embed_dim // 2, gw.reshape(-1))
    pos = jnp.concatenate([emb_h, emb_w], axis=1)
    if cls_token:
        pos = jnp.concatenate([jnp.zeros((1, embed_dim), jnp.float32), pos], axis=0)
    return pos.astype(jnp.float32)


def xavier_uniform(key, fan_in, fan_out):
    limit = (6.0 / (fan_in + fan_out)) ** 0.5
    return jax.random.uniform(key, (fan_in, fan_out), jnp.float32, -limit, limit)


def init_params(key, cfg):
    E = cfg["encoder_embed_dim"]
    D = cfg["decoder_embed_dim"]
    P = cfg["point_num"]
    Hm = int(D * cfg["mlp_ratio"])
    keys = iter(jax.random.split(key, 3 + 4 * cfg["depth"]))
    params = {
        "embed_w": xavier_uniform(next(keys), E, D),
        "embed_b": jnp.zeros((D,), jnp.float32),
        "pos_embed": get_2d_sincos_pos_embed(D, int(cfg["num_patches"] ** 0.5), True),
        "point_embed": jax.random.normal(next(keys), (P, cfg["point_dim"]), jnp.float32),
        "pcl_w": xavier_uniform(next(keys), D, 3),
        "pcl_b": jnp.zeros((3,), jnp.float32),
        "norm_g": jnp.ones((D,), jnp.float32),
        "norm_b": jnp.zeros((D,), jnp.float32),
        "blocks": [],
    }
    for _ in range(cfg["depth"]):
        params["blocks"].append({
            "ln1_g": jnp.ones((D,), jnp.float32), "ln1_b": jnp.zeros((D,), jnp.float32),
            "wqkv": xavier_uniform(next(keys), D, 3 * D), "bqkv": jnp.zeros((3 * D,), jnp.float32),
            "wproj": xavier_uniform(next(keys), D, D), "bproj": jnp.zeros((D,), jnp.float32),
            "ln2_g": jnp.ones((D,), jnp.float32), "ln2_b": jnp.zeros((D,), jnp.float32),
            "w1": xavier_uniform(next(keys), D, Hm), "b1": jnp.zeros((Hm,), jnp.float32),
            "w2": xavier_uniform(next(keys), Hm, D), "b2": jnp.zeros((D,), jnp.float32),
        })
    return params


# ----------------------------------------------------------------------------
# pure-JAX reference (eval semantics, exact f32) for a correctness self-check
# ----------------------------------------------------------------------------
def reference_forward(x, params, cfg):
    D = cfg["decoder_embed_dim"]
    P = cfg["point_num"]
    H = cfg["num_heads"]
    B = x.shape[0]
    h = x @ params["embed_w"] + params["embed_b"] + params["pos_embed"][None]
    tokens = jnp.broadcast_to(params["point_embed"][None], (B,) + params["point_embed"].shape)
    h = jnp.concatenate([h, tokens], axis=1)
    N = h.shape[1]
    P1 = N - P
    mask = jnp.zeros((N, N), jnp.float32).at[:, P1:].set(NEG_INF)
    idx = jnp.arange(P1, N)
    mask = mask.at[idx, idx].set(0.0)
    hd = D // H
    scale = hd ** -0.5
    for blk in params["blocks"]:
        y = _layernorm(h, blk["ln1_g"], blk["ln1_b"])
        qkv = (y @ blk["wqkv"] + blk["bqkv"]).reshape(B, N, 3, H, hd).transpose(2, 0, 3, 1, 4)
        q, k, v = qkv[0], qkv[1], qkv[2]
        s = jnp.einsum("bhnd,bhmd->bhnm", q, k) * scale + mask
        p = jax.nn.softmax(s, axis=-1)
        o = jnp.einsum("bhnm,bhmd->bhnd", p, v).transpose(0, 2, 1, 3).reshape(B, N, D)
        h = h + o @ blk["wproj"] + blk["bproj"]
        y2 = _layernorm(h, blk["ln2_g"], blk["ln2_b"])
        m = jax.nn.gelu(y2 @ blk["w1"] + blk["b1"], approximate=False)
        h = h + m @ blk["w2"] + blk["b2"]
    h = _layernorm(h, params["norm_g"], params["norm_b"])
    return h[:, -P:, :] @ params["pcl_w"] + params["pcl_b"]


if __name__ == "__main__":
    cfg = dict(num_patches=16, encoder_embed_dim=32, point_num=16, point_dim=32,
               decoder_embed_dim=32, depth=2, num_heads=4, mlp_ratio=4.0)

    root = jax.random.PRNGKey(0)
    pkey, xkey = jax.random.split(root)
    params = init_params(pkey, cfg)
    x = jax.random.normal(xkey, (2, cfg["num_patches"] + 1, cfg["encoder_embed_dim"]),
                          jnp.float32)

    # TODO(synk): Dropout / DropPath(0.1) are train-time stochastic ops; implemented as identity (eval).
    out = mae_decoder_forward(x, params, cfg)
    out = jax.block_until_ready(out)
    assert out.shape == (2, cfg["point_num"], 3), out.shape
    assert bool(jnp.all(jnp.isfinite(out)))

    # Kernel uses bf16-streamed weights, tanh-GELU and an approx softmax
    # reciprocal, so compare with a mixed abs/rel tolerance vs the exact-f32 ref.
    ref = reference_forward(x, params, cfg)
    tol = 5e-2 + 5e-2 * jnp.abs(ref)
    assert bool(jnp.all(jnp.abs(out - ref) <= tol)), float(jnp.max(jnp.abs(out - ref)))
    print("KERNEL_OK")
</pallas_src>

<mosaic_0001>
module attributes {stable_mosaic.version = 11 : i64} {
  func.func @_decoder_kernel(%arg0: i32, %arg1: i32, %arg2: memref<1x40x32xf32, #tpu.memory_space<vmem>>, %arg3: memref<1x1x32xf32, #tpu.memory_space<vmem>>, %arg4: memref<1x1x32xf32, #tpu.memory_space<vmem>>, %arg5: memref<1x32x96xbf16, #tpu.memory_space<vmem>>, %arg6: memref<1x1x96xf32, #tpu.memory_space<vmem>>, %arg7: memref<1x32x32xbf16, #tpu.memory_space<vmem>>, %arg8: memref<1x1x32xf32, #tpu.memory_space<vmem>>, %arg9: memref<1x1x32xf32, #tpu.memory_space<vmem>>, %arg10: memref<1x1x32xf32, #tpu.memory_space<vmem>>, %arg11: memref<1x32x128xbf16, #tpu.memory_space<vmem>>, %arg12: memref<1x1x128xf32, #tpu.memory_space<vmem>>, %arg13: memref<1x128x32xbf16, #tpu.memory_space<vmem>>, %arg14: memref<1x1x32xf32, #tpu.memory_space<vmem>>, %arg15: memref<1x32xf32, #tpu.memory_space<vmem>>, %arg16: memref<1x32xf32, #tpu.memory_space<vmem>>, %arg17: memref<32x128xf32, #tpu.memory_space<vmem>>, %arg18: memref<1x128xf32, #tpu.memory_space<vmem>>, %arg19: memref<1x16x128xf32, #tpu.memory_space<vmem>>, %arg20: memref<40x32xf32, #tpu.memory_space<vmem>>, %arg21: memref<40x40xf32, #tpu.memory_space<vmem>>, %arg22: memref<40x32xf32, #tpu.memory_space<vmem>>) attributes {dimension_semantics = [#tpu.dimension_semantics<parallel>, #tpu.dimension_semantics<arbitrary>], iteration_bounds = array<i64: 2, 2>, scalar_prefetch = 0 : i64, scratch_operands = 3 : i64, tpu.core_type = #tpu.core_type<tc>, window_params = [{transform_indices = @transform_0, window_bounds = array<i64: 1, 40, 32>}, {transform_indices = @transform_1, window_bounds = array<i64: 1, 1, 32>}, {transform_indices = @transform_2, window_bounds = array<i64: 1, 1, 32>}, {transform_indices = @transform_3, window_bounds = array<i64: 1, 32, 96>}, {transform_indices = @transform_4, window_bounds = array<i64: 1, 1, 96>}, {transform_indices = @transform_5, window_bounds = array<i64: 1, 32, 32>}, {transform_indices = @transform_6, window_bounds = array<i64: 1, 1, 32>}, {transform_indices = @transform_7, window_bounds = array<i64: 1, 1, 32>}, {transform_indices = @transform_8, window_bounds = array<i64: 1, 1, 32>}, {transform_indices = @transform_9, window_bounds = array<i64: 1, 32, 128>}, {transform_indices = @transform_10, window_bounds = array<i64: 1, 1, 128>}, {transform_indices = @transform_11, window_bounds = array<i64: 1, 128, 32>}, {transform_indices = @transform_12, window_bounds = array<i64: 1, 1, 32>}, {pipeline_mode = #tpu.pipeline_mode<synchronous>, transform_indices = @transform_13, window_bounds = array<i64: 1, 32>}, {pipeline_mode = #tpu.pipeline_mode<synchronous>, transform_indices = @transform_14, window_bounds = array<i64: 1, 32>}, {pipeline_mode = #tpu.pipeline_mode<synchronous>, transform_indices = @transform_15, window_bounds = array<i64: 32, 128>}, {pipeline_mode = #tpu.pipeline_mode<synchronous>, transform_indices = @transform_16, window_bounds = array<i64: 1, 128>}, {transform_indices = @transform_17, window_bounds = array<i64: 1, 16, 128>}]} {
    %c0_i32 = arith.constant 0 : i32
    %0 = arith.cmpi eq, %arg1, %c0_i32 : i32
    %1 = arith.extui %0 : i1 to i32
    %c0_i32_0 = arith.constant 0 : i32
    %2 = arith.cmpi ne, %1, %c0_i32_0 : i32
    scf.if %2 {
      %c0_83 = arith.constant 0 : index
      %c0_84 = arith.constant 0 : index
      %c0_85 = arith.constant 0 : index
      %177 = vector.load %arg2[%c0_83, %c0_84, %c0_85] : memref<1x40x32xf32, #tpu.memory_space<vmem>>, vector<1x40x32xf32>
      %178 = vector.shape_cast %177 : vector<1x40x32xf32> to vector<40x32xf32>
      %c0_86 = arith.constant 0 : index
      %c0_87 = arith.constant 0 : index
      %179 = vector.load %arg20[%c0_86, %c0_87] : memref<40x32xf32, #tpu.memory_space<vmem>>, vector<40x32xf32>
      tpu.vector_store %arg20[%c0_86, %c0_87], %178 {strides = array<i32>} : memref<40x32xf32, #tpu.memory_space<vmem>>, vector<40x32xf32>,
      %180 = tpu.iota {dimensions = array<i32: 0>} : vector<40x40xi32>
      %181 = tpu.iota {dimensions = array<i32: 1>} : vector<40x40xi32>
      %c17_i32 = arith.constant 17 : i32
      %182 = vector.broadcast %c17_i32 : i32 to vector<40x40xi32>
      %183 = arith.cmpi sge, %181, %182 : vector<40x40xi32>
      %c24_i32 = arith.constant 24 : i32
      %184 = vector.broadcast %c24_i32 : i32 to vector<40x40xi32>
      %185 = arith.cmpi slt, %181, %184 : vector<40x40xi32>
      %186 = arith.andi %183, %185 : vector<40x40xi1>
      %c40_i32 = arith.constant 40 : i32
      %187 = vector.broadcast %c40_i32 : i32 to vector<40x40xi32>
      %188 = arith.cmpi sge, %181, %187 : vector<40x40xi32>
      %189 = arith.ori %186, %188 : vector<40x40xi1>
      %c24_i32_88 = arith.constant 24 : i32
      %190 = vector.broadcast %c24_i32_88 : i32 to vector<40x40xi32>
      %191 = arith.cmpi sge, %181, %190 : vector<40x40xi32>
      %c40_i32_89 = arith.constant 40 : i32
      %192 = vector.broadcast %c40_i32_89 : i32 to vector<40x40xi32>
      %193 = arith.cmpi slt, %181, %192 : vector<40x40xi32>
      %194 = arith.andi %191, %193 : vector<40x40xi1>
      %195 = arith.cmpi ne, %180, %181 : vector<40x40xi32>
      %196 = arith.andi %194, %195 : vector<40x40xi1>
      %197 = arith.ori %189, %196 : vector<40x40xi1>
      %cst_90 = arith.constant -1.000000e+30 : f32
      %cst_91 = arith.constant 0.000000e+00 : f32
      %198 = vector.broadcast %cst_90 : f32 to vector<40x40xf32>
      %199 = vector.broadcast %cst_91 : f32 to vector<40x40xf32>
      %200 = arith.select %197, %198, %199 : vector<40x40xi1>, vector<40x40xf32>
      %c0_92 = arith.constant 0 : index
      %c0_93 = arith.constant 0 : index
      %201 = vector.load %arg21[%c0_92, %c0_93] : memref<40x40xf32, #tpu.memory_space<vmem>>, vector<40x40xf32>
      tpu.vector_store %arg21[%c0_92, %c0_93], %200 {strides = array<i32>} : memref<40x40xf32, #tpu.memory_space<vmem>>, vector<40x40xf32>,
    } else {
    }
    %c0 = arith.constant 0 : index
    %c0_1 = arith.constant 0 : index
    %3 = vector.load %arg20[%c0, %c0_1] : memref<40x32xf32, #tpu.memory_space<vmem>>, vector<40x32xf32>
    %c0_2 = arith.constant 0 : index
    %c0_3 = arith.constant 0 : index
    %4 = vector.load %arg21[%c0_2, %c0_3] : memref<40x40xf32, #tpu.memory_space<vmem>>, vector<40x40xf32>
    %c0_4 = arith.constant 0 : index
    %c0_5 = arith.constant 0 : index
    %c0_6 = arith.constant 0 : index
    %5 = vector.load %arg3[%c0_4, %c0_5, %c0_6] : memref<1x1x32xf32, #tpu.memory_space<vmem>>, vector<1x1x32xf32>
    %6 = vector.shape_cast %5 : vector<1x1x32xf32> to vector<1x32xf32>
    %c0_7 = arith.constant 0 : index
    %c0_8 = arith.constant 0 : index
    %c0_9 = arith.constant 0 : index
    %7 = vector.load %arg4[%c0_7, %c0_8, %c0_9] : memref<1x1x32xf32, #tpu.memory_space<vmem>>, vector<1x1x32xf32>
    %8 = vector.shape_cast %7 : vector<1x1x32xf32> to vector<1x32xf32>
    %cst = arith.constant dense<0.000000e+00> : vector<40xf32>
    %9 = vector.multi_reduction <add>, %3, %cst [1] : vector<40x32xf32> to vector<40xf32>
    %10 = vector.shape_cast %9 : vector<40xf32> to vector<40x1xf32>
    %cst_10 = arith.constant 3.200000e+01 : f32
    %11 = vector.broadcast %cst_10 : f32 to vector<40x1xf32>
    %12 = arith.divf %10, %11 : vector<40x1xf32>
    %13 = vector.broadcast %12 : vector<40x1xf32> to vector<40x32xf32>
    %14 = arith.subf %3, %13 : vector<40x32xf32>
    %15 = arith.mulf %14, %14 : vector<40x32xf32>
    %cst_11 = arith.constant dense<0.000000e+00> : vector<40xf32>
    %16 = vector.multi_reduction <add>, %15, %cst_11 [1] : vector<40x32xf32> to vector<40xf32>
    %17 = vector.shape_cast %16 : vector<40xf32> to vector<40x1xf32>
    %cst_12 = arith.constant 3.200000e+01 : f32
    %18 = vector.broadcast %cst_12 : f32 to vector<40x1xf32>
    %19 = arith.divf %17, %18 : vector<40x1xf32>
    %20 = vector.broadcast %12 : vector<40x1xf32> to vector<40x32xf32>
    %21 = arith.subf %3, %20 : vector<40x32xf32>
    %cst_13 = arith.constant 9.99999997E-7 : f32
    %22 = vector.broadcast %cst_13 : f32 to vector<40x1xf32>
    %23 = arith.addf %19, %22 : vector<40x1xf32>
    %24 = math.rsqrt %23 : vector<40x1xf32>
    %25 = vector.broadcast %24 : vector<40x1xf32> to vector<40x32xf32>
    %26 = arith.mulf %21, %25 : vector<40x32xf32>
    %27 = vector.broadcast %6 : vector<1x32xf32> to vector<40x32xf32>
    %28 = arith.mulf %26, %27 : vector<40x32xf32>
    %29 = vector.broadcast %8 : vector<1x32xf32> to vector<40x32xf32>
    %30 = arith.addf %28, %29 : vector<40x32xf32>
    %31 = arith.truncf %30 : vector<40x32xf32> to vector<40x32xbf16>
    %c0_14 = arith.constant 0 : index
    %c0_15 = arith.constant 0 : index
    %c0_16 = arith.constant 0 : index
    %32 = vector.load %arg5[%c0_14, %c0_15, %c0_16] : memref<1x32x96xbf16, #tpu.memory_space<vmem>>, vector<1x32x96xbf16>
    %33 = vector.shape_cast %32 : vector<1x32x96xbf16> to vector<32x96xbf16>
    %cst_17 = arith.constant dense<0.000000e+00> : vector<40x96xf32>
    %34 = tpu.matmul %31, %33, %cst_17 {dimension_numbers = #tpu.dot_dimension_numbers<[1], [0], [0], [1], [0, 0, 1, 1], [], []>} : vector<40x32xbf16>, vector<32x96xbf16>, vector<40x96xf32> -> vector<40x96xf32>
    %c0_18 = arith.constant 0 : index
    %c0_19 = arith.constant 0 : index
    %c0_20 = arith.constant 0 : index
    %35 = vector.load %arg6[%c0_18, %c0_19, %c0_20] : memref<1x1x96xf32, #tpu.memory_space<vmem>>, vector<1x1x96xf32>
    %36 = vector.shape_cast %35 : vector<1x1x96xf32> to vector<1x96xf32>
    %37 = vector.broadcast %36 : vector<1x96xf32> to vector<40x96xf32>
    %38 = arith.addf %34, %37 : vector<40x96xf32>
    %39 = vector.extract_strided_slice %38 {offsets = [0, 0], sizes = [40, 8], strides = [1, 1]} : vector<40x96xf32> to vector<40x8xf32>
    %40 = vector.extract_strided_slice %38 {offsets = [0, 32], sizes = [40, 8], strides = [1, 1]} : vector<40x96xf32> to vector<40x8xf32>
    %41 = vector.extract_strided_slice %38 {offsets = [0, 64], sizes = [40, 8], strides = [1, 1]} : vector<40x96xf32> to vector<40x8xf32>
    %cst_21 = arith.constant dense<0.000000e+00> : vector<40x40xf32>
    %42 = tpu.matmul %39, %40, %cst_21 {dimension_numbers = #tpu.dot_dimension_numbers<[1], [1], [0], [0], [0, 0, 1, 0], [], []>} : vector<40x8xf32>, vector<40x8xf32>, vector<40x40xf32> -> vector<40x40xf32>
    %43 = arith.addf %42, %4 : vector<40x40xf32>
    %cst_22 = arith.constant dense<0xFF800000> : vector<40xf32>
    %44 = vector.multi_reduction <maximumf>, %43, %cst_22 [1] : vector<40x40xf32> to vector<40xf32>
    %45 = vector.shape_cast %44 : vector<40xf32> to vector<40x1xf32>
    %46 = vector.broadcast %45 : vector<40x1xf32> to vector<40x40xf32>
    %47 = arith.subf %43, %46 : vector<40x40xf32>
    %48 = math.exp %47 : vector<40x40xf32>
    %cst_23 = arith.constant dense<0.000000e+00> : vector<40xf32>
    %49 = vector.multi_reduction <add>, %48, %cst_23 [1] : vector<40x40xf32> to vector<40xf32>
    %50 = vector.shape_cast %49 : vector<40xf32> to vector<40x1xf32>
    %51 = tpu.reciprocal %50 {approx = true} : vector<40x1xf32> -> vector<40x1xf32>
    %52 = vector.broadcast %51 : vector<40x1xf32> to vector<40x40xf32>
    %53 = arith.mulf %48, %52 : vector<40x40xf32>
    %cst_24 = arith.constant dense<0.000000e+00> : vector<40x8xf32>
    %54 = tpu.matmul %53, %41, %cst_24 {dimension_numbers = #tpu.dot_dimension_numbers<[1], [0], [0], [1], [0, 0, 1, 1], [], []>} : vector<40x40xf32>, vector<40x8xf32>, vector<40x8xf32> -> vector<40x8xf32>
    %c0_25 = arith.constant 0 : index
    %c0_26 = arith.constant 0 : index
    %55 = vector.load %arg22[%c0_25, %c0_26] : memref<40x32xf32, #tpu.memory_space<vmem>>, vector<40x8xf32>
    tpu.vector_store %arg22[%c0_25, %c0_26], %54 {strides = array<i32>} : memref<40x32xf32, #tpu.memory_space<vmem>>, vector<40x8xf32>,
    %56 = vector.extract_strided_slice %38 {offsets = [0, 8], sizes = [40, 8], strides = [1, 1]} : vector<40x96xf32> to vector<40x8xf32>
    %57 = vector.extract_strided_slice %38 {offsets = [0, 40], sizes = [40, 8], strides = [1, 1]} : vector<40x96xf32> to vector<40x8xf32>
    %58 = vector.extract_strided_slice %38 {offsets = [0, 72], sizes = [40, 8], strides = [1, 1]} : vector<40x96xf32> to vector<40x8xf32>
    %cst_27 = arith.constant dense<0.000000e+00> : vector<40x40xf32>
    %59 = tpu.matmul %56, %57, %cst_27 {dimension_numbers = #tpu.dot_dimension_numbers<[1], [1], [0], [0], [0, 0, 1, 0], [], []>} : vector<40x8xf32>, vector<40x8xf32>, vector<40x40xf32> -> vector<40x40xf32>
    %60 = arith.addf %59, %4 : vector<40x40xf32>
    %cst_28 = arith.constant dense<0xFF800000> : vector<40xf32>
    %61 = vector.multi_reduction <maximumf>, %60, %cst_28 [1] : vector<40x40xf32> to vector<40xf32>
    %62 = vector.shape_cast %61 : vector<40xf32> to vector<40x1xf32>
    %63 = vector.broadcast %62 : vector<40x1xf32> to vector<40x40xf32>
    %64 = arith.subf %60, %63 : vector<40x40xf32>
    %65 = math.exp %64 : vector<40x40xf32>
    %cst_29 = arith.constant dense<0.000000e+00> : vector<40xf32>
    %66 = vector.multi_reduction <add>, %65, %cst_29 [1] : vector<40x40xf32> to vector<40xf32>
    %67 = vector.shape_cast %66 : vector<40xf32> to vector<40x1xf32>
    %68 = tpu.reciprocal %67 {approx = true} : vector<40x1xf32> -> vector<40x1xf32>
    %69 = vector.broadcast %68 : vector<40x1xf32> to vector<40x40xf32>
    %70 = arith.mulf %65, %69 : vector<40x40xf32>
    %cst_30 = arith.constant dense<0.000000e+00> : vector<40x8xf32>
    %71 = tpu.matmul %70, %58, %cst_30 {dimension_numbers = #tpu.dot_dimension_numbers<[1], [0], [0], [1], [0, 0, 1, 1], [], []>} : vector<40x40xf32>, vector<40x8xf32>, vector<40x8xf32> -> vector<40x8xf32>
    %c0_31 = arith.constant 0 : index
    %c8 = arith.constant 8 : index
    %72 = vector.load %arg22[%c0_31, %c8] : memref<40x32xf32, #tpu.memory_space<vmem>>, vector<40x8xf32>
    tpu.vector_store %arg22[%c0_31, %c8], %71 {strides = array<i32>} : memref<40x32xf32, #tpu.memory_space<vmem>>, vector<40x8xf32>,
    %73 = vector.extract_strided_slice %38 {offsets = [0, 16], sizes = [40, 8], strides = [1, 1]} : vector<40x96xf32> to vector<40x8xf32>
    %74 = vector.extract_strided_slice %38 {offsets = [0, 48], sizes = [40, 8], strides = [1, 1]} : vector<40x96xf32> to vector<40x8xf32>
    %75 = vector.extract_strided_slice %38 {offsets = [0, 80], sizes = [40, 8], strides = [1, 1]} : vector<40x96xf32> to vector<40x8xf32>
    %cst_32 = arith.constant dense<0.000000e+00> : vector<40x40xf32>
    %76 = tpu.matmul %73, %74, %cst_32 {dimension_numbers = #tpu.dot_dimension_numbers<[1], [1], [0], [0], [0, 0, 1, 0], [], []>} : vector<40x8xf32>, vector<40x8xf32>, vector<40x40xf32> -> vector<40x40xf32>
    %77 = arith.addf %76, %4 : vector<40x40xf32>
    %cst_33 = arith.constant dense<0xFF800000> : vector<40xf32>
    %78 = vector.multi_reduction <maximumf>, %77, %cst_33 [1] : vector<40x40xf32> to vector<40xf32>
    %79 = vector.shape_cast %78 : vector<40xf32> to vector<40x1xf32>
    %80 = vector.broadcast %79 : vector<40x1xf32> to vector<40x40xf32>
    %81 = arith.subf %77, %80 : vector<40x40xf32>
    %82 = math.exp %81 : vector<40x40xf32>
    %cst_34 = arith.constant dense<0.000000e+00> : vector<40xf32>
    %83 = vector.multi_reduction <add>, %82, %cst_34 [1] : vector<40x40xf32> to vector<40xf32>
    %84 = vector.shape_cast %83 : vector<40xf32> to vector<40x1xf32>
    %85 = tpu.reciprocal %84 {approx = true} : vector<40x1xf32> -> vector<40x1xf32>
    %86 = vector.broadcast %85 : vector<40x1xf32> to vector<40x40xf32>
    %87 = arith.mulf %82, %86 : vector<40x40xf32>
    %cst_35 = arith.constant dense<0.000000e+00> : vector<40x8xf32>
    %88 = tpu.matmul %87, %75, %cst_35 {dimension_numbers = #tpu.dot_dimension_numbers<[1], [0], [0], [1], [0, 0, 1, 1], [], []>} : vector<40x40xf32>, vector<40x8xf32>, vector<40x8xf32> -> vector<40x8xf32>
    %c0_36 = arith.constant 0 : index
    %c16 = arith.constant 16 : index
    %89 = vector.load %arg22[%c0_36, %c16] : memref<40x32xf32, #tpu.memory_space<vmem>>, vector<40x8xf32>
    tpu.vector_store %arg22[%c0_36, %c16], %88 {strides = array<i32>} : memref<40x32xf32, #tpu.memory_space<vmem>>, vector<40x8xf32>,
    %90 = vector.extract_strided_slice %38 {offsets = [0, 24], sizes = [40, 8], strides = [1, 1]} : vector<40x96xf32> to vector<40x8xf32>
    %91 = vector.extract_strided_slice %38 {offsets = [0, 56], sizes = [40, 8], strides = [1, 1]} : vector<40x96xf32> to vector<40x8xf32>
    %92 = vector.extract_strided_slice %38 {offsets = [0, 88], sizes = [40, 8], strides = [1, 1]} : vector<40x96xf32> to vector<40x8xf32>
    %cst_37 = arith.constant dense<0.000000e+00> : vector<40x40xf32>
    %93 = tpu.matmul %90, %91, %cst_37 {dimension_numbers = #tpu.dot_dimension_numbers<[1], [1], [0], [0], [0, 0, 1, 0], [], []>} : vector<40x8xf32>, vector<40x8xf32>, vector<40x40xf32> -> vector<40x40xf32>
    %94 = arith.addf %93, %4 : vector<40x40xf32>
    %cst_38 = arith.constant dense<0xFF800000> : vector<40xf32>
    %95 = vector.multi_reduction <maximumf>, %94, %cst_38 [1] : vector<40x40xf32> to vector<40xf32>
    %96 = vector.shape_cast %95 : vector<40xf32> to vector<40x1xf32>
    %97 = vector.broadcast %96 : vector<40x1xf32> to vector<40x40xf32>
    %98 = arith.subf %94, %97 : vector<40x40xf32>
    %99 = math.exp %98 : vector<40x40xf32>
    %cst_39 = arith.constant dense<0.000000e+00> : vector<40xf32>
    %100 = vector.multi_reduction <add>, %99, %cst_39 [1] : vector<40x40xf32> to vector<40xf32>
    %101 = vector.shape_cast %100 : vector<40xf32> to vector<40x1xf32>
    %102 = tpu.reciprocal %101 {approx = true} : vector<40x1xf32> -> vector<40x1xf32>
    %103 = vector.broadcast %102 : vector<40x1xf32> to vector<40x40xf32>
    %104 = arith.mulf %99, %103 : vector<40x40xf32>
    %cst_40 = arith.constant dense<0.000000e+00> : vector<40x8xf32>
    %105 = tpu.matmul %104, %92, %cst_40 {dimension_numbers = #tpu.dot_dimension_numbers<[1], [0], [0], [1], [0, 0, 1, 1], [], []>} : vector<40x40xf32>, vector<40x8xf32>, vector<40x8xf32> -> vector<40x8xf32>
    %c0_41 = arith.constant 0 : index
    %c24 = arith.constant 24 : index
    %106 = vector.load %arg22[%c0_41, %c24] : memref<40x32xf32, #tpu.memory_space<vmem>>, vector<40x8xf32>
    tpu.vector_store %arg22[%c0_41, %c24], %105 {strides = array<i32>} : memref<40x32xf32, #tpu.memory_space<vmem>>, vector<40x8xf32>,
    %c0_42 = arith.constant 0 : index
    %c0_43 = arith.constant 0 : index
    %107 = vector.load %arg22[%c0_42, %c0_43] : memref<40x32xf32, #tpu.memory_space<vmem>>, vector<40x32xf32>
    %108 = arith.truncf %107 : vector<40x32xf32> to vector<40x32xbf16>
    %c0_44 = arith.constant 0 : index
    %c0_45 = arith.constant 0 : index
    %c0_46 = arith.constant 0 : index
    %109 = vector.load %arg7[%c0_44, %c0_45, %c0_46] : memref<1x32x32xbf16, #tpu.memory_space<vmem>>, vector<1x32x32xbf16>
    %110 = vector.shape_cast %109 : vector<1x32x32xbf16> to vector<32x32xbf16>
    %cst_47 = arith.constant dense<0.000000e+00> : vector<40x32xf32>
    %111 = tpu.matmul %108, %110, %cst_47 {dimension_numbers = #tpu.dot_dimension_numbers<[1], [0], [0], [1], [0, 0, 1, 1], [], []>} : vector<40x32xbf16>, vector<32x32xbf16>, vector<40x32xf32> -> vector<40x32xf32>
    %c0_48 = arith.constant 0 : index
    %c0_49 = arith.constant 0 : index
    %c0_50 = arith.constant 0 : index
    %112 = vector.load %arg8[%c0_48, %c0_49, %c0_50] : memref<1x1x32xf32, #tpu.memory_space<vmem>>, vector<1x1x32xf32>
    %113 = vector.shape_cast %112 : vector<1x1x32xf32> to vector<1x32xf32>
    %114 = vector.broadcast %113 : vector<1x32xf32> to vector<40x32xf32>
    %115 = arith.addf %111, %114 : vector<40x32xf32>
    %116 = arith.addf %3, %115 : vector<40x32xf32>
    %c0_51 = arith.constant 0 : index
    %c0_52 = arith.constant 0 : index
    %c0_53 = arith.constant 0 : index
    %117 = vector.load %arg9[%c0_51, %c0_52, %c0_53] : memref<1x1x32xf32, #tpu.memory_space<vmem>>, vector<1x1x32xf32>
    %118 = vector.shape_cast %117 : vector<1x1x32xf32> to vector<1x32xf32>
    %c0_54 = arith.constant 0 : index
    %c0_55 = arith.constant 0 : index
    %c0_56 = arith.constant 0 : index
    %119 = vector.load %arg10[%c0_54, %c0_55, %c0_56] : memref<1x1x32xf32, #tpu.memory_space<vmem>>, vector<1x1x32xf32>
    %120 = vector.shape_cast %119 : vector<1x1x32xf32> to vector<1x32xf32>
    %cst_57 = arith.constant dense<0.000000e+00> : vector<40xf32>
    %121 = vector.multi_reduction <add>, %116, %cst_57 [1] : vector<40x32xf32> to vector<40xf32>
    %122 = vector.shape_cast %121 : vector<40xf32> to vector<40x1xf32>
    %cst_58 = arith.constant 3.200000e+01 : f32
    %123 = vector.broadcast %cst_58 : f32 to vector<40x1xf32>
    %124 = arith.divf %122, %123 : vector<40x1xf32>
    %125 = vector.broadcast %124 : vector<40x1xf32> to vector<40x32xf32>
    %126 = arith.subf %116, %125 : vector<40x32xf32>
    %127 = arith.mulf %126, %126 : vector<40x32xf32>
    %cst_59 = arith.constant dense<0.000000e+00> : vector<40xf32>
    %128 = vector.multi_reduction <add>, %127, %cst_59 [1] : vector<40x32xf32> to vector<40xf32>
    %129 = vector.shape_cast %128 : vector<40xf32> to vector<40x1xf32>
    %cst_60 = arith.constant 3.200000e+01 : f32
    %130 = vector.broadcast %cst_60 : f32 to vector<40x1xf32>
    %131 = arith.divf %129, %130 : vector<40x1xf32>
    %132 = vector.broadcast %124 : vector<40x1xf32> to vector<40x32xf32>
    %133 = arith.subf %116, %132 : vector<40x32xf32>
    %cst_61 = arith.constant 9.99999997E-7 : f32
    %134 = vector.broadcast %cst_61 : f32 to vector<40x1xf32>
    %135 = arith.addf %131, %134 : vector<40x1xf32>
    %136 = math.rsqrt %135 : vector<40x1xf32>
    %137 = vector.broadcast %136 : vector<40x1xf32> to vector<40x32xf32>
    %138 = arith.mulf %133, %137 : vector<40x32xf32>
    %139 = vector.broadcast %118 : vector<1x32xf32> to vector<40x32xf32>
    %140 = arith.mulf %138, %139 : vector<40x32xf32>
    %141 = vector.broadcast %120 : vector<1x32xf32> to vector<40x32xf32>
    %142 = arith.addf %140, %141 : vector<40x32xf32>
    %143 = arith.truncf %142 : vector<40x32xf32> to vector<40x32xbf16>
    %c0_62 = arith.constant 0 : index
    %c0_63 = arith.constant 0 : index
    %c0_64 = arith.constant 0 : index
    %144 = vector.load %arg11[%c0_62, %c0_63, %c0_64] : memref<1x32x128xbf16, #tpu.memory_space<vmem>>, vector<1x32x128xbf16>
    %145 = vector.shape_cast %144 : vector<1x32x128xbf16> to vector<32x128xbf16>
    %cst_65 = arith.constant dense<0.000000e+00> : vector<40x128xf32>
    %146 = tpu.matmul %143, %145, %cst_65 {dimension_numbers = #tpu.dot_dimension_numbers<[1], [0], [0], [1], [0, 0, 1, 1], [], []>} : vector<40x32xbf16>, vector<32x128xbf16>, vector<40x128xf32> -> vector<40x128xf32>
    %c0_66 = arith.constant 0 : index
    %c0_67 = arith.constant 0 : index
    %c0_68 = arith.constant 0 : index
    %147 = vector.load %arg12[%c0_66, %c0_67, %c0_68] : memref<1x1x128xf32, #tpu.memory_space<vmem>>, vector<1x1x128xf32>
    %148 = vector.shape_cast %147 : vector<1x1x128xf32> to vector<1x128xf32>
    %149 = vector.broadcast %148 : vector<1x128xf32> to vector<40x128xf32>
    %150 = arith.addf %146, %149 : vector<40x128xf32>
    %cst_69 = arith.constant 5.000000e-01 : f32
    %151 = vector.broadcast %cst_69 : f32 to vector<40x128xf32>
    %152 = arith.mulf %151, %150 : vector<40x128xf32>
    %cst_70 = arith.constant 4.471500e-02 : f32
    %153 = vector.broadcast %cst_70 : f32 to vector<40x128xf32>
    %154 = arith.mulf %153, %150 : vector<40x128xf32>
    %155 = arith.mulf %154, %150 : vector<40x128xf32>
    %156 = arith.mulf %155, %150 : vector<40x128xf32>
    %157 = arith.addf %150, %156 : vector<40x128xf32>
    %cst_71 = arith.constant 0.797884583 : f32
    %158 = vector.broadcast %cst_71 : f32 to vector<40x128xf32>
    %159 = arith.mulf %158, %157 : vector<40x128xf32>
    %160 = math.tanh %159 : vector<40x128xf32>
    %cst_72 = arith.constant 1.000000e+00 : f32
    %161 = vector.broadcast %cst_72 : f32 to vector<40x128xf32>
    %162 = arith.addf %161, %160 : vector<40x128xf32>
    %163 = arith.mulf %152, %162 : vector<40x128xf32>
    %164 = arith.truncf %163 : vector<40x128xf32> to vector<40x128xbf16>
    %c0_73 = arith.constant 0 : index
    %c0_74 = arith.constant 0 : index
    %c0_75 = arith.constant 0 : index
    %165 = vector.load %arg13[%c0_73, %c0_74, %c0_75] : memref<1x128x32xbf16, #tpu.memory_space<vmem>>, vector<1x128x32xbf16>
    %166 = vector.shape_cast %165 : vector<1x128x32xbf16> to vector<128x32xbf16>
    %cst_76 = arith.constant dense<0.000000e+00> : vector<40x32xf32>
    %167 = tpu.matmul %164, %166, %cst_76 {dimension_numbers = #tpu.dot_dimension_numbers<[1], [0], [0], [1], [0, 0, 1, 1], [], []>} : vector<40x128xbf16>, vector<128x32xbf16>, vector<40x32xf32> -> vector<40x32xf32>
    %168 = arith.addf %116, %167 : vector<40x32xf32>
    %c0_77 = arith.constant 0 : index
    %c0_78 = arith.constant 0 : index
    %c0_79 = arith.constant 0 : index
    %169 = vector.load %arg14[%c0_77, %c0_78, %c0_79] : memref<1x1x32xf32, #tpu.memory_space<vmem>>, vector<1x1x32xf32>
    %170 = vector.shape_cast %169 : vector<1x1x32xf32> to vector<1x32xf32>
    %171 = vector.broadcast %170 : vector<1x32xf32> to vector<40x32xf32>
    %172 = arith.addf %168, %171 : vector<40x32xf32>
    %c0_80 = arith.constant 0 : index
    %c0_81 = arith.constant 0 : index
    %173 = vector.load %arg20[%c0_80, %c0_81] : memref<40x32xf32, #tpu.memory_space<vmem>>, vector<40x32xf32>
    tpu.vector_store %arg20[%c0_80, %c0_81], %172 {strides = array<i32>} : memref<40x32xf32, #tpu.memory_space<vmem>>, vector<40x32xf32>,
    %c1_i32 = arith.constant 1 : i32
    %174 = arith.cmpi eq, %arg1, %c1_i32 : i32
    %175 = arith.extui %174 : i1 to i32
    %c0_i32_82 = arith.constant 0 : i32
    %176 = arith.cmpi ne, %175, %c0_i32_82 : i32
    scf.if %176 {
      %177 = vector.extract_strided_slice %172 {offsets = [24, 0], sizes = [16, 32], strides = [1, 1]} : vector<40x32xf32> to vector<16x32xf32>
      %c0_83 = arith.constant 0 : index
      %c0_84 = arith.constant 0 : index
      %178 = vector.load %arg15[%c0_83, %c0_84] : memref<1x32xf32, #tpu.memory_space<vmem>>, vector<1x32xf32>
      %c0_85 = arith.constant 0 : index
      %c0_86 = arith.constant 0 : index
      %179 = vector.load %arg16[%c0_85, %c0_86] : memref<1x32xf32, #tpu.memory_space<vmem>>, vector<1x32xf32>
      %cst_87 = arith.constant dense<0.000000e+00> : vector<16xf32>
      %180 = vector.multi_reduction <add>, %177, %cst_87 [1] : vector<16x32xf32> to vector<16xf32>
      %181 = vector.shape_cast %180 : vector<16xf32> to vector<16x1xf32>
      %cst_88 = arith.constant 3.200000e+01 : f32
      %182 = vector.broadcast %cst_88 : f32 to vector<16x1xf32>
      %183 = arith.divf %181, %182 : vector<16x1xf32>
      %184 = vector.broadcast %183 : vector<16x1xf32> to vector<16x32xf32>
      %185 = arith.subf %177, %184 : vector<16x32xf32>
      %186 = arith.mulf %185, %185 : vector<16x32xf32>
      %cst_89 = arith.constant dense<0.000000e+00> : vector<16xf32>
      %187 = vector.multi_reduction <add>, %186, %cst_89 [1] : vector<16x32xf32> to vector<16xf32>
      %188 = vector.shape_cast %187 : vector<16xf32> to vector<16x1xf32>
      %cst_90 = arith.constant 3.200000e+01 : f32
      %189 = vector.broadcast %cst_90 : f32 to vector<16x1xf32>
      %190 = arith.divf %188, %189 : vector<16x1xf32>
      %191 = vector.broadcast %183 : vector<16x1xf32> to vector<16x32xf32>
      %192 = arith.subf %177, %191 : vector<16x32xf32>
      %cst_91 = arith.constant 9.99999997E-7 : f32
      %193 = vector.broadcast %cst_91 : f32 to vector<16x1xf32>
      %194 = arith.addf %190, %193 : vector<16x1xf32>
      %195 = math.rsqrt %194 : vector<16x1xf32>
      %196 = vector.broadcast %195 : vector<16x1xf32> to vector<16x32xf32>
      %197 = arith.mulf %192, %196 : vector<16x32xf32>
      %198 = vector.broadcast %178 : vector<1x32xf32> to vector<16x32xf32>
      %199 = arith.mulf %197, %198 : vector<16x32xf32>
      %200 = vector.broadcast %179 : vector<1x32xf32> to vector<16x32xf32>
      %201 = arith.addf %199, %200 : vector<16x32xf32>
      %c0_92 = arith.constant 0 : index
      %c0_93 = arith.constant 0 : index
      %202 = vector.load %arg17[%c0_92, %c0_93] : memref<32x128xf32, #tpu.memory_space<vmem>>, vector<32x128xf32>
      %cst_94 = arith.constant dense<0.000000e+00> : vector<16x128xf32>
      %203 = tpu.matmul %201, %202, %cst_94 {dimension_numbers = #tpu.dot_dimension_numbers<[1], [0], [0], [1], [0, 0, 1, 1], [], []>} : vector<16x32xf32>, vector<32x128xf32>, vector<16x128xf32> -> vector<16x128xf32>
      %c0_95 = arith.constant 0 : index
      %c0_96 = arith.constant 0 : index
      %204 = vector.load %arg18[%c0_95, %c0_96] : memref<1x128xf32, #tpu.memory_space<vmem>>, vector<1x128xf32>
      %205 = vector.broadcast %204 : vector<1x128xf32> to vector<16x128xf32>
      %206 = arith.addf %203, %205 : vector<16x128xf32>
      %c0_97 = arith.constant 0 : index
      %c0_98 = arith.constant 0 : index
      %c0_99 = arith.constant 0 : index
      %207 = vector.load %arg19[%c0_97, %c0_98, %c0_99] : memref<1x16x128xf32, #tpu.memory_space<vmem>>, vector<1x16x128xf32>
      %208 = vector.shape_cast %207 : vector<1x16x128xf32> to vector<16x128xf32>
      %209 = vector.shape_cast %206 : vector<16x128xf32> to vector<1x16x128xf32>
      tpu.vector_store %arg19[%c0_97, %c0_98, %c0_99], %209 {strides = array<i32>} : memref<1x16x128xf32, #tpu.memory_space<vmem>>, vector<1x16x128xf32>,
    } else {
    }
    return
  }
  func.func @transform_0(%arg0: i32, %arg1: i32) -> (i32, i32, i32) {
    %c0_i32 = arith.constant 0 : i32
    %c0_i32_0 = arith.constant 0 : i32
    %c0_i32_1 = arith.constant 0 : i32
    return %arg0, %c0_i32, %c0_i32_0 : i32, i32, i32
  }
  func.func @transform_1(%arg0: i32, %arg1: i32) -> (i32, i32, i32) {
    %c0_i32 = arith.constant 0 : i32
    %c0_i32_0 = arith.constant 0 : i32
    %c0_i32_1 = arith.constant 0 : i32
    return %arg1, %c0_i32, %c0_i32_0 : i32, i32, i32
  }
  func.func @transform_2(%arg0: i32, %arg1: i32) -> (i32, i32, i32) {
    %c0_i32 = arith.constant 0 : i32
    %c0_i32_0 = arith.constant 0 : i32
    %c0_i32_1 = arith.constant 0 : i32
    return %arg1, %c0_i32, %c0_i32_0 : i32, i32, i32
  }
  func.func @transform_3(%arg0: i32, %arg1: i32) -> (i32, i32, i32) {
    %c0_i32 = arith.constant 0 : i32
    %c0_i32_0 = arith.constant 0 : i32
    %c0_i32_1 = arith.constant 0 : i32
    return %arg1, %c0_i32, %c0_i32_0 : i32, i32, i32
  }
  func.func @transform_4(%arg0: i32, %arg1: i32) -> (i32, i32, i32) {
    %c0_i32 = arith.constant 0 : i32
    %c0_i32_0 = arith.constant 0 : i32
    %c0_i32_1 = arith.constant 0 : i32
    return %arg1, %c0_i32, %c0_i32_0 : i32, i32, i32
  }
  func.func @transform_5(%arg0: i32, %arg1: i32) -> (i32, i32, i32) {
    %c0_i32 = arith.constant 0 : i32
    %c0_i32_0 = arith.constant 0 : i32
    %c0_i32_1 = arith.constant 0 : i32
    return %arg1, %c0_i32, %c0_i32_0 : i32, i32, i32
  }
  func.func @transform_6(%arg0: i32, %arg1: i32) -> (i32, i32, i32) {
    %c0_i32 = arith.constant 0 : i32
    %c0_i32_0 = arith.constant 0 : i32
    %c0_i32_1 = arith.constant 0 : i32
    return %arg1, %c0_i32, %c0_i32_0 : i32, i32, i32
  }
  func.func @transform_7(%arg0: i32, %arg1: i32) -> (i32, i32, i32) {
    %c0_i32 = arith.constant 0 : i32
    %c0_i32_0 = arith.constant 0 : i32
    %c0_i32_1 = arith.constant 0 : i32
    return %arg1, %c0_i32, %c0_i32_0 : i32, i32, i32
  }
  func.func @transform_8(%arg0: i32, %arg1: i32) -> (i32, i32, i32) {
    %c0_i32 = arith.constant 0 : i32
    %c0_i32_0 = arith.constant 0 : i32
    %c0_i32_1 = arith.constant 0 : i32
    return %arg1, %c0_i32, %c0_i32_0 : i32, i32, i32
  }
  func.func @transform_9(%arg0: i32, %arg1: i32) -> (i32, i32, i32) {
    %c0_i32 = arith.constant 0 : i32
    %c0_i32_0 = arith.constant 0 : i32
    %c0_i32_1 = arith.constant 0 : i32
    return %arg1, %c0_i32, %c0_i32_0 : i32, i32, i32
  }
  func.func @transform_10(%arg0: i32, %arg1: i32) -> (i32, i32, i32) {
    %c0_i32 = arith.constant 0 : i32
    %c0_i32_0 = arith.constant 0 : i32
    %c0_i32_1 = arith.constant 0 : i32
    return %arg1, %c0_i32, %c0_i32_0 : i32, i32, i32
  }
  func.func @transform_11(%arg0: i32, %arg1: i32) -> (i32, i32, i32) {
    %c0_i32 = arith.constant 0 : i32
    %c0_i32_0 = arith.constant 0 : i32
    %c0_i32_1 = arith.constant 0 : i32
    return %arg1, %c0_i32, %c0_i32_0 : i32, i32, i32
  }
  func.func @transform_12(%arg0: i32, %arg1: i32) -> (i32, i32, i32) {
    %c0_i32 = arith.constant 0 : i32
    %c0_i32_0 = arith.constant 0 : i32
    %c0_i32_1 = arith.constant 0 : i32
    return %arg1, %c0_i32, %c0_i32_0 : i32, i32, i32
  }
  func.func @transform_13(%arg0: i32, %arg1: i32) -> (i32, i32) {
    %c0_i32 = arith.constant 0 : i32
    %c0_i32_0 = arith.constant 0 : i32
    %c0_i32_1 = arith.constant 0 : i32
    return %c0_i32, %c0_i32_0 : i32, i32
  }
  func.func @transform_14(%arg0: i32, %arg1: i32) -> (i32, i32) {
    %c0_i32 = arith.constant 0 : i32
    %c0_i32_0 = arith.constant 0 : i32
    %c0_i32_1 = arith.constant 0 : i32
    return %c0_i32, %c0_i32_0 : i32, i32
  }
  func.func @transform_15(%arg0: i32, %arg1: i32) -> (i32, i32) {
    %c0_i32 = arith.constant 0 : i32
    %c0_i32_0 = arith.constant 0 : i32
    %c0_i32_1 = arith.constant 0 : i32
    return %c0_i32, %c0_i32_0 : i32, i32
  }
  func.func @transform_16(%arg0: i32, %arg1: i32) -> (i32, i32) {
    %c0_i32 = arith.constant 0 : i32
    %c0_i32_0 = arith.constant 0 : i32
    %c0_i32_1 = arith.constant 0 : i32
    return %c0_i32, %c0_i32_0 : i32, i32
  }
  func.func @transform_17(%arg0: i32, %arg1: i32) -> (i32, i32, i32) {
    %c0_i32 = arith.constant 0 : i32
    %c0_i32_0 = arith.constant 0 : i32
    %c0_i32_1 = arith.constant 0 : i32
    return %arg0, %c0_i32, %c0_i32_0 : i32, i32, i32
  }
}

</mosaic_0001>

<llo_original>
// kernel: tpu_custom_call.1
$region0: #{tpu_custom_call.1}
  #allocation0 [shape = 'u32[]', space=smem, size = 0x4, offset = 0x4, fixed_abs, tag = 'smem constant byte address 0x4 - core index']
  #allocation1 [shape = 'u32[144,128]{1,0:T(1,128)}', space=vmem, size = 0x12000, scoped, tag = 'internal scratch']
  #allocation2 [shape = 'f32[40,32]{1,0:T(8,128)}', space=vmem, size = 0x5000, scoped, tag = 'scratch operand']
  #allocation3 [shape = 'f32[40,40]{1,0:T(8,128)}', space=vmem, size = 0x5000, scoped, tag = 'scratch operand']
  #allocation4 [shape = 'f32[40,32]{1,0:T(8,128)}', space=vmem, size = 0x5000, scoped, tag = 'scratch operand']
  %s0 = inlined_call_operand.vmem [shape: f32[2,40,32], index: 0, kind: input, shape index: {}]
  %s1 = inlined_call_operand.vmem [shape: f32[2,1,32], index: 1, kind: input, shape index: {}]
  %s2 = inlined_call_operand.vmem [shape: f32[2,1,32], index: 2, kind: input, shape index: {}]
  %s3 = inlined_call_operand.vmem [shape: bf16[2,32,96], index: 3, kind: input, shape index: {}]
  %s4 = inlined_call_operand.vmem [shape: f32[2,1,96], index: 4, kind: input, shape index: {}]
  %s5 = inlined_call_operand.vmem [shape: bf16[2,32,32], index: 5, kind: input, shape index: {}]
  %s6 = inlined_call_operand.vmem [shape: f32[2,1,32], index: 6, kind: input, shape index: {}]
  %s7 = inlined_call_operand.vmem [shape: f32[2,1,32], index: 7, kind: input, shape index: {}]
  %s8 = inlined_call_operand.vmem [shape: f32[2,1,32], index: 8, kind: input, shape index: {}]
  %s9 = inlined_call_operand.vmem [shape: bf16[2,32,128], index: 9, kind: input, shape index: {}]
  %s10 = inlined_call_operand.vmem [shape: f32[2,1,128], index: 10, kind: input, shape index: {}]
  %s11 = inlined_call_operand.vmem [shape: bf16[2,128,32], index: 11, kind: input, shape index: {}]
  %s12 = inlined_call_operand.vmem [shape: f32[2,1,32], index: 12, kind: input, shape index: {}]
  %s13 = inlined_call_operand.vmem [shape: f32[1,32], index: 13, kind: input, shape index: {}]
  %s14 = inlined_call_operand.vmem [shape: f32[1,32], index: 14, kind: input, shape index: {}]
  %s15 = inlined_call_operand.vmem [shape: f32[32,128], index: 15, kind: input, shape index: {}]
  %s16 = inlined_call_operand.vmem [shape: f32[1,128], index: 16, kind: input, shape index: {}]
  %s17 = inlined_call_operand.hbm [shape: f32[2,16,128], index: 17, kind: output, shape index: {}]
  %s18 = sld [smem:[#allocation0]]
  $region109: #{tpu_custom_call.1} parent=0
    _
  %s20 = ssub.s32 1, %s18
  %s21 = scalar_select 0, %s20, %s18
  $region1: #{tpu_custom_call.1} parent=0
    #allocation5 [shape = 'u8[16384]{0}', space=vmem, size = 0x4000, scoped, tag = 'output window, operand 0']
    #allocation6 [shape = 's32[2]{0}', space=sflag, size = 0x8, scoped, tag = 'scoped memory for tpu_custom_call.1']
    %22 = vsyncpa [#allocation6], 0
    %s23 = scalar_lea.sflag [#allocation6], 1
    %24 = vsyncpa %s23, 0
    loop: start=0, step=1, limit=6
    $region2: #{tpu_custom_call.1} parent=1 // loop_pre_header
      _
    $region3: #{tpu_custom_call.1} parent=1 // loop_header
      %s26 = sphi 0, %s30
      %p27 = scmp.ge.s32.totalorder %s26, 6
      %s33 = sphi 0, %s45
      %s34 = sphi 0, %s41
      %s35 = sphi 0, %s33
      %s36 = sphi 0, %s34
      %s37 = sphi 0, %s35
      %s38 = sphi 0, %s36
      %s48 = sphi 0, %s50
      %s51 = sphi 0, %s48
      %s52 = sphi 0, %s51
      %s68 = sphi 0, %s52
      %s74 = sphi 0, %s76
      %s77 = sphi 0, %s74
      %s78 = sphi 0, %s77
      %s94 = sphi 0, %s78
      %s100 = sphi 0, %s102
      %s103 = sphi 0, %s100
      %s104 = sphi 0, %s103
      %s120 = sphi 0, %s104
      %s126 = sphi 0, %s128
      %s129 = sphi 0, %s126
      %s130 = sphi 0, %s129
      %s146 = sphi 0, %s130
      %s152 = sphi 0, %s154
      %s155 = sphi 0, %s152
      %s156 = sphi 0, %s155
      %s172 = sphi 0, %s156
      %s178 = sphi 0, %s180
      %s181 = sphi 0, %s178
      %s182 = sphi 0, %s181
      %s198 = sphi 0, %s182
      %s204 = sphi 0, %s206
      %s207 = sphi 0, %s204
      %s208 = sphi 0, %s207
      %s224 = sphi 0, %s208
      %s230 = sphi 0, %s232
      %s233 = sphi 0, %s230
      %s234 = sphi 0, %s233
      %s250 = sphi 0, %s234
      %s256 = sphi 0, %s258
      %s259 = sphi 0, %s256
      %s260 = sphi 0, %s259
      %s276 = sphi 0, %s260
      %s282 = sphi 0, %s284
      %s285 = sphi 0, %s282
      %s286 = sphi 0, %s285
      %s302 = sphi 0, %s286
      %s308 = sphi 0, %s310
      %s311 = sphi 0, %s308
      %s312 = sphi 0, %s311
      %s328 = sphi 0, %s312
      %s334 = sphi 0, %s336
      %s337 = sphi 0, %s334
      %s338 = sphi 0, %s337
      %s354 = sphi 0, %s338
      %s360 = sphi 0, %s362
      %s363 = sphi 0, %s360
      %s364 = sphi 0, %s363
      %s380 = sphi 0, %s364
      %s384 = sphi 0, %s384
      %s386 = sphi 0, %s384
      %s387 = sphi 0, %s386
      %s401 = sphi 0, %s387
      %s405 = sphi 0, %s405
      %s407 = sphi 0, %s405
      %s408 = sphi 0, %s407
      %s422 = sphi 0, %s408
      %s426 = sphi 0, %s426
      %s428 = sphi 0, %s426
      %s429 = sphi 0, %s428
      %s443 = sphi 0, %s429
      %s447 = sphi 0, %s447
      %s449 = sphi 0, %s447
      %s450 = sphi 0, %s449
      %s464 = sphi 0, %s450
      %s470 = sphi 0, %s472
      %s473 = sphi 0, %s470
      %s474 = sphi 0, %s473
      %s490 = sphi 0, %s474
    $region4: #{tpu_custom_call.1} parent=1 // loop_header_branch
      %29 = sbr.rel (%p27) target = $region8
    $region5: #{tpu_custom_call.1} parent=1 // loop_body
      %s31 = ssub.s32 %s26, 1
      %s32 = ssub.s32 %s26, 2
      %s39 = sadd.s32 1, %s34
      %p40 = scmp.ge.s32.totalorder %s39, 2
      %s41 = scalar_select %p40, 0, %s39
      %s42 = sadd.s32 1, %s33
      %s43 = scalar_select %p40, %s42, %s33
      %p44 = scmp.ge.s32.totalorder %s43, 2
      %s45 = scalar_select %p44, 0, %s43
      %s46 = ssub.s32 %s33, %s45
      %p47 = scmp.eq.s32.totalorder %s46, 0
      %s49 = sadd.s32 %s48, 1
      %s50 = scalar_select %p47, %s48, %s49
      %p53 = pneg %p47
      %p54 = scmp.eq.s32.totalorder %s26, 3
      %p55 = por %p53, %p54
      %p56 = scmp.ne.s32.totalorder %s48, %s51
      %p57 = scmp.eq.s32.totalorder %s26, 0
      %p58 = por %p56, %p57
      %p59 = scmp.ne.s32.totalorder %s48, %s51
      %p60 = scmp.eq.s32.totalorder %s31, 3
      %p61 = por %p59, %p60
      %p62 = scmp.ne.s32.totalorder %s51, %s52
      %p63 = scmp.eq.s32.totalorder %s31, 0
      %p64 = por %p62, %p63
      %p65 = scmp.ne.s32.totalorder %s51, %s52
      %p66 = scmp.eq.s32.totalorder %s32, 3
      %p67 = por %p65, %p66
      %p69 = scmp.ne.s32.totalorder %s52, %s68
      %p70 = scmp.eq.s32.totalorder %s32, 0
      %p71 = por %p69, %p70
      %s72 = ssub.s32 %s34, %s41
      %p73 = scmp.eq.s32.totalorder %s72, 0
      %s75 = sadd.s32 %s74, 1
      %s76 = scalar_select %p73, %s74, %s75
      %p79 = pneg %p73
      %p80 = scmp.eq.s32.totalorder %s26, 3
      %p81 = por %p79, %p80
      %p82 = scmp.ne.s32.totalorder %s74, %s77
      %p83 = scmp.eq.s32.totalorder %s26, 0
      %p84 = por %p82, %p83
      %p85 = scmp.ne.s32.totalorder %s74, %s77
      %p86 = scmp.eq.s32.totalorder %s31, 3
      %p87 = por %p85, %p86
      %p88 = scmp.ne.s32.totalorder %s77, %s78
      %p89 = scmp.eq.s32.totalorder %s31, 0
      %p90 = por %p88, %p89
      %p91 = scmp.ne.s32.totalorder %s77, %s78
      %p92 = scmp.eq.s32.totalorder %s32, 3
      %p93 = por %p91, %p92
      %p95 = scmp.ne.s32.totalorder %s78, %s94
      %p96 = scmp.eq.s32.totalorder %s32, 0
      %p97 = por %p95, %p96
      %s98 = ssub.s32 %s34, %s41
      %p99 = scmp.eq.s32.totalorder %s98, 0
      %s101 = sadd.s32 %s100, 1
      %s102 = scalar_select %p99, %s100, %s101
      %p105 = pneg %p99
      %p106 = scmp.eq.s32.totalorder %s26, 3
      %p107 = por %p105, %p106
      %p108 = scmp.ne.s32.totalorder %s100, %s103
      %p109 = scmp.eq.s32.totalorder %s26, 0
      %p110 = por %p108, %p109
      %p111 = scmp.ne.s32.totalorder %s100, %s103
      %p112 = scmp.eq.s32.totalorder %s31, 3
      %p113 = por %p111, %p112
      %p114 = scmp.ne.s32.totalorder %s103, %s104
      %p115 = scmp.eq.s32.totalorder %s31, 0
      %p116 = por %p114, %p115
      %p117 = scmp.ne.s32.totalorder %s103, %s104
      %p118 = scmp.eq.s32.totalorder %s32, 3
      %p119 = por %p117, %p118
      %p121 = scmp.ne.s32.totalorder %s104, %s120
      %p122 = scmp.eq.s32.totalorder %s32, 0
      %p123 = por %p121, %p122
      %s124 = ssub.s32 %s34, %s41
      %p125 = scmp.eq.s32.totalorder %s124, 0
      %s127 = sadd.s32 %s126, 1
      %s128 = scalar_select %p125, %s126, %s127
      %p131 = pneg %p125
      %p132 = scmp.eq.s32.totalorder %s26, 3
      %p133 = por %p131, %p132
      %p134 = scmp.ne.s32.totalorder %s126, %s129
      %p135 = scmp.eq.s32.totalorder %s26, 0
      %p136 = por %p134, %p135
      %p137 = scmp.ne.s32.totalorder %s126, %s129
      %p138 = scmp.eq.s32.totalorder %s31, 3
      %p139 = por %p137, %p138
      %p140 = scmp.ne.s32.totalorder %s129, %s130
      %p141 = scmp.eq.s32.totalorder %s31, 0
      %p142 = por %p140, %p141
      %p143 = scmp.ne.s32.totalorder %s129, %s130
      %p144 = scmp.eq.s32.totalorder %s32, 3
      %p145 = por %p143, %p144
      %p147 = scmp.ne.s32.totalorder %s130, %s146
      %p148 = scmp.eq.s32.totalorder %s32, 0
      %p149 = por %p147, %p148
      %s150 = ssub.s32 %s34, %s41
      %p151 = scmp.eq.s32.totalorder %s150, 0
      %s153 = sadd.s32 %s152, 1
      %s154 = scalar_select %p151, %s152, %s153
      %p157 = pneg %p151
      %p158 = scmp.eq.s32.totalorder %s26, 3
      %p159 = por %p157, %p158
      %p160 = scmp.ne.s32.totalorder %s152, %s155
      %p161 = scmp.eq.s32.totalorder %s26, 0
      %p162 = por %p160, %p161
      %p163 = scmp.ne.s32.totalorder %s152, %s155
      %p164 = scmp.eq.s32.totalorder %s31, 3
      %p165 = por %p163, %p164
      %p166 = scmp.ne.s32.totalorder %s155, %s156
      %p167 = scmp.eq.s32.totalorder %s31, 0
      %p168 = por %p166, %p167
      %p169 = scmp.ne.s32.totalorder %s155, %s156
      %p170 = scmp.eq.s32.totalorder %s32, 3
      %p171 = por %p169, %p170
      %p173 = scmp.ne.s32.totalorder %s156, %s172
      %p174 = scmp.eq.s32.totalorder %s32, 0
      %p175 = por %p173, %p174
      %s176 = ssub.s32 %s34, %s41
      %p177 = scmp.eq.s32.totalorder %s176, 0
      %s179 = sadd.s32 %s178, 1
      %s180 = scalar_select %p177, %s178, %s179
      %p183 = pneg %p177
      %p184 = scmp.eq.s32.totalorder %s26, 3
      %p185 = por %p183, %p184
      %p186 = scmp.ne.s32.totalorder %s178, %s181
      %p187 = scmp.eq.s32.totalorder %s26, 0
      %p188 = por %p186, %p187
      %p189 = scmp.ne.s32.totalorder %s178, %s181
      %p190 = scmp.eq.s32.totalorder %s31, 3
      %p191 = por %p189, %p190
      %p192 = scmp.ne.s32.totalorder %s181, %s182
      %p193 = scmp.eq.s32.totalorder %s31, 0
      %p194 = por %p192, %p193
      %p195 = scmp.ne.s32.totalorder %s181, %s182
      %p196 = scmp.eq.s32.totalorder %s32, 3
      %p197 = por %p195, %p196
      %p199 = scmp.ne.s32.totalorder %s182, %s198
      %p200 = scmp.eq.s32.totalorder %s32, 0
      %p201 = por %p199, %p200
      %s202 = ssub.s32 %s34, %s41
      %p203 = scmp.eq.s32.totalorder %s202, 0
      %s205 = sadd.s32 %s204, 1
      %s206 = scalar_select %p203, %s204, %s205
      %p209 = pneg %p203
      %p210 = scmp.eq.s32.totalorder %s26, 3
      %p211 = por %p209, %p210
      %p212 = scmp.ne.s32.totalorder %s204, %s207
      %p213 = scmp.eq.s32.totalorder %s26, 0
      %p214 = por %p212, %p213
      %p215 = scmp.ne.s32.totalorder %s204, %s207
      %p216 = scmp.eq.s32.totalorder %s31, 3
      %p217 = por %p215, %p216
      %p218 = scmp.ne.s32.totalorder %s207, %s208
      %p219 = scmp.eq.s32.totalorder %s31, 0
      %p220 = por %p218, %p219
      %p221 = scmp.ne.s32.totalorder %s207, %s208
      %p222 = scmp.eq.s32.totalorder %s32, 3
      %p223 = por %p221, %p222
      %p225 = scmp.ne.s32.totalorder %s208, %s224
      %p226 = scmp.eq.s32.totalorder %s32, 0
      %p227 = por %p225, %p226
      %s228 = ssub.s32 %s34, %s41
      %p229 = scmp.eq.s32.totalorder %s228, 0
      %s231 = sadd.s32 %s230, 1
      %s232 = scalar_select %p229, %s230, %s231
      %p235 = pneg %p229
      %p236 = scmp.eq.s32.totalorder %s26, 3
      %p237 = por %p235, %p236
      %p238 = scmp.ne.s32.totalorder %s230, %s233
      %p239 = scmp.eq.s32.totalorder %s26, 0
      %p240 = por %p238, %p239
      %p241 = scmp.ne.s32.totalorder %s230, %s233
      %p242 = scmp.eq.s32.totalorder %s31, 3
      %p243 = por %p241, %p242
      %p244 = scmp.ne.s32.totalorder %s233, %s234
      %p245 = scmp.eq.s32.totalorder %s31, 0
      %p246 = por %p244, %p245
      %p247 = scmp.ne.s32.totalorder %s233, %s234
      %p248 = scmp.eq.s32.totalorder %s32, 3
      %p249 = por %p247, %p248
      %p251 = scmp.ne.s32.totalorder %s234, %s250
      %p252 = scmp.eq.s32.totalorder %s32, 0
      %p253 = por %p251, %p252
      %s254 = ssub.s32 %s34, %s41
      %p255 = scmp.eq.s32.totalorder %s254, 0
      %s257 = sadd.s32 %s256, 1
      %s258 = scalar_select %p255, %s256, %s257
      %p261 = pneg %p255
      %p262 = scmp.eq.s32.totalorder %s26, 3
      %p263 = por %p261, %p262
      %p264 = scmp.ne.s32.totalorder %s256, %s259
      %p265 = scmp.eq.s32.totalorder %s26, 0
      %p266 = por %p264, %p265
      %p267 = scmp.ne.s32.totalorder %s256, %s259
      %p268 = scmp.eq.s32.totalorder %s31, 3
      %p269 = por %p267, %p268
      %p270 = scmp.ne.s32.totalorder %s259, %s260
      %p271 = scmp.eq.s32.totalorder %s31, 0
      %p272 = por %p270, %p271
      %p273 = scmp.ne.s32.totalorder %s259, %s260
      %p274 = scmp.eq.s32.totalorder %s32, 3
      %p275 = por %p273, %p274
      %p277 = scmp.ne.s32.totalorder %s260, %s276
      %p278 = scmp.eq.s32.totalorder %s32, 0
      %p279 = por %p277, %p278
      %s280 = ssub.s32 %s34, %s41
      %p281 = scmp.eq.s32.totalorder %s280, 0
      %s283 = sadd.s32 %s282, 1
      %s284 = scalar_select %p281, %s282, %s283
      %p287 = pneg %p281
      %p288 = scmp.eq.s32.totalorder %s26, 3
      %p289 = por %p287, %p288
      %p290 = scmp.ne.s32.totalorder %s282, %s285
      %p291 = scmp.eq.s32.totalorder %s26, 0
      %p292 = por %p290, %p291
      %p293 = scmp.ne.s32.totalorder %s282, %s285
      %p294 = scmp.eq.s32.totalorder %s31, 3
      %p295 = por %p293, %p294
      %p296 = scmp.ne.s32.totalorder %s285, %s286
      %p297 = scmp.eq.s32.totalorder %s31, 0
      %p298 = por %p296, %p297
      %p299 = scmp.ne.s32.totalorder %s285, %s286
      %p300 = scmp.eq.s32.totalorder %s32, 3
      %p301 = por %p299, %p300
      %p303 = scmp.ne.s32.totalorder %s286, %s302
      %p304 = scmp.eq.s32.totalorder %s32, 0
      %p305 = por %p303, %p304
      %s306 = ssub.s32 %s34, %s41
      %p307 = scmp.eq.s32.totalorder %s306, 0
      %s309 = sadd.s32 %s308, 1
      %s310 = scalar_select %p307, %s308, %s309
      %p313 = pneg %p307
      %p314 = scmp.eq.s32.totalorder %s26, 3
      %p315 = por %p313, %p314
      %p316 = scmp.ne.s32.totalorder %s308, %s311
      %p317 = scmp.eq.s32.totalorder %s26, 0
      %p318 = por %p316, %p317
      %p319 = scmp.ne.s32.totalorder %s308, %s311
      %p320 = scmp.eq.s32.totalorder %s31, 3
      %p321 = por %p319, %p320
      %p322 = scmp.ne.s32.totalorder %s311, %s312
      %p323 = scmp.eq.s32.totalorder %s31, 0
      %p324 = por %p322, %p323
      %p325 = scmp.ne.s32.totalorder %s311, %s312
      %p326 = scmp.eq.s32.totalorder %s32, 3
      %p327 = por %p325, %p326
      %p329 = scmp.ne.s32.totalorder %s312, %s328
      %p330 = scmp.eq.s32.totalorder %s32, 0
      %p331 = por %p329, %p330
      %s332 = ssub.s32 %s34, %s41
      %p333 = scmp.eq.s32.totalorder %s332, 0
      %s335 = sadd.s32 %s334, 1
      %s336 = scalar_select %p333, %s334, %s335
      %p339 = pneg %p333
      %p340 = scmp.eq.s32.totalorder %s26, 3
      %p341 = por %p339, %p340
      %p342 = scmp.ne.s32.totalorder %s334, %s337
      %p343 = scmp.eq.s32.totalorder %s26, 0
      %p344 = por %p342, %p343
      %p345 = scmp.ne.s32.totalorder %s334, %s337
      %p346 = scmp.eq.s32.totalorder %s31, 3
      %p347 = por %p345, %p346
      %p348 = scmp.ne.s32.totalorder %s337, %s338
      %p349 = scmp.eq.s32.totalorder %s31, 0
      %p350 = por %p348, %p349
      %p351 = scmp.ne.s32.totalorder %s337, %s338
      %p352 = scmp.eq.s32.totalorder %s32, 3
      %p353 = por %p351, %p352
      %p355 = scmp.ne.s32.totalorder %s338, %s354
      %p356 = scmp.eq.s32.totalorder %s32, 0
      %p357 = por %p355, %p356
      %s358 = ssub.s32 %s34, %s41
      %p359 = scmp.eq.s32.totalorder %s358, 0
      %s361 = sadd.s32 %s360, 1
      %s362 = scalar_select %p359, %s360, %s361
      %p365 = pneg %p359
      %p366 = scmp.eq.s32.totalorder %s26, 3
      %p367 = por %p365, %p366
      %p368 = scmp.ne.s32.totalorder %s360, %s363
      %p369 = scmp.eq.s32.totalorder %s26, 0
      %p370 = por %p368, %p369
      %p371 = scmp.ne.s32.totalorder %s360, %s363
      %p372 = scmp.eq.s32.totalorder %s31, 3
      %p373 = por %p371, %p372
      %p374 = scmp.ne.s32.totalorder %s363, %s364
      %p375 = scmp.eq.s32.totalorder %s31, 0
      %p376 = por %p374, %p375
      %p377 = scmp.ne.s32.totalorder %s363, %s364
      %p378 = scmp.eq.s32.totalorder %s32, 3
      %p379 = por %p377, %p378
      %p381 = scmp.ne.s32.totalorder %s364, %s380
      %p382 = scmp.eq.s32.totalorder %s32, 0
      %p383 = por %p381, %p382
      %s385 = sadd.s32 %s384, 1
      %p388 = scmp.eq.s32.totalorder %s26, 3
      %p389 = scmp.ne.s32.totalorder %s384, %s386
      %p390 = scmp.eq.s32.totalorder %s26, 0
      %p391 = por %p389, %p390
      %p392 = scmp.ne.s32.totalorder %s384, %s386
      %p393 = scmp.eq.s32.totalorder %s31, 3
      %p394 = por %p392, %p393
      %p395 = scmp.ne.s32.totalorder %s386, %s387
      %p396 = scmp.eq.s32.totalorder %s31, 0
      %p397 = por %p395, %p396
      %p398 = scmp.ne.s32.totalorder %s386, %s387
      %p399 = scmp.eq.s32.totalorder %s32, 3
      %p400 = por %p398, %p399
      %p402 = scmp.ne.s32.totalorder %s387, %s401
      %p403 = scmp.eq.s32.totalorder %s32, 0
      %p404 = por %p402, %p403
      %s406 = sadd.s32 %s405, 1
      %p409 = scmp.eq.s32.totalorder %s26, 3
      %p410 = scmp.ne.s32.totalorder %s405, %s407
      %p411 = scmp.eq.s32.totalorder %s26, 0
      %p412 = por %p410, %p411
      %p413 = scmp.ne.s32.totalorder %s405, %s407
      %p414 = scmp.eq.s32.totalorder %s31, 3
      %p415 = por %p413, %p414
      %p416 = scmp.ne.s32.totalorder %s407, %s408
      %p417 = scmp.eq.s32.totalorder %s31, 0
      %p418 = por %p416, %p417
      %p419 = scmp.ne.s32.totalorder %s407, %s408
      %p420 = scmp.eq.s32.totalorder %s32, 3
      %p421 = por %p419, %p420
      %p423 = scmp.ne.s32.totalorder %s408, %s422
      %p424 = scmp.eq.s32.totalorder %s32, 0
      %p425 = por %p423, %p424
      %s427 = sadd.s32 %s426, 1
      %p430 = scmp.eq.s32.totalorder %s26, 3
      %p431 = scmp.ne.s32.totalorder %s426, %s428
      %p432 = scmp.eq.s32.totalorder %s26, 0
      %p433 = por %p431, %p432
      %p434 = scmp.ne.s32.totalorder %s426, %s428
      %p435 = scmp.eq.s32.totalorder %s31, 3
      %p436 = por %p434, %p435
      %p437 = scmp.ne.s32.totalorder %s428, %s429
      %p438 = scmp.eq.s32.totalorder %s31, 0
      %p439 = por %p437, %p438
      %p440 = scmp.ne.s32.totalorder %s428, %s429
      %p441 = scmp.eq.s32.totalorder %s32, 3
      %p442 = por %p440, %p441
      %p444 = scmp.ne.s32.totalorder %s429, %s443
      %p445 = scmp.eq.s32.totalorder %s32, 0
      %p446 = por %p444, %p445
      %s448 = sadd.s32 %s447, 1
      %p451 = scmp.eq.s32.totalorder %s26, 3
      %p452 = scmp.ne.s32.totalorder %s447, %s449
      %p453 = scmp.eq.s32.totalorder %s26, 0
      %p454 = por %p452, %p453
      %p455 = scmp.ne.s32.totalorder %s447, %s449
      %p456 = scmp.eq.s32.totalorder %s31, 3
      %p457 = por %p455, %p456
      %p458 = scmp.ne.s32.totalorder %s449, %s450
      %p459 = scmp.eq.s32.totalorder %s31, 0
      %p460 = por %p458, %p459
      %p461 = scmp.ne.s32.totalorder %s449, %s450
      %p462 = scmp.eq.s32.totalorder %s32, 3
      %p463 = por %p461, %p462
      %p465 = scmp.ne.s32.totalorder %s450, %s464
      %p466 = scmp.eq.s32.totalorder %s32, 0
      %p467 = por %p465, %p466
      %s468 = ssub.s32 %s33, %s45
      %p469 = scmp.eq.s32.totalorder %s468, 0
      %s471 = sadd.s32 %s470, 1
      %s472 = scalar_select %p469, %s470, %s471
      %p475 = pneg %p469
      %p476 = scmp.eq.s32.totalorder %s26, 3
      %p477 = por %p475, %p476
      %p478 = scmp.ne.s32.totalorder %s470, %s473
      %p479 = scmp.eq.s32.totalorder %s26, 0
      %p480 = por %p478, %p479
      %p481 = scmp.ne.s32.totalorder %s470, %s473
      %p482 = scmp.eq.s32.totalorder %s31, 3
      %p483 = por %p481, %p482
      %p484 = scmp.ne.s32.totalorder %s473, %s474
      %p485 = scmp.eq.s32.totalorder %s31, 0
      %p486 = por %p484, %p485
      %p487 = scmp.ne.s32.totalorder %s473, %s474
      %p488 = scmp.eq.s32.totalorder %s32, 3
      %p489 = por %p487, %p488
      %p491 = scmp.ne.s32.totalorder %s474, %s490
      %p492 = scmp.eq.s32.totalorder %s32, 0
      %p493 = por %p491, %p492
      %p494 = scmp.le.s32.totalorder 1, %s26
      %p495 = scmp.lt.s32.totalorder %s26, 5
      %p496 = pnand %p494, %p495
      %p497 = pneg %p496
      // Predicated region
      $region9: #{tpu_custom_call.1} parent=5 // pred_check
        _
      $region10: #{tpu_custom_call.1} parent=5 // pred_check_branch
        %499 = sbr.rel (%p496) target = $region12
      $region11: #{tpu_custom_call.1} parent=5 // pred_region
        %s500 = ssub.s32 %s26, 1
        // Predicated region
        $region13: #{tpu_custom_call.1} parent=11 // pred_check
          %p501 = pneg %p397
        $region14: #{tpu_custom_call.1} parent=11 // pred_check_branch
          %503 = sbr.rel (%p501) target = $region16
        $region15: #{tpu_custom_call.1} parent=11 // pred_region
          _
        $region16: #{tpu_custom_call.1} parent=11 // pred_fallthru
          _
        // Predicated region
        $region17: #{tpu_custom_call.1} parent=11 // pred_check
          %p504 = pneg %p418
        $region18: #{tpu_custom_call.1} parent=11 // pred_check_branch
          %506 = sbr.rel (%p504) target = $region20
        $region19: #{tpu_custom_call.1} parent=11 // pred_region
          _
        $region20: #{tpu_custom_call.1} parent=11 // pred_fallthru
          _
        // Predicated region
        $region21: #{tpu_custom_call.1} parent=11 // pred_check
          %p507 = pneg %p439
        $region22: #{tpu_custom_call.1} parent=11 // pred_check_branch
          %509 = sbr.rel (%p507) target = $region24
        $region23: #{tpu_custom_call.1} parent=11 // pred_region
          _
        $region24: #{tpu_custom_call.1} parent=11 // pred_fallthru
          _
        // Predicated region
        $region25: #{tpu_custom_call.1} parent=11 // pred_check
          %p510 = pneg %p460
        $region26: #{tpu_custom_call.1} parent=11 // pred_check_branch
          %512 = sbr.rel (%p510) target = $region28
        $region27: #{tpu_custom_call.1} parent=11 // pred_region
          _
        $region28: #{tpu_custom_call.1} parent=11 // pred_fallthru
          _
      $region12: #{tpu_custom_call.1} parent=5 // pred_fallthru
        _
      %p513 = scmp.lt.s32.totalorder %s26, 4
      // Predicated region
      $region29: #{tpu_custom_call.1} parent=5 // pred_check
        %p514 = pneg %p513
      $region30: #{tpu_custom_call.1} parent=5 // pred_check_branch
        %516 = sbr.rel (%p514) target = $region32
      $region31: #{tpu_custom_call.1} parent=5 // pred_region
        // Predicated region
        $region33: #{tpu_custom_call.1} parent=31 // pred_check
          %p517 = pneg %p58
        $region34: #{tpu_custom_call.1} parent=31 // pred_check_branch
          %519 = sbr.rel (%p517) target = $region36
        $region35: #{tpu_custom_call.1} parent=31 // pred_region
          %p520 = scmp.lt.s32.totalorder %s33, 1
          %s521 = scalar_select %p520, %s33, 1
          %s522 = smul.addr %s521, 5
          %s523 = smul.addr %s522, 8
          %s524 = scalar_lea.vmem %s0, %s523
        $region36: #{tpu_custom_call.1} parent=31 // pred_fallthru
          _
        // Predicated region
        $region37: #{tpu_custom_call.1} parent=31 // pred_check
          %p525 = pneg %p84
        $region38: #{tpu_custom_call.1} parent=31 // pred_check_branch
          %527 = sbr.rel (%p525) target = $region40
        $region39: #{tpu_custom_call.1} parent=31 // pred_region
          %p528 = scmp.lt.s32.totalorder %s34, 1
          %s529 = scalar_select %p528, %s34, 1
          %s530 = scalar_lea.vmem %s1, %s529
        $region40: #{tpu_custom_call.1} parent=31 // pred_fallthru
          _
        // Predicated region
        $region41: #{tpu_custom_call.1} parent=31 // pred_check
          %p531 = pneg %p110
        $region42: #{tpu_custom_call.1} parent=31 // pred_check_branch
          %533 = sbr.rel (%p531) target = $region44
        $region43: #{tpu_custom_call.1} parent=31 // pred_region
          %p534 = scmp.lt.s32.totalorder %s34, 1
          %s535 = scalar_select %p534, %s34, 1
          %s536 = scalar_lea.vmem %s2, %s535
        $region44: #{tpu_custom_call.1} parent=31 // pred_fallthru
          _
        // Predicated region
        $region45: #{tpu_custom_call.1} parent=31 // pred_check
          %p537 = pneg %p136
        $region46: #{tpu_custom_call.1} parent=31 // pred_check_branch
          %539 = sbr.rel (%p537) target = $region48
        $region47: #{tpu_custom_call.1} parent=31 // pred_region
          %p540 = scmp.lt.s32.totalorder %s34, 1
          %s541 = scalar_select %p540, %s34, 1
          %s542 = smul.addr %s541, 4
          %s543 = smul.addr %s542, 4
          %s544 = scalar_lea.vmem %s3, %s543
        $region48: #{tpu_custom_call.1} parent=31 // pred_fallthru
          _
        // Predicated region
        $region49: #{tpu_custom_call.1} parent=31 // pred_check
          %p545 = pneg %p162
        $region50: #{tpu_custom_call.1} parent=31 // pred_check_branch
          %547 = sbr.rel (%p545) target = $region52
        $region51: #{tpu_custom_call.1} parent=31 // pred_region
          %p548 = scmp.lt.s32.totalorder %s34, 1
          %s549 = scalar_select %p548, %s34, 1
          %s550 = scalar_lea.vmem %s4, %s549
        $region52: #{tpu_custom_call.1} parent=31 // pred_fallthru
          _
        // Predicated region
        $region53: #{tpu_custom_call.1} parent=31 // pred_check
          %p551 = pneg %p188
        $region54: #{tpu_custom_call.1} parent=31 // pred_check_branch
          %553 = sbr.rel (%p551) target = $region56
        $region55: #{tpu_custom_call.1} parent=31 // pred_region
          %p554 = scmp.lt.s32.totalorder %s34, 1
          %s555 = scalar_select %p554, %s34, 1
          %s556 = smul.addr %s555, 4
          %s557 = smul.addr %s556, 4
          %s558 = scalar_lea.vmem %s5, %s557
        $region56: #{tpu_custom_call.1} parent=31 // pred_fallthru
          _
        // Predicated region
        $region57: #{tpu_custom_call.1} parent=31 // pred_check
          %p559 = pneg %p214
        $region58: #{tpu_custom_call.1} parent=31 // pred_check_branch
          %561 = sbr.rel (%p559) target = $region60
        $region59: #{tpu_custom_call.1} parent=31 // pred_region
          %p562 = scmp.lt.s32.totalorder %s34, 1
          %s563 = scalar_select %p562, %s34, 1
          %s564 = scalar_lea.vmem %s6, %s563
        $region60: #{tpu_custom_call.1} parent=31 // pred_fallthru
          _
        // Predicated region
        $region61: #{tpu_custom_call.1} parent=31 // pred_check
          %p565 = pneg %p240
        $region62: #{tpu_custom_call.1} parent=31 // pred_check_branch
          %567 = sbr.rel (%p565) target = $region64
        $region63: #{tpu_custom_call.1} parent=31 // pred_region
          %p568 = scmp.lt.s32.totalorder %s34, 1
          %s569 = scalar_select %p568, %s34, 1
          %s570 = scalar_lea.vmem %s7, %s569
        $region64: #{tpu_custom_call.1} parent=31 // pred_fallthru
          _
        // Predicated region
        $region65: #{tpu_custom_call.1} parent=31 // pred_check
          %p571 = pneg %p266
        $region66: #{tpu_custom_call.1} parent=31 // pred_check_branch
          %573 = sbr.rel (%p571) target = $region68
        $region67: #{tpu_custom_call.1} parent=31 // pred_region
          %p574 = scmp.lt.s32.totalorder %s34, 1
          %s575 = scalar_select %p574, %s34, 1
          %s576 = scalar_lea.vmem %s8, %s575
        $region68: #{tpu_custom_call.1} parent=31 // pred_fallthru
          _
        // Predicated region
        $region69: #{tpu_custom_call.1} parent=31 // pred_check
          %p577 = pneg %p292
        $region70: #{tpu_custom_call.1} parent=31 // pred_check_branch
          %579 = sbr.rel (%p577) target = $region72
        $region71: #{tpu_custom_call.1} parent=31 // pred_region
          %p580 = scmp.lt.s32.totalorder %s34, 1
          %s581 = scalar_select %p580, %s34, 1
          %s582 = smul.addr %s581, 4
          %s583 = smul.addr %s582, 4
          %s584 = scalar_lea.vmem %s9, %s583
        $region72: #{tpu_custom_call.1} parent=31 // pred_fallthru
          _
        // Predicated region
        $region73: #{tpu_custom_call.1} parent=31 // pred_check
          %p585 = pneg %p318
        $region74: #{tpu_custom_call.1} parent=31 // pred_check_branch
          %587 = sbr.rel (%p585) target = $region76
        $region75: #{tpu_custom_call.1} parent=31 // pred_region
          %p588 = scmp.lt.s32.totalorder %s34, 1
          %s589 = scalar_select %p588, %s34, 1
          %s590 = scalar_lea.vmem %s10, %s589
        $region76: #{tpu_custom_call.1} parent=31 // pred_fallthru
          _
        // Predicated region
        $region77: #{tpu_custom_call.1} parent=31 // pred_check
          %p591 = pneg %p344
        $region78: #{tpu_custom_call.1} parent=31 // pred_check_branch
          %593 = sbr.rel (%p591) target = $region80
        $region79: #{tpu_custom_call.1} parent=31 // pred_region
          %p594 = scmp.lt.s32.totalorder %s34, 1
          %s595 = scalar_select %p594, %s34, 1
          %s596 = smul.addr %s595, 16
          %s597 = smul.addr %s596, 4
          %s598 = scalar_lea.vmem %s11, %s597
        $region80: #{tpu_custom_call.1} parent=31 // pred_fallthru
          _
        // Predicated region
        $region81: #{tpu_custom_call.1} parent=31 // pred_check
          %p599 = pneg %p370
        $region82: #{tpu_custom_call.1} parent=31 // pred_check_branch
          %601 = sbr.rel (%p599) target = $region84
        $region83: #{tpu_custom_call.1} parent=31 // pred_region
          %p602 = scmp.lt.s32.totalorder %s34, 1
          %s603 = scalar_select %p602, %s34, 1
          %s604 = scalar_lea.vmem %s12, %s603
        $region84: #{tpu_custom_call.1} parent=31 // pred_fallthru
          _
      $region32: #{tpu_custom_call.1} parent=5 // pred_fallthru
        _
      %p605 = scmp.le.s32.totalorder 1, %s26
      %p606 = scmp.lt.s32.totalorder %s26, 5
      %p607 = pnand %p605, %p606
      %p608 = pneg %p607
      // Predicated region
      $region85: #{tpu_custom_call.1} parent=5 // pred_check
        _
      $region86: #{tpu_custom_call.1} parent=5 // pred_check_branch
        %610 = sbr.rel (%p607) target = $region88
      $region87: #{tpu_custom_call.1} parent=5 // pred_region
        %s611 = ssub.s32 %s26, 1
        %p612 = scmp.lt.s32.totalorder %s35, 1
        %s613 = scalar_select %p612, %s35, 1
        %s614 = smul.addr %s613, 5
        %s615 = smul.addr %s614, 8
        %s616 = scalar_lea.vmem %s0, %s615
        %p617 = pneg %p64
        %p618 = pneg %p61
        %p619 = scmp.lt.s32.totalorder %s36, 1
        %s620 = scalar_select %p619, %s36, 1
        %s621 = scalar_lea.vmem %s1, %s620
        %p622 = pneg %p90
        %p623 = pneg %p87
        %p624 = scmp.lt.s32.totalorder %s36, 1
        %s625 = scalar_select %p624, %s36, 1
        %s626 = scalar_lea.vmem %s2, %s625
        %p627 = pneg %p116
        %p628 = pneg %p113
        %p629 = scmp.lt.s32.totalorder %s36, 1
        %s630 = scalar_select %p629, %s36, 1
        %s631 = smul.addr %s630, 4
        %s632 = smul.addr %s631, 4
        %s633 = scalar_lea.vmem %s3, %s632
        %p634 = pneg %p142
        %p635 = pneg %p139
        %p636 = scmp.lt.s32.totalorder %s36, 1
        %s637 = scalar_select %p636, %s36, 1
        %s638 = scalar_lea.vmem %s4, %s637
        %p639 = pneg %p168
        %p640 = pneg %p165
        %p641 = scmp.lt.s32.totalorder %s36, 1
        %s642 = scalar_select %p641, %s36, 1
        %s643 = smul.addr %s642, 4
        %s644 = smul.addr %s643, 4
        %s645 = scalar_lea.vmem %s5, %s644
        %p646 = pneg %p194
        %p647 = pneg %p191
        %p648 = scmp.lt.s32.totalorder %s36, 1
        %s649 = scalar_select %p648, %s36, 1
        %s650 = scalar_lea.vmem %s6, %s649
        %p651 = pneg %p220
        %p652 = pneg %p217
        %p653 = scmp.lt.s32.totalorder %s36, 1
        %s654 = scalar_select %p653, %s36, 1
        %s655 = scalar_lea.vmem %s7, %s654
        %p656 = pneg %p246
        %p657 = pneg %p243
        %p658 = scmp.lt.s32.totalorder %s36, 1
        %s659 = scalar_select %p658, %s36, 1
        %s660 = scalar_lea.vmem %s8, %s659
        %p661 = pneg %p272
        %p662 = pneg %p269
        %p663 = scmp.lt.s32.totalorder %s36, 1
        %s664 = scalar_select %p663, %s36, 1
        %s665 = smul.addr %s664, 4
        %s666 = smul.addr %s665, 4
        %s667 = scalar_lea.vmem %s9, %s666
        %p668 = pneg %p298
        %p669 = pneg %p295
        %p670 = scmp.lt.s32.totalorder %s36, 1
        %s671 = scalar_select %p670, %s36, 1
        %s672 = scalar_lea.vmem %s10, %s671
        %p673 = pneg %p324
        %p674 = pneg %p321
        %p675 = scmp.lt.s32.totalorder %s36, 1
        %s676 = scalar_select %p675, %s36, 1
        %s677 = smul.addr %s676, 16
        %s678 = smul.addr %s677, 4
        %s679 = scalar_lea.vmem %s11, %s678
        %p680 = pneg %p350
        %p681 = pneg %p347
        %p682 = scmp.lt.s32.totalorder %s36, 1
        %s683 = scalar_select %p682, %s36, 1
        %s684 = scalar_lea.vmem %s12, %s683
        %p685 = pneg %p376
        %p686 = pneg %p373
        %p687 = pneg %p397
        %p688 = pneg %p394
        %p689 = pneg %p418
        %p690 = pneg %p415
        %p691 = pneg %p439
        %p692 = pneg %p436
        %p693 = pneg %p460
        %p694 = pneg %p457
        %p695 = pneg %p486
        %p696 = pneg %p483
        %s697 = sand.u32 %s473, 1
        %s698 = scalar_lea.sflag [#allocation6], %s697
        %s699 = sand.u32 %s473, 1
        %s700 = smul.addr %s699, 16
        %s701 = scalar_lea.vmem [#allocation5], %s700
        %p702 = scmp.lt.s32.totalorder %s35, 1
        %s703 = scalar_select %p702, %s35, 1
        %s704 = smul.addr %s703, 5
        %s705 = smul.addr %s704, 8
        %s706 = scalar_lea.vmem %s0, %s705
        %p707 = scmp.lt.s32.totalorder %s36, 1
        %s708 = scalar_select %p707, %s36, 1
        %s709 = scalar_lea.vmem %s1, %s708
        %p710 = scmp.lt.s32.totalorder %s36, 1
        %s711 = scalar_select %p710, %s36, 1
        %s712 = scalar_lea.vmem %s2, %s711
        %p713 = scmp.lt.s32.totalorder %s36, 1
        %s714 = scalar_select %p713, %s36, 1
        %s715 = smul.addr %s714, 4
        %s716 = smul.addr %s715, 4
        %s717 = scalar_lea.vmem %s3, %s716
        %p718 = scmp.lt.s32.totalorder %s36, 1
        %s719 = scalar_select %p718, %s36, 1
        %s720 = scalar_lea.vmem %s4, %s719
        %p721 = scmp.lt.s32.totalorder %s36, 1
        %s722 = scalar_select %p721, %s36, 1
        %s723 = smul.addr %s722, 4
        %s724 = smul.addr %s723, 4
        %s725 = scalar_lea.vmem %s5, %s724
        %p726 = scmp.lt.s32.totalorder %s36, 1
        %s727 = scalar_select %p726, %s36, 1
        %s728 = scalar_lea.vmem %s6, %s727
        %p729 = scmp.lt.s32.totalorder %s36, 1
        %s730 = scalar_select %p729, %s36, 1
        %s731 = scalar_lea.vmem %s7, %s730
        %p732 = scmp.lt.s32.totalorder %s36, 1
        %s733 = scalar_select %p732, %s36, 1
        %s734 = scalar_lea.vmem %s8, %s733
        %p735 = scmp.lt.s32.totalorder %s36, 1
        %s736 = scalar_select %p735, %s36, 1
        %s737 = smul.addr %s736, 4
        %s738 = smul.addr %s737, 4
        %s739 = scalar_lea.vmem %s9, %s738
        %p740 = scmp.lt.s32.totalorder %s36, 1
        %s741 = scalar_select %p740, %s36, 1
        %s742 = scalar_lea.vmem %s10, %s741
        %p743 = scmp.lt.s32.totalorder %s36, 1
        %s744 = scalar_select %p743, %s36, 1
        %s745 = smul.addr %s744, 16
        %s746 = smul.addr %s745, 4
        %s747 = scalar_lea.vmem %s11, %s746
        %p748 = scmp.lt.s32.totalorder %s36, 1
        %s749 = scalar_select %p748, %s36, 1
        %s750 = scalar_lea.vmem %s12, %s749
        %p752 = scmp.eq.s32.totalorder %s36, 0
        // Predicated region
        $region89: #{tpu_custom_call.1} parent=87 // pred_check
          %p753 = pneg %p752
        $region90: #{tpu_custom_call.1} parent=87 // pred_check_branch
          %755 = sbr.rel (%p753) target = $region92
        $region91: #{tpu_custom_call.1} parent=87 // pred_region
          %v756 = vld [vmem:[%s706] sm:$0xff]
          %v757 = vld [vmem:[%s706 + $0x8] sm:$0xff]
          %v758 = vld [vmem:[%s706 + $0x10] sm:$0xff]
          %v759 = vld [vmem:[%s706 + $0x18] sm:$0xff]
          %v760 = vld [vmem:[%s706 + $0x20] sm:$0xff]
          %vm761 = vcmask 261120
          %762 = vst.msk [vmem:[#allocation2] sm:$0xff] %vm761, %v756
          %763 = vst.msk [vmem:[#allocation2 + $0x8] sm:$0xff] %vm761, %v757
          %764 = vst.msk [vmem:[#allocation2 + $0x10] sm:$0xff] %vm761, %v758
          %765 = vst.msk [vmem:[#allocation2 + $0x18] sm:$0xff] %vm761, %v759
          %766 = vst.msk [vmem:[#allocation2 + $0x20] sm:$0xff] %vm761, %v760
          %v767 = vlaneseq
          %v768 = vshrl.u32 %v767, 7
          %v769 = vadd.s32 %v768, 8
          %v770 = vadd.s32 %v768, 16
          %v771 = vadd.s32 %v768, 24
          %v772 = vadd.s32 %v768, 32
          %v773 = vlaneseq
          %v774 = vand.u32 %v773, 127
          %vm775 = vcmp.ge.s32.totalorder %v774, 17
          %vm776 = vcmp.lt.s32.totalorder %v774, 24
          %vm777 = vmand %vm775, %vm776
          %vm778 = vcmp.ge.s32.totalorder %v774, 40
          %vm779 = vmor %vm777, %vm778
          %vm780 = vcmp.ge.s32.totalorder %v774, 24
          %vm781 = vcmp.lt.s32.totalorder %v774, 40
          %vm782 = vmand %vm780, %vm781
          %vm783 = vcmp.ne.s32.totalorder %v768, %v774
          %vm784 = vcmp.ne.s32.totalorder %v769, %v774
          %vm785 = vcmp.ne.s32.totalorder %v770, %v774
          %vm786 = vcmp.ne.s32.totalorder %v771, %v774
          %vm787 = vcmp.ne.s32.totalorder %v772, %v774
          %vm788 = vmand %vm782, %vm783
          %vm789 = vmand %vm782, %vm784
          %vm790 = vmand %vm782, %vm785
          %vm791 = vmand %vm782, %vm786
          %vm792 = vmand %vm782, %vm787
          %vm793 = vmor %vm779, %vm788
          %vm794 = vmor %vm779, %vm789
          %vm795 = vmor %vm779, %vm790
          %vm796 = vmor %vm779, %vm791
          %vm797 = vmor %vm779, %vm792
          %v798 = vsel %vm793, -1e+30, 0.0
          %v799 = vsel %vm794, -1e+30, 0.0
          %v800 = vsel %vm795, -1e+30, 0.0
          %v801 = vsel %vm796, -1e+30, 0.0
          %v802 = vsel %vm797, -1e+30, 0.0
          %vm803 = vcmask 326656
          %804 = vst.msk [vmem:[#allocation3] sm:$0xff] %vm803, %v798
          %805 = vst.msk [vmem:[#allocation3 + $0x8] sm:$0xff] %vm803, %v799
          %806 = vst.msk [vmem:[#allocation3 + $0x10] sm:$0xff] %vm803, %v800
          %807 = vst.msk [vmem:[#allocation3 + $0x18] sm:$0xff] %vm803, %v801
          %808 = vst.msk [vmem:[#allocation3 + $0x20] sm:$0xff] %vm803, %v802
        $region92: #{tpu_custom_call.1} parent=87 // pred_fallthru
          _
        %v809 = vld [vmem:[#allocation2] sm:$0xff]
        %v810 = vld [vmem:[#allocation2 + $0x8] sm:$0xff]
        %v811 = vld [vmem:[#allocation2 + $0x10] sm:$0xff]
        %v812 = vld [vmem:[#allocation2 + $0x18] sm:$0xff]
        %v813 = vld [vmem:[#allocation2 + $0x20] sm:$0xff]
        %v814 = vld [vmem:[#allocation3] sm:$0xff]
        %v815 = vld [vmem:[#allocation3 + $0x8] sm:$0xff]
        %v816 = vld [vmem:[#allocation3 + $0x10] sm:$0xff]
        %v817 = vld [vmem:[#allocation3 + $0x18] sm:$0xff]
        %v818 = vld [vmem:[#allocation3 + $0x20] sm:$0xff]
        %v819 = vld [vmem:[%s709] sm:$0x1]
        %v820 = vld [vmem:[%s712] sm:$0x1]
        %vm821 = vcmask 261120
        %v822 = vsel %vm821, %v809, 0.0
        %823 = vadd.xlane.f32.xlu0 %v822
        %v824 = vpop.xlane.xlu0 %823
        %v825 = vsel %vm821, %v810, 0.0
        %826 = vadd.xlane.f32.xlu0 %v825
        %v827 = vpop.xlane.xlu0 %826
        %v828 = vsel %vm821, %v811, 0.0
        %829 = vadd.xlane.f32.xlu0 %v828
        %v830 = vpop.xlane.xlu0 %829
        %v831 = vsel %vm821, %v812, 0.0
        %832 = vadd.xlane.f32.xlu0 %v831
        %v833 = vpop.xlane.xlu0 %832
        %v834 = vsel %vm821, %v813, 0.0
        %835 = vadd.xlane.f32.xlu0 %v834
        %v836 = vpop.xlane.xlu0 %835
        %v837 = vrcp.pop 32.0
        %v838 = vmul.f32 %v824, %v837
        %v839 = vmul.f32 %v827, %v837
        %v840 = vmul.f32 %v830, %v837
        %v841 = vmul.f32 %v833, %v837
        %v842 = vmul.f32 %v836, %v837
        %v843 = vsub.f32 %v809, %v838
        %v844 = vsub.f32 %v810, %v839
        %v845 = vsub.f32 %v811, %v840
        %v846 = vsub.f32 %v812, %v841
        %v847 = vsub.f32 %v813, %v842
        %v848 = vmul.f32 %v843, %v843
        %v849 = vmul.f32 %v844, %v844
        %v850 = vmul.f32 %v845, %v845
        %v851 = vmul.f32 %v846, %v846
        %v852 = vmul.f32 %v847, %v847
        %v853 = vsel %vm821, %v848, 0.0
        %854 = vadd.xlane.f32.xlu0 %v853
        %v855 = vpop.xlane.xlu0 %854
        %v856 = vsel %vm821, %v849, 0.0
        %857 = vadd.xlane.f32.xlu0 %v856
        %v858 = vpop.xlane.xlu0 %857
        %v859 = vsel %vm821, %v850, 0.0
        %860 = vadd.xlane.f32.xlu0 %v859
        %v861 = vpop.xlane.xlu0 %860
        %v862 = vsel %vm821, %v851, 0.0
        %863 = vadd.xlane.f32.xlu0 %v862
        %v864 = vpop.xlane.xlu0 %863
        %v865 = vsel %vm821, %v852, 0.0
        %866 = vadd.xlane.f32.xlu0 %v865
        %v867 = vpop.xlane.xlu0 %866
        %v868 = vmul.f32 %v855, %v837
        %v869 = vmul.f32 %v858, %v837
        %v870 = vmul.f32 %v861, %v837
        %v871 = vmul.f32 %v864, %v837
        %v872 = vmul.f32 %v867, %v837
        %v873 = vadd.f32 %v868, 1e-06
        %v874 = vadd.f32 %v869, 1e-06
        %v875 = vadd.f32 %v870, 1e-06
        %v876 = vadd.f32 %v871, 1e-06
        %v877 = vadd.f32 %v872, 1e-06
        %v878 = vrsqrt.pop %v873
        %v879 = vrsqrt.pop %v874
        %v880 = vrsqrt.pop %v875
        %v881 = vrsqrt.pop %v876
        %v882 = vrsqrt.pop %v877
        %v883 = vmul.f32 %v843, %v878
        %v884 = vmul.f32 %v844, %v879
        %v885 = vmul.f32 %v845, %v880
        %v886 = vmul.f32 %v846, %v881
        %v887 = vmul.f32 %v847, %v882
        %v889 = vlaneseq
        %v890 = vshrl.u32 %v889, 7
        %v891 = vsub.s32 0, %v890
        %v892 = vrot.slane %v819, %v891
        %v894 = vmul.f32 %v883, %v892
        %v895 = vmul.f32 %v884, %v892
        %v896 = vmul.f32 %v885, %v892
        %v897 = vmul.f32 %v886, %v892
        %v898 = vmul.f32 %v887, %v892
        %v900 = vlaneseq
        %v901 = vshrl.u32 %v900, 7
        %v902 = vsub.s32 0, %v901
        %v903 = vrot.slane %v820, %v902
        %v905 = vadd.f32 %v894, %v903
        %v906 = vadd.f32 %v895, %v903
        %v907 = vadd.f32 %v896, %v903
        %v908 = vadd.f32 %v897, %v903
        %v909 = vadd.f32 %v898, %v903
        %v910 = vpack.c.bf16 %v906, %v905
        %v911 = vpack.c.bf16 %v908, %v907
        %v912 = vpack.c.bf16 %v909, %v909
        %v913 = vld [vmem:[%s717] sm:$0xf]
        %v914 = vld [vmem:[%s717 + $0x4] sm:$0xf]
        %v915 = vld [vmem:[%s717 + $0x8] sm:$0xf]
        %v916 = vld [vmem:[%s717 + $0xc] sm:$0xf]
        %v917 = vld [vmem:[%s720] sm:$0x1]
        %v919 = vlaneseq
        %v920 = vshrl.u32 %v919, 7
        %v921 = vsub.s32 0, %v920
        %v922 = vrot.slane %v917, %v921
        %v928 = vunpack.c.l.b16 %v913
        %v929 = vunpack.c.l.b16 %v914
        %v930 = vunpack.c.l.b16 %v915
        %v931 = vunpack.c.l.b16 %v916
        %v932 = vpack.c.b16 %v929, %v928
        %v933 = vpack.c.b16 %v931, %v930
        %v937 = vsel %vm821, %v910, 0
        %v940 = vsel %vm821, %v911, 0
        %v943 = vsel %vm821, %v912, 0
        %945 = vmatprep.subr.bf16.mxu0 0
        %946 = vmatpush1.bf16.msra.mxu0 %v932
        %947 = vmatprep.subr.bf16.mxu0 0
        %948 = vmatpush1.bf16.msra.mxu0 %v933
        %949 = vmatprep.subr.bf16.mxu0 0
        %950 = vmatpush1.bf16.msra.mxu0 0
        %951 = vmatprep.subr.bf16.mxu0 0
        %952 = vmatpush1.bf16.msra.mxu0 0
        %953 = vmatprep.subr.bf16.mxu0 0
        %954 = vmatpush1.bf16.msra.mxu0 0
        %955 = vmatprep.subr.bf16.mxu0 0
        %956 = vmatpush1.bf16.msra.mxu0 0
        %957 = vmatprep.subr.bf16.mxu0 0
        %958 = vmatpush1.bf16.msra.mxu0 0
        %959 = vmatprep.subr.bf16.mxu0 0
        %960 = vmatpush1.bf16.msra.mxu0 0
        %961 = vmatprep.subr.bf16.mxu0 0
        %962 = vmatpush1.bf16.msra.mxu0 0
        %963 = vmatprep.subr.bf16.mxu0 0
        %964 = vmatpush1.bf16.msra.mxu0 0
        %965 = vmatprep.subr.bf16.mxu0 0
        %966 = vmatpush1.bf16.msra.mxu0 0
        %967 = vmatprep.subr.bf16.mxu0 0
        %968 = vmatpush1.bf16.msra.mxu0 0
        %969 = vmatprep.subr.bf16.mxu0 0
        %970 = vmatpush1.bf16.msra.mxu0 0
        %971 = vmatprep.subr.bf16.mxu0 0
        %972 = vmatpush1.bf16.msra.mxu0 0
        %973 = vmatprep.subr.bf16.mxu0 0
        %974 = vmatpush1.bf16.msra.mxu0 0
        %975 = vmatprep.subr.bf16.mxu0 0
        %976 = vmatpush1.bf16.msra.mxu0 0
        %977 = vmatprep.mubr.bf16.mxu0 0
        %978 = vmatmul.mubr.bf16.gmra.mrb[0].mxu0 %v937
        %v979 = vpop.f32.mrb[0].mxu0
        %v980 = vadd.f32 %v922, %v979
        %v981 = vpop.f32.mrb[0].mxu0
        %v982 = vpop.f32.mrb[0].mxu0
        %v983 = vadd.f32 %v922, %v982
        %v984 = vpop.f32.mrb[0].mxu0
        %985 = vmatprep.mubr.bf16.mxu0 0
        %986 = vmatmul.mubr.bf16.gmra.mrb[0].mxu0 %v940
        %v987 = vpop.f32.mrb[0].mxu0
        %v988 = vadd.f32 %v922, %v987
        %v989 = vpop.f32.mrb[0].mxu0
        %v990 = vpop.f32.mrb[0].mxu0
        %v991 = vadd.f32 %v922, %v990
        %v992 = vpop.f32.mrb[0].mxu0
        %993 = vmatprep.mubr.bf16.mxu0 0
        %994 = vmatmul.mubr.bf16.gmra.mrb[0].mxu0 %v943
        %v995 = vpop.f32.mrb[0].mxu0
        %v996 = vadd.f32 %v922, %v995
        %v997 = vpop.f32.mrb[0].mxu0
        %v998 = vpop.f32.mrb[0].mxu0
        %v999 = vpop.f32.mrb[0].mxu0
        %1000 = vdwg.mxu0
        %1006 = vrot.lane.b32.xlu0 %v980, 96
        %v1007 = vpop.permute.xlu0 %1006
        %1008 = vrot.lane.b32.xlu0 %v983, 96
        %v1009 = vpop.permute.xlu0 %1008
        %1010 = vrot.lane.b32.xlu0 %v988, 96
        %v1011 = vpop.permute.xlu0 %1010
        %1012 = vrot.lane.b32.xlu0 %v991, 96
        %v1013 = vpop.permute.xlu0 %1012
        %1014 = vrot.lane.b32.xlu0 %v996, 96
        %v1015 = vpop.permute.xlu0 %1014
        %vm1016 = vcmask 64512
        %v1017 = vsel %vm1016, %v980, 0
        %v1019 = vsel %vm1016, %v983, 0
        %v1021 = vsel %vm1016, %v988, 0
        %v1023 = vsel %vm1016, %v991, 0
        %v1025 = vsel %vm1016, %v996, 0
        %v1027 = vsel %vm1016, %v1007, 0
        %v1029 = vsel %vm1016, %v1009, 0
        %v1031 = vsel %vm1016, %v1011, 0
        %v1033 = vsel %vm1016, %v1013, 0
        %v1035 = vsel %vm1016, %v1015, 0
        %1037 = vmatprep.subr.mxu0 0.0
        %1038 = vmatpush1.xpose.msra.mxu0 %v1027
        %1039 = vmatprep.subr.mxu0 0.0
        %1040 = vmatpush1.xpose.msra.mxu0 %v1029
        %1041 = vmatprep.subr.mxu0 0.0
        %1042 = vmatpush1.xpose.msra.mxu0 %v1031
        %1043 = vmatprep.subr.mxu0 0.0
        %1044 = vmatpush1.xpose.msra.mxu0 %v1033
        %1045 = vmatprep.subr.mxu0 0.0
        %1046 = vmatpush1.xpose.msra.mxu0 %v1035
        %1047 = vmatprep.subr.mxu0 0.0
        %1048 = vmatpush1.xpose.msra.mxu0 0.0
        %1049 = vmatprep.subr.mxu0 0.0
        %1050 = vmatpush1.xpose.msra.mxu0 0.0
        %1051 = vmatprep.subr.mxu0 0.0
        %1052 = vmatpush1.xpose.msra.mxu0 0.0
        %1053 = vmatprep.subr.mxu0 0.0
        %1054 = vmatpush1.xpose.msra.mxu0 0.0
        %1055 = vmatprep.subr.mxu0 0.0
        %1056 = vmatpush1.xpose.msra.mxu0 0.0
        %1057 = vmatprep.subr.mxu0 0.0
        %1058 = vmatpush1.xpose.msra.mxu0 0.0
        %1059 = vmatprep.subr.mxu0 0.0
        %1060 = vmatpush1.xpose.msra.mxu0 0.0
        %1061 = vmatprep.subr.mxu0 0.0
        %1062 = vmatpush1.xpose.msra.mxu0 0.0
        %1063 = vmatprep.subr.mxu0 0.0
        %1064 = vmatpush1.xpose.msra.mxu0 0.0
        %1065 = vmatprep.subr.mxu0 0.0
        %1066 = vmatpush1.xpose.msra.mxu0 0.0
        %1067 = vmatprep.subr.mxu0 0.0
        %1068 = vmatpush1.xpose.msra.mxu0 0.0
        %1069 = vmatprep.subr.mxu0 0.0
        %1070 = vmatpush1.xpose.msra.mxu0 0.0
        %1071 = vmatprep.subr.mxu0 0.0
        %1072 = vmatpush1.xpose.msra.mxu0 0.0
        %1073 = vmatprep.subr.mxu0 0.0
        %1074 = vmatpush1.xpose.msra.mxu0 0.0
        %1075 = vmatprep.subr.mxu0 0.0
        %1076 = vmatpush1.xpose.msra.mxu0 0.0
        %1077 = vmatprep.subr.mxu0 0.0
        %1078 = vmatpush1.xpose.msra.mxu0 0.0
        %1079 = vmatprep.subr.mxu0 0.0
        %1080 = vmatpush1.xpose.msra.mxu0 0.0
        %1081 = vmatprep.subr.mxu0 0.0
        %1082 = vmatpush1.xpose.msra.mxu0 0.0
        %1083 = vmatprep.subr.mxu0 0.0
        %1084 = vmatpush1.xpose.msra.mxu0 0.0
        %1085 = vmatprep.subr.mxu0 0.0
        %1086 = vmatpush1.xpose.msra.mxu0 0.0
        %1087 = vmatprep.subr.mxu0 0.0
        %1088 = vmatpush1.xpose.msra.mxu0 0.0
        %1089 = vmatprep.subr.mxu0 0.0
        %1090 = vmatpush1.xpose.msra.mxu0 0.0
        %1091 = vmatprep.subr.mxu0 0.0
        %1092 = vmatpush1.xpose.msra.mxu0 0.0
        %1093 = vmatprep.subr.mxu0 0.0
        %1094 = vmatpush1.xpose.msra.mxu0 0.0
        %1095 = vmatprep.subr.mxu0 0.0
        %1096 = vmatpush1.xpose.msra.mxu0 0.0
        %1097 = vmatprep.subr.mxu0 0.0
        %1098 = vmatpush1.xpose.msra.mxu0 0.0
        %1099 = vmatprep.subr.mxu0 0.0
        %1100 = vmatpush1.xpose.msra.mxu0 0.0
        %1101 = vmatprep.mubr.f32.mxu0 0.0
        %1102 = vmatmul.mubr.f32.gmra.mrb[0].mxu0 %v1017
        %v1103 = vpop.f32.mrb[0].mxu0
        %v1104 = vadd.f32 %v814, %v1103
        %v1105 = vpop.f32.mrb[0].mxu0
        %1106 = vmatprep.mubr.f32.mxu0 0.0
        %1107 = vmatmul.mubr.f32.gmra.mrb[0].mxu0 %v1019
        %v1108 = vpop.f32.mrb[0].mxu0
        %v1109 = vadd.f32 %v815, %v1108
        %v1110 = vpop.f32.mrb[0].mxu0
        %1111 = vmatprep.mubr.f32.mxu0 0.0
        %1112 = vmatmul.mubr.f32.gmra.mrb[0].mxu0 %v1021
        %v1113 = vpop.f32.mrb[0].mxu0
        %v1114 = vadd.f32 %v816, %v1113
        %v1115 = vpop.f32.mrb[0].mxu0
        %1116 = vmatprep.mubr.f32.mxu0 0.0
        %1117 = vmatmul.mubr.f32.gmra.mrb[0].mxu0 %v1023
        %v1118 = vpop.f32.mrb[0].mxu0
        %v1119 = vadd.f32 %v817, %v1118
        %v1120 = vpop.f32.mrb[0].mxu0
        %1121 = vmatprep.mubr.f32.mxu0 0.0
        %1122 = vmatmul.mubr.f32.gmra.mrb[0].mxu0 %v1025
        %v1123 = vpop.f32.mrb[0].mxu0
        %v1124 = vadd.f32 %v818, %v1123
        %v1125 = vpop.f32.mrb[0].mxu0
        %1126 = vdwg.mxu0
        %vm1127 = vcmask 326656
        %v1128 = vsel %vm1127, %v1104, -inf
        %1129 = vmax.xlane.f32.xlu0 %v1128
        %v1130 = vpop.xlane.xlu0 %1129
        %v1131 = vsel %vm1127, %v1109, -inf
        %1132 = vmax.xlane.f32.xlu0 %v1131
        %v1133 = vpop.xlane.xlu0 %1132
        %v1134 = vsel %vm1127, %v1114, -inf
        %1135 = vmax.xlane.f32.xlu0 %v1134
        %v1136 = vpop.xlane.xlu0 %1135
        %v1137 = vsel %vm1127, %v1119, -inf
        %1138 = vmax.xlane.f32.xlu0 %v1137
        %v1139 = vpop.xlane.xlu0 %1138
        %v1140 = vsel %vm1127, %v1124, -inf
        %1141 = vmax.xlane.f32.xlu0 %v1140
        %v1142 = vpop.xlane.xlu0 %1141
        %v1143 = vsub.f32 %v1104, %v1130
        %v1144 = vsub.f32 %v1109, %v1133
        %v1145 = vsub.f32 %v1114, %v1136
        %v1146 = vsub.f32 %v1119, %v1139
        %v1147 = vsub.f32 %v1124, %v1142
        %v1148 = vmul.f32 %v1143, 1.442695
        %v1149 = vpow.pop %v1148
        %v1150 = vmul.f32 %v1144, 1.442695
        %v1151 = vpow.pop %v1150
        %v1152 = vmul.f32 %v1145, 1.442695
        %v1153 = vpow.pop %v1152
        %v1154 = vmul.f32 %v1146, 1.442695
        %v1155 = vpow.pop %v1154
        %v1156 = vmul.f32 %v1147, 1.442695
        %v1157 = vpow.pop %v1156
        %v1158 = vsel %vm1127, %v1149, 0.0
        %1159 = vadd.xlane.f32.xlu0 %v1158
        %v1160 = vpop.xlane.xlu0 %1159
        %v1161 = vsel %vm1127, %v1151, 0.0
        %1162 = vadd.xlane.f32.xlu0 %v1161
        %v1163 = vpop.xlane.xlu0 %1162
        %v1164 = vsel %vm1127, %v1153, 0.0
        %1165 = vadd.xlane.f32.xlu0 %v1164
        %v1166 = vpop.xlane.xlu0 %1165
        %v1167 = vsel %vm1127, %v1155, 0.0
        %1168 = vadd.xlane.f32.xlu0 %v1167
        %v1169 = vpop.xlane.xlu0 %1168
        %v1170 = vsel %vm1127, %v1157, 0.0
        %1171 = vadd.xlane.f32.xlu0 %v1170
        %v1172 = vpop.xlane.xlu0 %1171
        %v1173 = vrcp.pop %v1160
        %v1174 = vrcp.pop %v1163
        %v1175 = vrcp.pop %v1166
        %v1176 = vrcp.pop %v1169
        %v1177 = vrcp.pop %v1172
        %v1178 = vmul.f32 %v1149, %v1173
        %v1179 = vmul.f32 %v1151, %v1174
        %v1180 = vmul.f32 %v1153, %v1175
        %v1181 = vmul.f32 %v1155, %v1176
        %v1182 = vmul.f32 %v1157, %v1177
        %1183 = vrot.lane.b32.xlu0 %v980, 64
        %v1184 = vpop.permute.xlu0 %1183
        %1185 = vrot.lane.b32.xlu0 %v983, 64
        %v1186 = vpop.permute.xlu0 %1185
        %1187 = vrot.lane.b32.xlu0 %v988, 64
        %v1188 = vpop.permute.xlu0 %1187
        %1189 = vrot.lane.b32.xlu0 %v991, 64
        %v1190 = vpop.permute.xlu0 %1189
        %1191 = vrot.lane.b32.xlu0 %v996, 64
        %v1192 = vpop.permute.xlu0 %1191
        %v1199 = vsel %vm1127, %v1178, 0
        %v1202 = vsel %vm1127, %v1179, 0
        %v1205 = vsel %vm1127, %v1180, 0
        %v1208 = vsel %vm1127, %v1181, 0
        %v1211 = vsel %vm1127, %v1182, 0
        %1213 = vmatprep.subr.mxu0 0.0
        %1214 = vmatpush1.msra.mxu0 %v1184
        %1215 = vmatprep.subr.mxu0 0.0
        %1216 = vmatpush1.msra.mxu0 %v1186
        %1217 = vmatprep.subr.mxu0 0.0
        %1218 = vmatpush1.msra.mxu0 %v1188
        %1219 = vmatprep.subr.mxu0 0.0
        %1220 = vmatpush1.msra.mxu0 %v1190
        %1221 = vmatprep.subr.mxu0 0.0
        %1222 = vmatpush1.msra.mxu0 %v1192
        %1223 = vmatprep.subr.mxu0 0.0
        %1224 = vmatpush1.msra.mxu0 0.0
        %1225 = vmatprep.subr.mxu0 0.0
        %1226 = vmatpush1.msra.mxu0 0.0
        %1227 = vmatprep.subr.mxu0 0.0
        %1228 = vmatpush1.msra.mxu0 0.0
        %1229 = vmatprep.subr.mxu0 0.0
        %1230 = vmatpush1.msra.mxu0 0.0
        %1231 = vmatprep.subr.mxu0 0.0
        %1232 = vmatpush1.msra.mxu0 0.0
        %1233 = vmatprep.subr.mxu0 0.0
        %1234 = vmatpush1.msra.mxu0 0.0
        %1235 = vmatprep.subr.mxu0 0.0
        %1236 = vmatpush1.msra.mxu0 0.0
        %1237 = vmatprep.subr.mxu0 0.0
        %1238 = vmatpush1.msra.mxu0 0.0
        %1239 = vmatprep.subr.mxu0 0.0
        %1240 = vmatpush1.msra.mxu0 0.0
        %1241 = vmatprep.subr.mxu0 0.0
        %1242 = vmatpush1.msra.mxu0 0.0
        %1243 = vmatprep.subr.mxu0 0.0
        %1244 = vmatpush1.msra.mxu0 0.0
        %1245 = vmatprep.subr.mxu0 0.0
        %1246 = vmatpush1.msra.mxu0 0.0
        %1247 = vmatprep.subr.mxu0 0.0
        %1248 = vmatpush1.msra.mxu0 0.0
        %1249 = vmatprep.subr.mxu0 0.0
        %1250 = vmatpush1.msra.mxu0 0.0
        %1251 = vmatprep.subr.mxu0 0.0
        %1252 = vmatpush1.msra.mxu0 0.0
        %1253 = vmatprep.subr.mxu0 0.0
        %1254 = vmatpush1.msra.mxu0 0.0
        %1255 = vmatprep.subr.mxu0 0.0
        %1256 = vmatpush1.msra.mxu0 0.0
        %1257 = vmatprep.subr.mxu0 0.0
        %1258 = vmatpush1.msra.mxu0 0.0
        %1259 = vmatprep.subr.mxu0 0.0
        %1260 = vmatpush1.msra.mxu0 0.0
        %1261 = vmatprep.subr.mxu0 0.0
        %1262 = vmatpush1.msra.mxu0 0.0
        %1263 = vmatprep.subr.mxu0 0.0
        %1264 = vmatpush1.msra.mxu0 0.0
        %1265 = vmatprep.subr.mxu0 0.0
        %1266 = vmatpush1.msra.mxu0 0.0
        %1267 = vmatprep.subr.mxu0 0.0
        %1268 = vmatpush1.msra.mxu0 0.0
        %1269 = vmatprep.subr.mxu0 0.0
        %1270 = vmatpush1.msra.mxu0 0.0
        %1271 = vmatprep.subr.mxu0 0.0
        %1272 = vmatpush1.msra.mxu0 0.0
        %1273 = vmatprep.subr.mxu0 0.0
        %1274 = vmatpush1.msra.mxu0 0.0
        %1275 = vmatprep.subr.mxu0 0.0
        %1276 = vmatpush1.msra.mxu0 0.0
        %1277 = vmatprep.mubr.f32.mxu0 0.0
        %1278 = vmatmul.mubr.f32.gmra.mrb[0].mxu0 %v1199
        %v1279 = vpop.f32.mrb[0].mxu0
        %v1280 = vadd.f32 0.0, %v1279
        %v1281 = vpop.f32.mrb[0].mxu0
        %1282 = vmatprep.mubr.f32.mxu0 0.0
        %1283 = vmatmul.mubr.f32.gmra.mrb[0].mxu0 %v1202
        %v1284 = vpop.f32.mrb[0].mxu0
        %v1285 = vadd.f32 0.0, %v1284
        %v1286 = vpop.f32.mrb[0].mxu0
        %1287 = vmatprep.mubr.f32.mxu0 0.0
        %1288 = vmatmul.mubr.f32.gmra.mrb[0].mxu0 %v1205
        %v1289 = vpop.f32.mrb[0].mxu0
        %v1290 = vadd.f32 0.0, %v1289
        %v1291 = vpop.f32.mrb[0].mxu0
        %1292 = vmatprep.mubr.f32.mxu0 0.0
        %1293 = vmatmul.mubr.f32.gmra.mrb[0].mxu0 %v1208
        %v1294 = vpop.f32.mrb[0].mxu0
        %v1295 = vadd.f32 0.0, %v1294
        %v1296 = vpop.f32.mrb[0].mxu0
        %1297 = vmatprep.mubr.f32.mxu0 0.0
        %1298 = vmatmul.mubr.f32.gmra.mrb[0].mxu0 %v1211
        %v1299 = vpop.f32.mrb[0].mxu0
        %v1300 = vadd.f32 0.0, %v1299
        %v1301 = vpop.f32.mrb[0].mxu0
        %1302 = vdwg.mxu0
        %1303 = vst.msk [vmem:[#allocation4] sm:$0xff] %vm1016, %v1280
        %1304 = vst.msk [vmem:[#allocation4 + $0x8] sm:$0xff] %vm1016, %v1285
        %1305 = vst.msk [vmem:[#allocation4 + $0x10] sm:$0xff] %vm1016, %v1290
        %1306 = vst.msk [vmem:[#allocation4 + $0x18] sm:$0xff] %vm1016, %v1295
        %1307 = vst.msk [vmem:[#allocation4 + $0x20] sm:$0xff] %vm1016, %v1300
        %1308 = vrot.lane.b32.xlu0 %v980, 120
        %v1309 = vpop.permute.xlu0 %1308
        %1310 = vrot.lane.b32.xlu0 %v983, 120
        %v1311 = vpop.permute.xlu0 %1310
        %1312 = vrot.lane.b32.xlu0 %v988, 120
        %v1313 = vpop.permute.xlu0 %1312
        %1314 = vrot.lane.b32.xlu0 %v991, 120
        %v1315 = vpop.permute.xlu0 %1314
        %1316 = vrot.lane.b32.xlu0 %v996, 120
        %v1317 = vpop.permute.xlu0 %1316
        %1318 = vrot.lane.b32.xlu0 %v980, 88
        %v1319 = vpop.permute.xlu0 %1318
        %1320 = vrot.lane.b32.xlu0 %v983, 88
        %v1321 = vpop.permute.xlu0 %1320
        %1322 = vrot.lane.b32.xlu0 %v988, 88
        %v1323 = vpop.permute.xlu0 %1322
        %1324 = vrot.lane.b32.xlu0 %v991, 88
        %v1325 = vpop.permute.xlu0 %1324
        %1326 = vrot.lane.b32.xlu0 %v996, 88
        %v1327 = vpop.permute.xlu0 %1326
        %v1328 = vsel %vm1016, %v1309, 0
        %v1330 = vsel %vm1016, %v1311, 0
        %v1332 = vsel %vm1016, %v1313, 0
        %v1334 = vsel %vm1016, %v1315, 0
        %v1336 = vsel %vm1016, %v1317, 0
        %v1338 = vsel %vm1016, %v1319, 0
        %v1340 = vsel %vm1016, %v1321, 0
        %v1342 = vsel %vm1016, %v1323, 0
        %v1344 = vsel %vm1016, %v1325, 0
        %v1346 = vsel %vm1016, %v1327, 0
        %1348 = vmatprep.subr.mxu0 0.0
        %1349 = vmatpush1.xpose.msra.mxu0 %v1338
        %1350 = vmatprep.subr.mxu0 0.0
        %1351 = vmatpush1.xpose.msra.mxu0 %v1340
        %1352 = vmatprep.subr.mxu0 0.0
        %1353 = vmatpush1.xpose.msra.mxu0 %v1342
        %1354 = vmatprep.subr.mxu0 0.0
        %1355 = vmatpush1.xpose.msra.mxu0 %v1344
        %1356 = vmatprep.subr.mxu0 0.0
        %1357 = vmatpush1.xpose.msra.mxu0 %v1346
        %1358 = vmatprep.subr.mxu0 0.0
        %1359 = vmatpush1.xpose.msra.mxu0 0.0
        %1360 = vmatprep.subr.mxu0 0.0
        %1361 = vmatpush1.xpose.msra.mxu0 0.0
        %1362 = vmatprep.subr.mxu0 0.0
        %1363 = vmatpush1.xpose.msra.mxu0 0.0
        %1364 = vmatprep.subr.mxu0 0.0
        %1365 = vmatpush1.xpose.msra.mxu0 0.0
        %1366 = vmatprep.subr.mxu0 0.0
        %1367 = vmatpush1.xpose.msra.mxu0 0.0
        %1368 = vmatprep.subr.mxu0 0.0
        %1369 = vmatpush1.xpose.msra.mxu0 0.0
        %1370 = vmatprep.subr.mxu0 0.0
        %1371 = vmatpush1.xpose.msra.mxu0 0.0
        %1372 = vmatprep.subr.mxu0 0.0
        %1373 = vmatpush1.xpose.msra.mxu0 0.0
        %1374 = vmatprep.subr.mxu0 0.0
        %1375 = vmatpush1.xpose.msra.mxu0 0.0
        %1376 = vmatprep.subr.mxu0 0.0
        %1377 = vmatpush1.xpose.msra.mxu0 0.0
        %1378 = vmatprep.subr.mxu0 0.0
        %1379 = vmatpush1.xpose.msra.mxu0 0.0
        %1380 = vmatprep.subr.mxu0 0.0
        %1381 = vmatpush1.xpose.msra.mxu0 0.0
        %1382 = vmatprep.subr.mxu0 0.0
        %1383 = vmatpush1.xpose.msra.mxu0 0.0
        %1384 = vmatprep.subr.mxu0 0.0
        %1385 = vmatpush1.xpose.msra.mxu0 0.0
        %1386 = vmatprep.subr.mxu0 0.0
        %1387 = vmatpush1.xpose.msra.mxu0 0.0
        %1388 = vmatprep.subr.mxu0 0.0
        %1389 = vmatpush1.xpose.msra.mxu0 0.0
        %1390 = vmatprep.subr.mxu0 0.0
        %1391 = vmatpush1.xpose.msra.mxu0 0.0
        %1392 = vmatprep.subr.mxu0 0.0
        %1393 = vmatpush1.xpose.msra.mxu0 0.0
        %1394 = vmatprep.subr.mxu0 0.0
        %1395 = vmatpush1.xpose.msra.mxu0 0.0
        %1396 = vmatprep.subr.mxu0 0.0
        %1397 = vmatpush1.xpose.msra.mxu0 0.0
        %1398 = vmatprep.subr.mxu0 0.0
        %1399 = vmatpush1.xpose.msra.mxu0 0.0
        %1400 = vmatprep.subr.mxu0 0.0
        %1401 = vmatpush1.xpose.msra.mxu0 0.0
        %1402 = vmatprep.subr.mxu0 0.0
        %1403 = vmatpush1.xpose.msra.mxu0 0.0
        %1404 = vmatprep.subr.mxu0 0.0
        %1405 = vmatpush1.xpose.msra.mxu0 0.0
        %1406 = vmatprep.subr.mxu0 0.0
        %1407 = vmatpush1.xpose.msra.mxu0 0.0
        %1408 = vmatprep.subr.mxu0 0.0
        %1409 = vmatpush1.xpose.msra.mxu0 0.0
        %1410 = vmatprep.subr.mxu0 0.0
        %1411 = vmatpush1.xpose.msra.mxu0 0.0
        %1412 = vmatprep.mubr.f32.mxu0 0.0
        %1413 = vmatmul.mubr.f32.gmra.mrb[0].mxu0 %v1328
        %v1414 = vpop.f32.mrb[0].mxu0
        %v1415 = vadd.f32 %v814, %v1414
        %v1416 = vpop.f32.mrb[0].mxu0
        %1417 = vmatprep.mubr.f32.mxu0 0.0
        %1418 = vmatmul.mubr.f32.gmra.mrb[0].mxu0 %v1330
        %v1419 = vpop.f32.mrb[0].mxu0
        %v1420 = vadd.f32 %v815, %v1419
        %v1421 = vpop.f32.mrb[0].mxu0
        %1422 = vmatprep.mubr.f32.mxu0 0.0
        %1423 = vmatmul.mubr.f32.gmra.mrb[0].mxu0 %v1332
        %v1424 = vpop.f32.mrb[0].mxu0
        %v1425 = vadd.f32 %v816, %v1424
        %v1426 = vpop.f32.mrb[0].mxu0
        %1427 = vmatprep.mubr.f32.mxu0 0.0
        %1428 = vmatmul.mubr.f32.gmra.mrb[0].mxu0 %v1334
        %v1429 = vpop.f32.mrb[0].mxu0
        %v1430 = vadd.f32 %v817, %v1429
        %v1431 = vpop.f32.mrb[0].mxu0
        %1432 = vmatprep.mubr.f32.mxu0 0.0
        %1433 = vmatmul.mubr.f32.gmra.mrb[0].mxu0 %v1336
        %v1434 = vpop.f32.mrb[0].mxu0
        %v1435 = vadd.f32 %v818, %v1434
        %v1436 = vpop.f32.mrb[0].mxu0
        %1437 = vdwg.mxu0
        %v1438 = vsel %vm1127, %v1415, -inf
        %1439 = vmax.xlane.f32.xlu0 %v1438
        %v1440 = vpop.xlane.xlu0 %1439
        %v1441 = vsel %vm1127, %v1420, -inf
        %1442 = vmax.xlane.f32.xlu0 %v1441
        %v1443 = vpop.xlane.xlu0 %1442
        %v1444 = vsel %vm1127, %v1425, -inf
        %1445 = vmax.xlane.f32.xlu0 %v1444
        %v1446 = vpop.xlane.xlu0 %1445
        %v1447 = vsel %vm1127, %v1430, -inf
        %1448 = vmax.xlane.f32.xlu0 %v1447
        %v1449 = vpop.xlane.xlu0 %1448
        %v1450 = vsel %vm1127, %v1435, -inf
        %1451 = vmax.xlane.f32.xlu0 %v1450
        %v1452 = vpop.xlane.xlu0 %1451
        %v1453 = vsub.f32 %v1415, %v1440
        %v1454 = vsub.f32 %v1420, %v1443
        %v1455 = vsub.f32 %v1425, %v1446
        %v1456 = vsub.f32 %v1430, %v1449
        %v1457 = vsub.f32 %v1435, %v1452
        %v1458 = vmul.f32 %v1453, 1.442695
        %v1459 = vpow.pop %v1458
        %v1460 = vmul.f32 %v1454, 1.442695
        %v1461 = vpow.pop %v1460
        %v1462 = vmul.f32 %v1455, 1.442695
        %v1463 = vpow.pop %v1462
        %v1464 = vmul.f32 %v1456, 1.442695
        %v1465 = vpow.pop %v1464
        %v1466 = vmul.f32 %v1457, 1.442695
        %v1467 = vpow.pop %v1466
        %v1468 = vsel %vm1127, %v1459, 0.0
        %1469 = vadd.xlane.f32.xlu0 %v1468
        %v1470 = vpop.xlane.xlu0 %1469
        %v1471 = vsel %vm1127, %v1461, 0.0
        %1472 = vadd.xlane.f32.xlu0 %v1471
        %v1473 = vpop.xlane.xlu0 %1472
        %v1474 = vsel %vm1127, %v1463, 0.0
        %1475 = vadd.xlane.f32.xlu0 %v1474
        %v1476 = vpop.xlane.xlu0 %1475
        %v1477 = vsel %vm1127, %v1465, 0.0
        %1478 = vadd.xlane.f32.xlu0 %v1477
        %v1479 = vpop.xlane.xlu0 %1478
        %v1480 = vsel %vm1127, %v1467, 0.0
        %1481 = vadd.xlane.f32.xlu0 %v1480
        %v1482 = vpop.xlane.xlu0 %1481
        %v1483 = vrcp.pop %v1470
        %v1484 = vrcp.pop %v1473
        %v1485 = vrcp.pop %v1476
        %v1486 = vrcp.pop %v1479
        %v1487 = vrcp.pop %v1482
        %v1488 = vmul.f32 %v1459, %v1483
        %v1489 = vmul.f32 %v1461, %v1484
        %v1490 = vmul.f32 %v1463, %v1485
        %v1491 = vmul.f32 %v1465, %v1486
        %v1492 = vmul.f32 %v1467, %v1487
        %1493 = vrot.lane.b32.xlu0 %v980, 56
        %v1494 = vpop.permute.xlu0 %1493
        %1495 = vrot.lane.b32.xlu0 %v983, 56
        %v1496 = vpop.permute.xlu0 %1495
        %1497 = vrot.lane.b32.xlu0 %v988, 56
        %v1498 = vpop.permute.xlu0 %1497
        %1499 = vrot.lane.b32.xlu0 %v991, 56
        %v1500 = vpop.permute.xlu0 %1499
        %1501 = vrot.lane.b32.xlu0 %v996, 56
        %v1502 = vpop.permute.xlu0 %1501
        %v1509 = vsel %vm1127, %v1488, 0
        %v1512 = vsel %vm1127, %v1489, 0
        %v1515 = vsel %vm1127, %v1490, 0
        %v1518 = vsel %vm1127, %v1491, 0
        %v1521 = vsel %vm1127, %v1492, 0
        %1523 = vmatprep.subr.mxu0 0.0
        %1524 = vmatpush1.msra.mxu0 %v1494
        %1525 = vmatprep.subr.mxu0 0.0
        %1526 = vmatpush1.msra.mxu0 %v1496
        %1527 = vmatprep.subr.mxu0 0.0
        %1528 = vmatpush1.msra.mxu0 %v1498
        %1529 = vmatprep.subr.mxu0 0.0
        %1530 = vmatpush1.msra.mxu0 %v1500
        %1531 = vmatprep.subr.mxu0 0.0
        %1532 = vmatpush1.msra.mxu0 %v1502
        %1533 = vmatprep.subr.mxu0 0.0
        %1534 = vmatpush1.msra.mxu0 0.0
        %1535 = vmatprep.subr.mxu0 0.0
        %1536 = vmatpush1.msra.mxu0 0.0
        %1537 = vmatprep.subr.mxu0 0.0
        %1538 = vmatpush1.msra.mxu0 0.0
        %1539 = vmatprep.subr.mxu0 0.0
        %1540 = vmatpush1.msra.mxu0 0.0
        %1541 = vmatprep.subr.mxu0 0.0
        %1542 = vmatpush1.msra.mxu0 0.0
        %1543 = vmatprep.subr.mxu0 0.0
        %1544 = vmatpush1.msra.mxu0 0.0
        %1545 = vmatprep.subr.mxu0 0.0
        %1546 = vmatpush1.msra.mxu0 0.0
        %1547 = vmatprep.subr.mxu0 0.0
        %1548 = vmatpush1.msra.mxu0 0.0
        %1549 = vmatprep.subr.mxu0 0.0
        %1550 = vmatpush1.msra.mxu0 0.0
        %1551 = vmatprep.subr.mxu0 0.0
        %1552 = vmatpush1.msra.mxu0 0.0
        %1553 = vmatprep.subr.mxu0 0.0
        %1554 = vmatpush1.msra.mxu0 0.0
        %1555 = vmatprep.subr.mxu0 0.0
        %1556 = vmatpush1.msra.mxu0 0.0
        %1557 = vmatprep.subr.mxu0 0.0
        %1558 = vmatpush1.msra.mxu0 0.0
        %1559 = vmatprep.subr.mxu0 0.0
        %1560 = vmatpush1.msra.mxu0 0.0
        %1561 = vmatprep.subr.mxu0 0.0
        %1562 = vmatpush1.msra.mxu0 0.0
        %1563 = vmatprep.subr.mxu0 0.0
        %1564 = vmatpush1.msra.mxu0 0.0
        %1565 = vmatprep.subr.mxu0 0.0
        %1566 = vmatpush1.msra.mxu0 0.0
        %1567 = vmatprep.subr.mxu0 0.0
        %1568 = vmatpush1.msra.mxu0 0.0
        %1569 = vmatprep.subr.mxu0 0.0
        %1570 = vmatpush1.msra.mxu0 0.0
        %1571 = vmatprep.subr.mxu0 0.0
        %1572 = vmatpush1.msra.mxu0 0.0
        %1573 = vmatprep.subr.mxu0 0.0
        %1574 = vmatpush1.msra.mxu0 0.0
        %1575 = vmatprep.subr.mxu0 0.0
        %1576 = vmatpush1.msra.mxu0 0.0
        %1577 = vmatprep.subr.mxu0 0.0
        %1578 = vmatpush1.msra.mxu0 0.0
        %1579 = vmatprep.subr.mxu0 0.0
        %1580 = vmatpush1.msra.mxu0 0.0
        %1581 = vmatprep.subr.mxu0 0.0
        %1582 = vmatpush1.msra.mxu0 0.0
        %1583 = vmatprep.subr.mxu0 0.0
        %1584 = vmatpush1.msra.mxu0 0.0
        %1585 = vmatprep.subr.mxu0 0.0
        %1586 = vmatpush1.msra.mxu0 0.0
        %1587 = vmatprep.mubr.f32.mxu0 0.0
        %1588 = vmatmul.mubr.f32.gmra.mrb[0].mxu0 %v1509
        %v1589 = vpop.f32.mrb[0].mxu0
        %v1590 = vadd.f32 0.0, %v1589
        %v1591 = vpop.f32.mrb[0].mxu0
        %1592 = vmatprep.mubr.f32.mxu0 0.0
        %1593 = vmatmul.mubr.f32.gmra.mrb[0].mxu0 %v1512
        %v1594 = vpop.f32.mrb[0].mxu0
        %v1595 = vadd.f32 0.0, %v1594
        %v1596 = vpop.f32.mrb[0].mxu0
        %1597 = vmatprep.mubr.f32.mxu0 0.0
        %1598 = vmatmul.mubr.f32.gmra.mrb[0].mxu0 %v1515
        %v1599 = vpop.f32.mrb[0].mxu0
        %v1600 = vadd.f32 0.0, %v1599
        %v1601 = vpop.f32.mrb[0].mxu0
        %1602 = vmatprep.mubr.f32.mxu0 0.0
        %1603 = vmatmul.mubr.f32.gmra.mrb[0].mxu0 %v1518
        %v1604 = vpop.f32.mrb[0].mxu0
        %v1605 = vadd.f32 0.0, %v1604
        %v1606 = vpop.f32.mrb[0].mxu0
        %1607 = vmatprep.mubr.f32.mxu0 0.0
        %1608 = vmatmul.mubr.f32.gmra.mrb[0].mxu0 %v1521
        %v1609 = vpop.f32.mrb[0].mxu0
        %v1610 = vadd.f32 0.0, %v1609
        %v1611 = vpop.f32.mrb[0].mxu0
        %1612 = vdwg.mxu0
        %1618 = vrot.lane.b32.xlu0 %v1590, 8
        %v1619 = vpop.permute.xlu0 %1618
        %1620 = vrot.lane.b32.xlu0 %v1595, 8
        %v1621 = vpop.permute.xlu0 %1620
        %1622 = vrot.lane.b32.xlu0 %v1600, 8
        %v1623 = vpop.permute.xlu0 %1622
        %1624 = vrot.lane.b32.xlu0 %v1605, 8
        %v1625 = vpop.permute.xlu0 %1624
        %1626 = vrot.lane.b32.xlu0 %v1610, 8
        %v1627 = vpop.permute.xlu0 %1626
        %vm1633 = vcmask 130112
        %1634 = vst.msk [vmem:[#allocation4] sm:$0xff] %vm1633, %v1619
        %1635 = vst.msk [vmem:[#allocation4 + $0x8] sm:$0xff] %vm1633, %v1621
        %1636 = vst.msk [vmem:[#allocation4 + $0x10] sm:$0xff] %vm1633, %v1623
        %1637 = vst.msk [vmem:[#allocation4 + $0x18] sm:$0xff] %vm1633, %v1625
        %1638 = vst.msk [vmem:[#allocation4 + $0x20] sm:$0xff] %vm1633, %v1627
        %1639 = vrot.lane.b32.xlu0 %v980, 112
        %v1640 = vpop.permute.xlu0 %1639
        %1641 = vrot.lane.b32.xlu0 %v983, 112
        %v1642 = vpop.permute.xlu0 %1641
        %1643 = vrot.lane.b32.xlu0 %v988, 112
        %v1644 = vpop.permute.xlu0 %1643
        %1645 = vrot.lane.b32.xlu0 %v991, 112
        %v1646 = vpop.permute.xlu0 %1645
        %1647 = vrot.lane.b32.xlu0 %v996, 112
        %v1648 = vpop.permute.xlu0 %1647
        %1649 = vrot.lane.b32.xlu0 %v980, 80
        %v1650 = vpop.permute.xlu0 %1649
        %1651 = vrot.lane.b32.xlu0 %v983, 80
        %v1652 = vpop.permute.xlu0 %1651
        %1653 = vrot.lane.b32.xlu0 %v988, 80
        %v1654 = vpop.permute.xlu0 %1653
        %1655 = vrot.lane.b32.xlu0 %v991, 80
        %v1656 = vpop.permute.xlu0 %1655
        %1657 = vrot.lane.b32.xlu0 %v996, 80
        %v1658 = vpop.permute.xlu0 %1657
        %v1659 = vsel %vm1016, %v1640, 0
        %v1661 = vsel %vm1016, %v1642, 0
        %v1663 = vsel %vm1016, %v1644, 0
        %v1665 = vsel %vm1016, %v1646, 0
        %v1667 = vsel %vm1016, %v1648, 0
        %v1669 = vsel %vm1016, %v1650, 0
        %v1671 = vsel %vm1016, %v1652, 0
        %v1673 = vsel %vm1016, %v1654, 0
        %v1675 = vsel %vm1016, %v1656, 0
        %v1677 = vsel %vm1016, %v1658, 0
        %1679 = vmatprep.subr.mxu0 0.0
        %1680 = vmatpush1.xpose.msra.mxu0 %v1669
        %1681 = vmatprep.subr.mxu0 0.0
        %1682 = vmatpush1.xpose.msra.mxu0 %v1671
        %1683 = vmatprep.subr.mxu0 0.0
        %1684 = vmatpush1.xpose.msra.mxu0 %v1673
        %1685 = vmatprep.subr.mxu0 0.0
        %1686 = vmatpush1.xpose.msra.mxu0 %v1675
        %1687 = vmatprep.subr.mxu0 0.0
        %1688 = vmatpush1.xpose.msra.mxu0 %v1677
        %1689 = vmatprep.subr.mxu0 0.0
        %1690 = vmatpush1.xpose.msra.mxu0 0.0
        %1691 = vmatprep.subr.mxu0 0.0
        %1692 = vmatpush1.xpose.msra.mxu0 0.0
        %1693 = vmatprep.subr.mxu0 0.0
        %1694 = vmatpush1.xpose.msra.mxu0 0.0
        %1695 = vmatprep.subr.mxu0 0.0
        %1696 = vmatpush1.xpose.msra.mxu0 0.0
        %1697 = vmatprep.subr.mxu0 0.0
        %1698 = vmatpush1.xpose.msra.mxu0 0.0
        %1699 = vmatprep.subr.mxu0 0.0
        %1700 = vmatpush1.xpose.msra.mxu0 0.0
        %1701 = vmatprep.subr.mxu0 0.0
        %1702 = vmatpush1.xpose.msra.mxu0 0.0
        %1703 = vmatprep.subr.mxu0 0.0
        %1704 = vmatpush1.xpose.msra.mxu0 0.0
        %1705 = vmatprep.subr.mxu0 0.0
        %1706 = vmatpush1.xpose.msra.mxu0 0.0
        %1707 = vmatprep.subr.mxu0 0.0
        %1708 = vmatpush1.xpose.msra.mxu0 0.0
        %1709 = vmatprep.subr.mxu0 0.0
        %1710 = vmatpush1.xpose.msra.mxu0 0.0
        %1711 = vmatprep.subr.mxu0 0.0
        %1712 = vmatpush1.xpose.msra.mxu0 0.0
        %1713 = vmatprep.subr.mxu0 0.0
        %1714 = vmatpush1.xpose.msra.mxu0 0.0
        %1715 = vmatprep.subr.mxu0 0.0
        %1716 = vmatpush1.xpose.msra.mxu0 0.0
        %1717 = vmatprep.subr.mxu0 0.0
        %1718 = vmatpush1.xpose.msra.mxu0 0.0
        %1719 = vmatprep.subr.mxu0 0.0
        %1720 = vmatpush1.xpose.msra.mxu0 0.0
        %1721 = vmatprep.subr.mxu0 0.0
        %1722 = vmatpush1.xpose.msra.mxu0 0.0
        %1723 = vmatprep.subr.mxu0 0.0
        %1724 = vmatpush1.xpose.msra.mxu0 0.0
        %1725 = vmatprep.subr.mxu0 0.0
        %1726 = vmatpush1.xpose.msra.mxu0 0.0
        %1727 = vmatprep.subr.mxu0 0.0
        %1728 = vmatpush1.xpose.msra.mxu0 0.0
        %1729 = vmatprep.subr.mxu0 0.0
        %1730 = vmatpush1.xpose.msra.mxu0 0.0
        %1731 = vmatprep.subr.mxu0 0.0
        %1732 = vmatpush1.xpose.msra.mxu0 0.0
        %1733 = vmatprep.subr.mxu0 0.0
        %1734 = vmatpush1.xpose.msra.mxu0 0.0
        %1735 = vmatprep.subr.mxu0 0.0
        %1736 = vmatpush1.xpose.msra.mxu0 0.0
        %1737 = vmatprep.subr.mxu0 0.0
        %1738 = vmatpush1.xpose.msra.mxu0 0.0
        %1739 = vmatprep.subr.mxu0 0.0
        %1740 = vmatpush1.xpose.msra.mxu0 0.0
        %1741 = vmatprep.subr.mxu0 0.0
        %1742 = vmatpush1.xpose.msra.mxu0 0.0
        %1743 = vmatprep.mubr.f32.mxu0 0.0
        %1744 = vmatmul.mubr.f32.gmra.mrb[0].mxu0 %v1659
        %v1745 = vpop.f32.mrb[0].mxu0
        %v1746 = vadd.f32 %v814, %v1745
        %v1747 = vpop.f32.mrb[0].mxu0
        %1748 = vmatprep.mubr.f32.mxu0 0.0
        %1749 = vmatmul.mubr.f32.gmra.mrb[0].mxu0 %v1661
        %v1750 = vpop.f32.mrb[0].mxu0
        %v1751 = vadd.f32 %v815, %v1750
        %v1752 = vpop.f32.mrb[0].mxu0
        %1753 = vmatprep.mubr.f32.mxu0 0.0
        %1754 = vmatmul.mubr.f32.gmra.mrb[0].mxu0 %v1663
        %v1755 = vpop.f32.mrb[0].mxu0
        %v1756 = vadd.f32 %v816, %v1755
        %v1757 = vpop.f32.mrb[0].mxu0
        %1758 = vmatprep.mubr.f32.mxu0 0.0
        %1759 = vmatmul.mubr.f32.gmra.mrb[0].mxu0 %v1665
        %v1760 = vpop.f32.mrb[0].mxu0
        %v1761 = vadd.f32 %v817, %v1760
        %v1762 = vpop.f32.mrb[0].mxu0
        %1763 = vmatprep.mubr.f32.mxu0 0.0
        %1764 = vmatmul.mubr.f32.gmra.mrb[0].mxu0 %v1667
        %v1765 = vpop.f32.mrb[0].mxu0
        %v1766 = vadd.f32 %v818, %v1765
        %v1767 = vpop.f32.mrb[0].mxu0
        %1768 = vdwg.mxu0
        %v1769 = vsel %vm1127, %v1746, -inf
        %1770 = vmax.xlane.f32.xlu0 %v1769
        %v1771 = vpop.xlane.xlu0 %1770
        %v1772 = vsel %vm1127, %v1751, -inf
        %1773 = vmax.xlane.f32.xlu0 %v1772
        %v1774 = vpop.xlane.xlu0 %1773
        %v1775 = vsel %vm1127, %v1756, -inf
        %1776 = vmax.xlane.f32.xlu0 %v1775
        %v1777 = vpop.xlane.xlu0 %1776
        %v1778 = vsel %vm1127, %v1761, -inf
        %1779 = vmax.xlane.f32.xlu0 %v1778
        %v1780 = vpop.xlane.xlu0 %1779
        %v1781 = vsel %vm1127, %v1766, -inf
        %1782 = vmax.xlane.f32.xlu0 %v1781
        %v1783 = vpop.xlane.xlu0 %1782
        %v1784 = vsub.f32 %v1746, %v1771
        %v1785 = vsub.f32 %v1751, %v1774
        %v1786 = vsub.f32 %v1756, %v1777
        %v1787 = vsub.f32 %v1761, %v1780
        %v1788 = vsub.f32 %v1766, %v1783
        %v1789 = vmul.f32 %v1784, 1.442695
        %v1790 = vpow.pop %v1789
        %v1791 = vmul.f32 %v1785, 1.442695
        %v1792 = vpow.pop %v1791
        %v1793 = vmul.f32 %v1786, 1.442695
        %v1794 = vpow.pop %v1793
        %v1795 = vmul.f32 %v1787, 1.442695
        %v1796 = vpow.pop %v1795
        %v1797 = vmul.f32 %v1788, 1.442695
        %v1798 = vpow.pop %v1797
        %v1799 = vsel %vm1127, %v1790, 0.0
        %1800 = vadd.xlane.f32.xlu0 %v1799
        %v1801 = vpop.xlane.xlu0 %1800
        %v1802 = vsel %vm1127, %v1792, 0.0
        %1803 = vadd.xlane.f32.xlu0 %v1802
        %v1804 = vpop.xlane.xlu0 %1803
        %v1805 = vsel %vm1127, %v1794, 0.0
        %1806 = vadd.xlane.f32.xlu0 %v1805
        %v1807 = vpop.xlane.xlu0 %1806
        %v1808 = vsel %vm1127, %v1796, 0.0
        %1809 = vadd.xlane.f32.xlu0 %v1808
        %v1810 = vpop.xlane.xlu0 %1809
        %v1811 = vsel %vm1127, %v1798, 0.0
        %1812 = vadd.xlane.f32.xlu0 %v1811
        %v1813 = vpop.xlane.xlu0 %1812
        %v1814 = vrcp.pop %v1801
        %v1815 = vrcp.pop %v1804
        %v1816 = vrcp.pop %v1807
        %v1817 = vrcp.pop %v1810
        %v1818 = vrcp.pop %v1813
        %v1819 = vmul.f32 %v1790, %v1814
        %v1820 = vmul.f32 %v1792, %v1815
        %v1821 = vmul.f32 %v1794, %v1816
        %v1822 = vmul.f32 %v1796, %v1817
        %v1823 = vmul.f32 %v1798, %v1818
        %1824 = vrot.lane.b32.xlu0 %v980, 48
        %v1825 = vpop.permute.xlu0 %1824
        %1826 = vrot.lane.b32.xlu0 %v983, 48
        %v1827 = vpop.permute.xlu0 %1826
        %1828 = vrot.lane.b32.xlu0 %v988, 48
        %v1829 = vpop.permute.xlu0 %1828
        %1830 = vrot.lane.b32.xlu0 %v991, 48
        %v1831 = vpop.permute.xlu0 %1830
        %1832 = vrot.lane.b32.xlu0 %v996, 48
        %v1833 = vpop.permute.xlu0 %1832
        %v1840 = vsel %vm1127, %v1819, 0
        %v1843 = vsel %vm1127, %v1820, 0
        %v1846 = vsel %vm1127, %v1821, 0
        %v1849 = vsel %vm1127, %v1822, 0
        %v1852 = vsel %vm1127, %v1823, 0
        %1854 = vmatprep.subr.mxu0 0.0
        %1855 = vmatpush1.msra.mxu0 %v1825
        %1856 = vmatprep.subr.mxu0 0.0
        %1857 = vmatpush1.msra.mxu0 %v1827
        %1858 = vmatprep.subr.mxu0 0.0
        %1859 = vmatpush1.msra.mxu0 %v1829
        %1860 = vmatprep.subr.mxu0 0.0
        %1861 = vmatpush1.msra.mxu0 %v1831
        %1862 = vmatprep.subr.mxu0 0.0
        %1863 = vmatpush1.msra.mxu0 %v1833
        %1864 = vmatprep.subr.mxu0 0.0
        %1865 = vmatpush1.msra.mxu0 0.0
        %1866 = vmatprep.subr.mxu0 0.0
        %1867 = vmatpush1.msra.mxu0 0.0
        %1868 = vmatprep.subr.mxu0 0.0
        %1869 = vmatpush1.msra.mxu0 0.0
        %1870 = vmatprep.subr.mxu0 0.0
        %1871 = vmatpush1.msra.mxu0 0.0
        %1872 = vmatprep.subr.mxu0 0.0
        %1873 = vmatpush1.msra.mxu0 0.0
        %1874 = vmatprep.subr.mxu0 0.0
        %1875 = vmatpush1.msra.mxu0 0.0
        %1876 = vmatprep.subr.mxu0 0.0
        %1877 = vmatpush1.msra.mxu0 0.0
        %1878 = vmatprep.subr.mxu0 0.0
        %1879 = vmatpush1.msra.mxu0 0.0
        %1880 = vmatprep.subr.mxu0 0.0
        %1881 = vmatpush1.msra.mxu0 0.0
        %1882 = vmatprep.subr.mxu0 0.0
        %1883 = vmatpush1.msra.mxu0 0.0
        %1884 = vmatprep.subr.mxu0 0.0
        %1885 = vmatpush1.msra.mxu0 0.0
        %1886 = vmatprep.subr.mxu0 0.0
        %1887 = vmatpush1.msra.mxu0 0.0
        %1888 = vmatprep.subr.mxu0 0.0
        %1889 = vmatpush1.msra.mxu0 0.0
        %1890 = vmatprep.subr.mxu0 0.0
        %1891 = vmatpush1.msra.mxu0 0.0
        %1892 = vmatprep.subr.mxu0 0.0
        %1893 = vmatpush1.msra.mxu0 0.0
        %1894 = vmatprep.subr.mxu0 0.0
        %1895 = vmatpush1.msra.mxu0 0.0
        %1896 = vmatprep.subr.mxu0 0.0
        %1897 = vmatpush1.msra.mxu0 0.0
        %1898 = vmatprep.subr.mxu0 0.0
        %1899 = vmatpush1.msra.mxu0 0.0
        %1900 = vmatprep.subr.mxu0 0.0
        %1901 = vmatpush1.msra.mxu0 0.0
        %1902 = vmatprep.subr.mxu0 0.0
        %1903 = vmatpush1.msra.mxu0 0.0
        %1904 = vmatprep.subr.mxu0 0.0
        %1905 = vmatpush1.msra.mxu0 0.0
        %1906 = vmatprep.subr.mxu0 0.0
        %1907 = vmatpush1.msra.mxu0 0.0
        %1908 = vmatprep.subr.mxu0 0.0
        %1909 = vmatpush1.msra.mxu0 0.0
        %1910 = vmatprep.subr.mxu0 0.0
        %1911 = vmatpush1.msra.mxu0 0.0
        %1912 = vmatprep.subr.mxu0 0.0
        %1913 = vmatpush1.msra.mxu0 0.0
        %1914 = vmatprep.subr.mxu0 0.0
        %1915 = vmatpush1.msra.mxu0 0.0
        %1916 = vmatprep.subr.mxu0 0.0
        %1917 = vmatpush1.msra.mxu0 0.0
        %1918 = vmatprep.mubr.f32.mxu0 0.0
        %1919 = vmatmul.mubr.f32.gmra.mrb[0].mxu0 %v1840
        %v1920 = vpop.f32.mrb[0].mxu0
        %v1921 = vadd.f32 0.0, %v1920
        %v1922 = vpop.f32.mrb[0].mxu0
        %1923 = vmatprep.mubr.f32.mxu0 0.0
        %1924 = vmatmul.mubr.f32.gmra.mrb[0].mxu0 %v1843
        %v1925 = vpop.f32.mrb[0].mxu0
        %v1926 = vadd.f32 0.0, %v1925
        %v1927 = vpop.f32.mrb[0].mxu0
        %1928 = vmatprep.mubr.f32.mxu0 0.0
        %1929 = vmatmul.mubr.f32.gmra.mrb[0].mxu0 %v1846
        %v1930 = vpop.f32.mrb[0].mxu0
        %v1931 = vadd.f32 0.0, %v1930
        %v1932 = vpop.f32.mrb[0].mxu0
        %1933 = vmatprep.mubr.f32.mxu0 0.0
        %1934 = vmatmul.mubr.f32.gmra.mrb[0].mxu0 %v1849
        %v1935 = vpop.f32.mrb[0].mxu0
        %v1936 = vadd.f32 0.0, %v1935
        %v1937 = vpop.f32.mrb[0].mxu0
        %1938 = vmatprep.mubr.f32.mxu0 0.0
        %1939 = vmatmul.mubr.f32.gmra.mrb[0].mxu0 %v1852
        %v1940 = vpop.f32.mrb[0].mxu0
        %v1941 = vadd.f32 0.0, %v1940
        %v1942 = vpop.f32.mrb[0].mxu0
        %1943 = vdwg.mxu0
        %1949 = vrot.lane.b32.xlu0 %v1921, 16
        %v1950 = vpop.permute.xlu0 %1949
        %1951 = vrot.lane.b32.xlu0 %v1926, 16
        %v1952 = vpop.permute.xlu0 %1951
        %1953 = vrot.lane.b32.xlu0 %v1931, 16
        %v1954 = vpop.permute.xlu0 %1953
        %1955 = vrot.lane.b32.xlu0 %v1936, 16
        %v1956 = vpop.permute.xlu0 %1955
        %1957 = vrot.lane.b32.xlu0 %v1941, 16
        %v1958 = vpop.permute.xlu0 %1957
        %vm1964 = vcmask 195712
        %1965 = vst.msk [vmem:[#allocation4] sm:$0xff] %vm1964, %v1950
        %1966 = vst.msk [vmem:[#allocation4 + $0x8] sm:$0xff] %vm1964, %v1952
        %1967 = vst.msk [vmem:[#allocation4 + $0x10] sm:$0xff] %vm1964, %v1954
        %1968 = vst.msk [vmem:[#allocation4 + $0x18] sm:$0xff] %vm1964, %v1956
        %1969 = vst.msk [vmem:[#allocation4 + $0x20] sm:$0xff] %vm1964, %v1958
        %1970 = vrot.lane.b32.xlu0 %v980, 104
        %v1971 = vpop.permute.xlu0 %1970
        %1972 = vrot.lane.b32.xlu0 %v983, 104
        %v1973 = vpop.permute.xlu0 %1972
        %1974 = vrot.lane.b32.xlu0 %v988, 104
        %v1975 = vpop.permute.xlu0 %1974
        %1976 = vrot.lane.b32.xlu0 %v991, 104
        %v1977 = vpop.permute.xlu0 %1976
        %1978 = vrot.lane.b32.xlu0 %v996, 104
        %v1979 = vpop.permute.xlu0 %1978
        %1980 = vrot.lane.b32.xlu0 %v980, 72
        %v1981 = vpop.permute.xlu0 %1980
        %1982 = vrot.lane.b32.xlu0 %v983, 72
        %v1983 = vpop.permute.xlu0 %1982
        %1984 = vrot.lane.b32.xlu0 %v988, 72
        %v1985 = vpop.permute.xlu0 %1984
        %1986 = vrot.lane.b32.xlu0 %v991, 72
        %v1987 = vpop.permute.xlu0 %1986
        %1988 = vrot.lane.b32.xlu0 %v996, 72
        %v1989 = vpop.permute.xlu0 %1988
        %v1990 = vsel %vm1016, %v1971, 0
        %v1992 = vsel %vm1016, %v1973, 0
        %v1994 = vsel %vm1016, %v1975, 0
        %v1996 = vsel %vm1016, %v1977, 0
        %v1998 = vsel %vm1016, %v1979, 0
        %v2000 = vsel %vm1016, %v1981, 0
        %v2002 = vsel %vm1016, %v1983, 0
        %v2004 = vsel %vm1016, %v1985, 0
        %v2006 = vsel %vm1016, %v1987, 0
        %v2008 = vsel %vm1016, %v1989, 0
        %2010 = vmatprep.subr.mxu0 0.0
        %2011 = vmatpush1.xpose.msra.mxu0 %v2000
        %2012 = vmatprep.subr.mxu0 0.0
        %2013 = vmatpush1.xpose.msra.mxu0 %v2002
        %2014 = vmatprep.subr.mxu0 0.0
        %2015 = vmatpush1.xpose.msra.mxu0 %v2004
        %2016 = vmatprep.subr.mxu0 0.0
        %2017 = vmatpush1.xpose.msra.mxu0 %v2006
        %2018 = vmatprep.subr.mxu0 0.0
        %2019 = vmatpush1.xpose.msra.mxu0 %v2008
        %2020 = vmatprep.subr.mxu0 0.0
        %2021 = vmatpush1.xpose.msra.mxu0 0.0
        %2022 = vmatprep.subr.mxu0 0.0
        %2023 = vmatpush1.xpose.msra.mxu0 0.0
        %2024 = vmatprep.subr.mxu0 0.0
        %2025 = vmatpush1.xpose.msra.mxu0 0.0
        %2026 = vmatprep.subr.mxu0 0.0
        %2027 = vmatpush1.xpose.msra.mxu0 0.0
        %2028 = vmatprep.subr.mxu0 0.0
        %2029 = vmatpush1.xpose.msra.mxu0 0.0
        %2030 = vmatprep.subr.mxu0 0.0
        %2031 = vmatpush1.xpose.msra.mxu0 0.0
        %2032 = vmatprep.subr.mxu0 0.0
        %2033 = vmatpush1.xpose.msra.mxu0 0.0
        %2034 = vmatprep.subr.mxu0 0.0
        %2035 = vmatpush1.xpose.msra.mxu0 0.0
        %2036 = vmatprep.subr.mxu0 0.0
        %2037 = vmatpush1.xpose.msra.mxu0 0.0
        %2038 = vmatprep.subr.mxu0 0.0
        %2039 = vmatpush1.xpose.msra.mxu0 0.0
        %2040 = vmatprep.subr.mxu0 0.0
        %2041 = vmatpush1.xpose.msra.mxu0 0.0
        %2042 = vmatprep.subr.mxu0 0.0
        %2043 = vmatpush1.xpose.msra.mxu0 0.0
        %2044 = vmatprep.subr.mxu0 0.0
        %2045 = vmatpush1.xpose.msra.mxu0 0.0
        %2046 = vmatprep.subr.mxu0 0.0
        %2047 = vmatpush1.xpose.msra.mxu0 0.0
        %2048 = vmatprep.subr.mxu0 0.0
        %2049 = vmatpush1.xpose.msra.mxu0 0.0
        %2050 = vmatprep.subr.mxu0 0.0
        %2051 = vmatpush1.xpose.msra.mxu0 0.0
        %2052 = vmatprep.subr.mxu0 0.0
        %2053 = vmatpush1.xpose.msra.mxu0 0.0
        %2054 = vmatprep.subr.mxu0 0.0
        %2055 = vmatpush1.xpose.msra.mxu0 0.0
        %2056 = vmatprep.subr.mxu0 0.0
        %2057 = vmatpush1.xpose.msra.mxu0 0.0
        %2058 = vmatprep.subr.mxu0 0.0
        %2059 = vmatpush1.xpose.msra.mxu0 0.0
        %2060 = vmatprep.subr.mxu0 0.0
        %2061 = vmatpush1.xpose.msra.mxu0 0.0
        %2062 = vmatprep.subr.mxu0 0.0
        %2063 = vmatpush1.xpose.msra.mxu0 0.0
        %2064 = vmatprep.subr.mxu0 0.0
        %2065 = vmatpush1.xpose.msra.mxu0 0.0
        %2066 = vmatprep.subr.mxu0 0.0
        %2067 = vmatpush1.xpose.msra.mxu0 0.0
        %2068 = vmatprep.subr.mxu0 0.0
        %2069 = vmatpush1.xpose.msra.mxu0 0.0
        %2070 = vmatprep.subr.mxu0 0.0
        %2071 = vmatpush1.xpose.msra.mxu0 0.0
        %2072 = vmatprep.subr.mxu0 0.0
        %2073 = vmatpush1.xpose.msra.mxu0 0.0
        %2074 = vmatprep.mubr.f32.mxu0 0.0
        %2075 = vmatmul.mubr.f32.gmra.mrb[0].mxu0 %v1990
        %v2076 = vpop.f32.mrb[0].mxu0
        %v2077 = vadd.f32 %v814, %v2076
        %v2078 = vpop.f32.mrb[0].mxu0
        %2079 = vmatprep.mubr.f32.mxu0 0.0
        %2080 = vmatmul.mubr.f32.gmra.mrb[0].mxu0 %v1992
        %v2081 = vpop.f32.mrb[0].mxu0
        %v2082 = vadd.f32 %v815, %v2081
        %v2083 = vpop.f32.mrb[0].mxu0
        %2084 = vmatprep.mubr.f32.mxu0 0.0
        %2085 = vmatmul.mubr.f32.gmra.mrb[0].mxu0 %v1994
        %v2086 = vpop.f32.mrb[0].mxu0
        %v2087 = vadd.f32 %v816, %v2086
        %v2088 = vpop.f32.mrb[0].mxu0
        %2089 = vmatprep.mubr.f32.mxu0 0.0
        %2090 = vmatmul.mubr.f32.gmra.mrb[0].mxu0 %v1996
        %v2091 = vpop.f32.mrb[0].mxu0
        %v2092 = vadd.f32 %v817, %v2091
        %v2093 = vpop.f32.mrb[0].mxu0
        %2094 = vmatprep.mubr.f32.mxu0 0.0
        %2095 = vmatmul.mubr.f32.gmra.mrb[0].mxu0 %v1998
        %v2096 = vpop.f32.mrb[0].mxu0
        %v2097 = vadd.f32 %v818, %v2096
        %v2098 = vpop.f32.mrb[0].mxu0
        %2099 = vdwg.mxu0
        %v2100 = vsel %vm1127, %v2077, -inf
        %2101 = vmax.xlane.f32.xlu0 %v2100
        %v2102 = vpop.xlane.xlu0 %2101
        %v2103 = vsel %vm1127, %v2082, -inf
        %2104 = vmax.xlane.f32.xlu0 %v2103
        %v2105 = vpop.xlane.xlu0 %2104
        %v2106 = vsel %vm1127, %v2087, -inf
        %2107 = vmax.xlane.f32.xlu0 %v2106
        %v2108 = vpop.xlane.xlu0 %2107
        %v2109 = vsel %vm1127, %v2092, -inf
        %2110 = vmax.xlane.f32.xlu0 %v2109
        %v2111 = vpop.xlane.xlu0 %2110
        %v2112 = vsel %vm1127, %v2097, -inf
        %2113 = vmax.xlane.f32.xlu0 %v2112
        %v2114 = vpop.xlane.xlu0 %2113
        %v2115 = vsub.f32 %v2077, %v2102
        %v2116 = vsub.f32 %v2082, %v2105
        %v2117 = vsub.f32 %v2087, %v2108
        %v2118 = vsub.f32 %v2092, %v2111
        %v2119 = vsub.f32 %v2097, %v2114
        %v2120 = vmul.f32 %v2115, 1.442695
        %v2121 = vpow.pop %v2120
        %v2122 = vmul.f32 %v2116, 1.442695
        %v2123 = vpow.pop %v2122
        %v2124 = vmul.f32 %v2117, 1.442695
        %v2125 = vpow.pop %v2124
        %v2126 = vmul.f32 %v2118, 1.442695
        %v2127 = vpow.pop %v2126
        %v2128 = vmul.f32 %v2119, 1.442695
        %v2129 = vpow.pop %v2128
        %v2130 = vsel %vm1127, %v2121, 0.0
        %2131 = vadd.xlane.f32.xlu0 %v2130
        %v2132 = vpop.xlane.xlu0 %2131
        %v2133 = vsel %vm1127, %v2123, 0.0
        %2134 = vadd.xlane.f32.xlu0 %v2133
        %v2135 = vpop.xlane.xlu0 %2134
        %v2136 = vsel %vm1127, %v2125, 0.0
        %2137 = vadd.xlane.f32.xlu0 %v2136
        %v2138 = vpop.xlane.xlu0 %2137
        %v2139 = vsel %vm1127, %v2127, 0.0
        %2140 = vadd.xlane.f32.xlu0 %v2139
        %v2141 = vpop.xlane.xlu0 %2140
        %v2142 = vsel %vm1127, %v2129, 0.0
        %2143 = vadd.xlane.f32.xlu0 %v2142
        %v2144 = vpop.xlane.xlu0 %2143
        %v2145 = vrcp.pop %v2132
        %v2146 = vrcp.pop %v2135
        %v2147 = vrcp.pop %v2138
        %v2148 = vrcp.pop %v2141
        %v2149 = vrcp.pop %v2144
        %v2150 = vmul.f32 %v2121, %v2145
        %v2151 = vmul.f32 %v2123, %v2146
        %v2152 = vmul.f32 %v2125, %v2147
        %v2153 = vmul.f32 %v2127, %v2148
        %v2154 = vmul.f32 %v2129, %v2149
        %2155 = vrot.lane.b32.xlu0 %v980, 40
        %v2156 = vpop.permute.xlu0 %2155
        %2157 = vrot.lane.b32.xlu0 %v983, 40
        %v2158 = vpop.permute.xlu0 %2157
        %2159 = vrot.lane.b32.xlu0 %v988, 40
        %v2160 = vpop.permute.xlu0 %2159
        %2161 = vrot.lane.b32.xlu0 %v991, 40
        %v2162 = vpop.permute.xlu0 %2161
        %2163 = vrot.lane.b32.xlu0 %v996, 40
        %v2164 = vpop.permute.xlu0 %2163
        %v2171 = vsel %vm1127, %v2150, 0
        %v2174 = vsel %vm1127, %v2151, 0
        %v2177 = vsel %vm1127, %v2152, 0
        %v2180 = vsel %vm1127, %v2153, 0
        %v2183 = vsel %vm1127, %v2154, 0
        %2185 = vmatprep.subr.mxu0 0.0
        %2186 = vmatpush1.msra.mxu0 %v2156
        %2187 = vmatprep.subr.mxu0 0.0
        %2188 = vmatpush1.msra.mxu0 %v2158
        %2189 = vmatprep.subr.mxu0 0.0
        %2190 = vmatpush1.msra.mxu0 %v2160
        %2191 = vmatprep.subr.mxu0 0.0
        %2192 = vmatpush1.msra.mxu0 %v2162
        %2193 = vmatprep.subr.mxu0 0.0
        %2194 = vmatpush1.msra.mxu0 %v2164
        %2195 = vmatprep.subr.mxu0 0.0
        %2196 = vmatpush1.msra.mxu0 0.0
        %2197 = vmatprep.subr.mxu0 0.0
        %2198 = vmatpush1.msra.mxu0 0.0
        %2199 = vmatprep.subr.mxu0 0.0
        %2200 = vmatpush1.msra.mxu0 0.0
        %2201 = vmatprep.subr.mxu0 0.0
        %2202 = vmatpush1.msra.mxu0 0.0
        %2203 = vmatprep.subr.mxu0 0.0
        %2204 = vmatpush1.msra.mxu0 0.0
        %2205 = vmatprep.subr.mxu0 0.0
        %2206 = vmatpush1.msra.mxu0 0.0
        %2207 = vmatprep.subr.mxu0 0.0
        %2208 = vmatpush1.msra.mxu0 0.0
        %2209 = vmatprep.subr.mxu0 0.0
        %2210 = vmatpush1.msra.mxu0 0.0
        %2211 = vmatprep.subr.mxu0 0.0
        %2212 = vmatpush1.msra.mxu0 0.0
        %2213 = vmatprep.subr.mxu0 0.0
        %2214 = vmatpush1.msra.mxu0 0.0
        %2215 = vmatprep.subr.mxu0 0.0
        %2216 = vmatpush1.msra.mxu0 0.0
        %2217 = vmatprep.subr.mxu0 0.0
        %2218 = vmatpush1.msra.mxu0 0.0
        %2219 = vmatprep.subr.mxu0 0.0
        %2220 = vmatpush1.msra.mxu0 0.0
        %2221 = vmatprep.subr.mxu0 0.0
        %2222 = vmatpush1.msra.mxu0 0.0
        %2223 = vmatprep.subr.mxu0 0.0
        %2224 = vmatpush1.msra.mxu0 0.0
        %2225 = vmatprep.subr.mxu0 0.0
        %2226 = vmatpush1.msra.mxu0 0.0
        %2227 = vmatprep.subr.mxu0 0.0
        %2228 = vmatpush1.msra.mxu0 0.0
        %2229 = vmatprep.subr.mxu0 0.0
        %2230 = vmatpush1.msra.mxu0 0.0
        %2231 = vmatprep.subr.mxu0 0.0
        %2232 = vmatpush1.msra.mxu0 0.0
        %2233 = vmatprep.subr.mxu0 0.0
        %2234 = vmatpush1.msra.mxu0 0.0
        %2235 = vmatprep.subr.mxu0 0.0
        %2236 = vmatpush1.msra.mxu0 0.0
        %2237 = vmatprep.subr.mxu0 0.0
        %2238 = vmatpush1.msra.mxu0 0.0
        %2239 = vmatprep.subr.mxu0 0.0
        %2240 = vmatpush1.msra.mxu0 0.0
        %2241 = vmatprep.subr.mxu0 0.0
        %2242 = vmatpush1.msra.mxu0 0.0
        %2243 = vmatprep.subr.mxu0 0.0
        %2244 = vmatpush1.msra.mxu0 0.0
        %2245 = vmatprep.subr.mxu0 0.0
        %2246 = vmatpush1.msra.mxu0 0.0
        %2247 = vmatprep.subr.mxu0 0.0
        %2248 = vmatpush1.msra.mxu0 0.0
        %2249 = vmatprep.mubr.f32.mxu0 0.0
        %2250 = vmatmul.mubr.f32.gmra.mrb[0].mxu0 %v2171
        %v2251 = vpop.f32.mrb[0].mxu0
        %v2252 = vadd.f32 0.0, %v2251
        %v2253 = vpop.f32.mrb[0].mxu0
        %2254 = vmatprep.mubr.f32.mxu0 0.0
        %2255 = vmatmul.mubr.f32.gmra.mrb[0].mxu0 %v2174
        %v2256 = vpop.f32.mrb[0].mxu0
        %v2257 = vadd.f32 0.0, %v2256
        %v2258 = vpop.f32.mrb[0].mxu0
        %2259 = vmatprep.mubr.f32.mxu0 0.0
        %2260 = vmatmul.mubr.f32.gmra.mrb[0].mxu0 %v2177
        %v2261 = vpop.f32.mrb[0].mxu0
        %v2262 = vadd.f32 0.0, %v2261
        %v2263 = vpop.f32.mrb[0].mxu0
        %2264 = vmatprep.mubr.f32.mxu0 0.0
        %2265 = vmatmul.mubr.f32.gmra.mrb[0].mxu0 %v2180
        %v2266 = vpop.f32.mrb[0].mxu0
        %v2267 = vadd.f32 0.0, %v2266
        %v2268 = vpop.f32.mrb[0].mxu0
        %2269 = vmatprep.mubr.f32.mxu0 0.0
        %2270 = vmatmul.mubr.f32.gmra.mrb[0].mxu0 %v2183
        %v2271 = vpop.f32.mrb[0].mxu0
        %v2272 = vadd.f32 0.0, %v2271
        %v2273 = vpop.f32.mrb[0].mxu0
        %2274 = vdwg.mxu0
        %2280 = vrot.lane.b32.xlu0 %v2252, 24
        %v2281 = vpop.permute.xlu0 %2280
        %2282 = vrot.lane.b32.xlu0 %v2257, 24
        %v2283 = vpop.permute.xlu0 %2282
        %2284 = vrot.lane.b32.xlu0 %v2262, 24
        %v2285 = vpop.permute.xlu0 %2284
        %2286 = vrot.lane.b32.xlu0 %v2267, 24
        %v2287 = vpop.permute.xlu0 %2286
        %2288 = vrot.lane.b32.xlu0 %v2272, 24
        %v2289 = vpop.permute.xlu0 %2288
        %vm2295 = vcmask 261312
        %2296 = vst.msk [vmem:[#allocation4] sm:$0xff] %vm2295, %v2281
        %2297 = vst.msk [vmem:[#allocation4 + $0x8] sm:$0xff] %vm2295, %v2283
        %2298 = vst.msk [vmem:[#allocation4 + $0x10] sm:$0xff] %vm2295, %v2285
        %2299 = vst.msk [vmem:[#allocation4 + $0x18] sm:$0xff] %vm2295, %v2287
        %2300 = vst.msk [vmem:[#allocation4 + $0x20] sm:$0xff] %vm2295, %v2289
        %v2301 = vld [vmem:[#allocation4] sm:$0xff]
        %v2302 = vld [vmem:[#allocation4 + $0x8] sm:$0xff]
        %v2303 = vld [vmem:[#allocation4 + $0x10] sm:$0xff]
        %v2304 = vld [vmem:[#allocation4 + $0x18] sm:$0xff]
        %v2305 = vld [vmem:[#allocation4 + $0x20] sm:$0xff]
        %v2306 = vpack.c.bf16 %v2302, %v2301
        %v2307 = vpack.c.bf16 %v2304, %v2303
        %v2308 = vpack.c.bf16 %v2305, %v2305
        %v2309 = vld [vmem:[%s725] sm:$0xf]
        %v2310 = vld [vmem:[%s725 + $0x4] sm:$0xf]
        %v2311 = vld [vmem:[%s725 + $0x8] sm:$0xf]
        %v2312 = vld [vmem:[%s725 + $0xc] sm:$0xf]
        %v2313 = vld [vmem:[%s728] sm:$0x1]
        %v2315 = vlaneseq
        %v2316 = vshrl.u32 %v2315, 7
        %v2317 = vsub.s32 0, %v2316
        %v2318 = vrot.slane %v2313, %v2317
        %v2324 = vunpack.c.l.b16 %v2309
        %v2325 = vunpack.c.l.b16 %v2310
        %v2326 = vunpack.c.l.b16 %v2311
        %v2327 = vunpack.c.l.b16 %v2312
        %v2328 = vpack.c.b16 %v2325, %v2324
        %v2329 = vpack.c.b16 %v2327, %v2326
        %v2333 = vsel %vm821, %v2306, 0
        %v2336 = vsel %vm821, %v2307, 0
        %v2339 = vsel %vm821, %v2308, 0
        %2341 = vmatprep.subr.bf16.mxu0 0
        %2342 = vmatpush1.bf16.msra.mxu0 %v2328
        %2343 = vmatprep.subr.bf16.mxu0 0
        %2344 = vmatpush1.bf16.msra.mxu0 %v2329
        %2345 = vmatprep.subr.bf16.mxu0 0
        %2346 = vmatpush1.bf16.msra.mxu0 0
        %2347 = vmatprep.subr.bf16.mxu0 0
        %2348 = vmatpush1.bf16.msra.mxu0 0
        %2349 = vmatprep.subr.bf16.mxu0 0
        %2350 = vmatpush1.bf16.msra.mxu0 0
        %2351 = vmatprep.subr.bf16.mxu0 0
        %2352 = vmatpush1.bf16.msra.mxu0 0
        %2353 = vmatprep.subr.bf16.mxu0 0
        %2354 = vmatpush1.bf16.msra.mxu0 0
        %2355 = vmatprep.subr.bf16.mxu0 0
        %2356 = vmatpush1.bf16.msra.mxu0 0
        %2357 = vmatprep.subr.bf16.mxu0 0
        %2358 = vmatpush1.bf16.msra.mxu0 0
        %2359 = vmatprep.subr.bf16.mxu0 0
        %2360 = vmatpush1.bf16.msra.mxu0 0
        %2361 = vmatprep.subr.bf16.mxu0 0
        %2362 = vmatpush1.bf16.msra.mxu0 0
        %2363 = vmatprep.subr.bf16.mxu0 0
        %2364 = vmatpush1.bf16.msra.mxu0 0
        %2365 = vmatprep.subr.bf16.mxu0 0
        %2366 = vmatpush1.bf16.msra.mxu0 0
        %2367 = vmatprep.subr.bf16.mxu0 0
        %2368 = vmatpush1.bf16.msra.mxu0 0
        %2369 = vmatprep.subr.bf16.mxu0 0
        %2370 = vmatpush1.bf16.msra.mxu0 0
        %2371 = vmatprep.subr.bf16.mxu0 0
        %2372 = vmatpush1.bf16.msra.mxu0 0
        %2373 = vmatprep.mubr.bf16.mxu0 0
        %2374 = vmatmul.mubr.bf16.gmra.mrb[0].mxu0 %v2333
        %v2375 = vpop.f32.mrb[0].mxu0
        %v2376 = vadd.f32 %v2318, %v2375
        %v2377 = vpop.f32.mrb[0].mxu0
        %v2378 = vpop.f32.mrb[0].mxu0
        %v2379 = vadd.f32 %v2318, %v2378
        %v2380 = vpop.f32.mrb[0].mxu0
        %2381 = vmatprep.mubr.bf16.mxu0 0
        %2382 = vmatmul.mubr.bf16.gmra.mrb[0].mxu0 %v2336
        %v2383 = vpop.f32.mrb[0].mxu0
        %v2384 = vadd.f32 %v2318, %v2383
        %v2385 = vpop.f32.mrb[0].mxu0
        %v2386 = vpop.f32.mrb[0].mxu0
        %v2387 = vadd.f32 %v2318, %v2386
        %v2388 = vpop.f32.mrb[0].mxu0
        %2389 = vmatprep.mubr.bf16.mxu0 0
        %2390 = vmatmul.mubr.bf16.gmra.mrb[0].mxu0 %v2339
        %v2391 = vpop.f32.mrb[0].mxu0
        %v2392 = vadd.f32 %v2318, %v2391
        %v2393 = vpop.f32.mrb[0].mxu0
        %v2394 = vpop.f32.mrb[0].mxu0
        %v2395 = vpop.f32.mrb[0].mxu0
        %2396 = vdwg.mxu0
        %v2397 = vadd.f32 %v809, %v2376
        %v2398 = vadd.f32 %v810, %v2379
        %v2399 = vadd.f32 %v811, %v2384
        %v2400 = vadd.f32 %v812, %v2387
        %v2401 = vadd.f32 %v813, %v2392
        %v2402 = vld [vmem:[%s731] sm:$0x1]
        %v2403 = vld [vmem:[%s734] sm:$0x1]
        %v2404 = vsel %vm821, %v2397, 0.0
        %2405 = vadd.xlane.f32.xlu0 %v2404
        %v2406 = vpop.xlane.xlu0 %2405
        %v2407 = vsel %vm821, %v2398, 0.0
        %2408 = vadd.xlane.f32.xlu0 %v2407
        %v2409 = vpop.xlane.xlu0 %2408
        %v2410 = vsel %vm821, %v2399, 0.0
        %2411 = vadd.xlane.f32.xlu0 %v2410
        %v2412 = vpop.xlane.xlu0 %2411
        %v2413 = vsel %vm821, %v2400, 0.0
        %2414 = vadd.xlane.f32.xlu0 %v2413
        %v2415 = vpop.xlane.xlu0 %2414
        %v2416 = vsel %vm821, %v2401, 0.0
        %2417 = vadd.xlane.f32.xlu0 %v2416
        %v2418 = vpop.xlane.xlu0 %2417
        %v2419 = vmul.f32 %v2406, %v837
        %v2420 = vmul.f32 %v2409, %v837
        %v2421 = vmul.f32 %v2412, %v837
        %v2422 = vmul.f32 %v2415, %v837
        %v2423 = vmul.f32 %v2418, %v837
        %v2424 = vsub.f32 %v2397, %v2419
        %v2425 = vsub.f32 %v2398, %v2420
        %v2426 = vsub.f32 %v2399, %v2421
        %v2427 = vsub.f32 %v2400, %v2422
        %v2428 = vsub.f32 %v2401, %v2423
        %v2429 = vmul.f32 %v2424, %v2424
        %v2430 = vmul.f32 %v2425, %v2425
        %v2431 = vmul.f32 %v2426, %v2426
        %v2432 = vmul.f32 %v2427, %v2427
        %v2433 = vmul.f32 %v2428, %v2428
        %v2434 = vsel %vm821, %v2429, 0.0
        %2435 = vadd.xlane.f32.xlu0 %v2434
        %v2436 = vpop.xlane.xlu0 %2435
        %v2437 = vsel %vm821, %v2430, 0.0
        %2438 = vadd.xlane.f32.xlu0 %v2437
        %v2439 = vpop.xlane.xlu0 %2438
        %v2440 = vsel %vm821, %v2431, 0.0
        %2441 = vadd.xlane.f32.xlu0 %v2440
        %v2442 = vpop.xlane.xlu0 %2441
        %v2443 = vsel %vm821, %v2432, 0.0
        %2444 = vadd.xlane.f32.xlu0 %v2443
        %v2445 = vpop.xlane.xlu0 %2444
        %v2446 = vsel %vm821, %v2433, 0.0
        %2447 = vadd.xlane.f32.xlu0 %v2446
        %v2448 = vpop.xlane.xlu0 %2447
        %v2449 = vmul.f32 %v2436, %v837
        %v2450 = vmul.f32 %v2439, %v837
        %v2451 = vmul.f32 %v2442, %v837
        %v2452 = vmul.f32 %v2445, %v837
        %v2453 = vmul.f32 %v2448, %v837
        %v2454 = vadd.f32 %v2449, 1e-06
        %v2455 = vadd.f32 %v2450, 1e-06
        %v2456 = vadd.f32 %v2451, 1e-06
        %v2457 = vadd.f32 %v2452, 1e-06
        %v2458 = vadd.f32 %v2453, 1e-06
        %v2459 = vrsqrt.pop %v2454
        %v2460 = vrsqrt.pop %v2455
        %v2461 = vrsqrt.pop %v2456
        %v2462 = vrsqrt.pop %v2457
        %v2463 = vrsqrt.pop %v2458
        %v2464 = vmul.f32 %v2424, %v2459
        %v2465 = vmul.f32 %v2425, %v2460
        %v2466 = vmul.f32 %v2426, %v2461
        %v2467 = vmul.f32 %v2427, %v2462
        %v2468 = vmul.f32 %v2428, %v2463
        %v2470 = vlaneseq
        %v2471 = vshrl.u32 %v2470, 7
        %v2472 = vsub.s32 0, %v2471
        %v2473 = vrot.slane %v2402, %v2472
        %v2475 = vmul.f32 %v2464, %v2473
        %v2476 = vmul.f32 %v2465, %v2473
        %v2477 = vmul.f32 %v2466, %v2473
        %v2478 = vmul.f32 %v2467, %v2473
        %v2479 = vmul.f32 %v2468, %v2473
        %v2481 = vlaneseq
        %v2482 = vshrl.u32 %v2481, 7
        %v2483 = vsub.s32 0, %v2482
        %v2484 = vrot.slane %v2403, %v2483
        %v2486 = vadd.f32 %v2475, %v2484
        %v2487 = vadd.f32 %v2476, %v2484
        %v2488 = vadd.f32 %v2477, %v2484
        %v2489 = vadd.f32 %v2478, %v2484
        %v2490 = vadd.f32 %v2479, %v2484
        %v2491 = vpack.c.bf16 %v2487, %v2486
        %v2492 = vpack.c.bf16 %v2489, %v2488
        %v2493 = vpack.c.bf16 %v2490, %v2490
        %v2494 = vld [vmem:[%s739] sm:$0xf]
        %v2495 = vld [vmem:[%s739 + $0x4] sm:$0xf]
        %v2496 = vld [vmem:[%s739 + $0x8] sm:$0xf]
        %v2497 = vld [vmem:[%s739 + $0xc] sm:$0xf]
        %v2498 = vld [vmem:[%s742] sm:$0x1]
        %v2500 = vlaneseq
        %v2501 = vshrl.u32 %v2500, 7
        %v2502 = vsub.s32 0, %v2501
        %v2503 = vrot.slane %v2498, %v2502
        %v2509 = vunpack.c.l.b16 %v2494
        %v2510 = vunpack.c.l.b16 %v2495
        %v2511 = vunpack.c.l.b16 %v2496
        %v2512 = vunpack.c.l.b16 %v2497
        %v2513 = vpack.c.b16 %v2510, %v2509
        %v2514 = vpack.c.b16 %v2512, %v2511
        %v2518 = vsel %vm821, %v2491, 0
        %v2521 = vsel %vm821, %v2492, 0
        %v2524 = vsel %vm821, %v2493, 0
        %2526 = vmatprep.subr.bf16.mxu0 0
        %2527 = vmatpush1.bf16.msra.mxu0 %v2513
        %2528 = vmatprep.subr.bf16.mxu0 0
        %2529 = vmatpush1.bf16.msra.mxu0 %v2514
        %2530 = vmatprep.subr.bf16.mxu0 0
        %2531 = vmatpush1.bf16.msra.mxu0 0
        %2532 = vmatprep.subr.bf16.mxu0 0
        %2533 = vmatpush1.bf16.msra.mxu0 0
        %2534 = vmatprep.subr.bf16.mxu0 0
        %2535 = vmatpush1.bf16.msra.mxu0 0
        %2536 = vmatprep.subr.bf16.mxu0 0
        %2537 = vmatpush1.bf16.msra.mxu0 0
        %2538 = vmatprep.subr.bf16.mxu0 0
        %2539 = vmatpush1.bf16.msra.mxu0 0
        %2540 = vmatprep.subr.bf16.mxu0 0
        %2541 = vmatpush1.bf16.msra.mxu0 0
        %2542 = vmatprep.subr.bf16.mxu0 0
        %2543 = vmatpush1.bf16.msra.mxu0 0
        %2544 = vmatprep.subr.bf16.mxu0 0
        %2545 = vmatpush1.bf16.msra.mxu0 0
        %2546 = vmatprep.subr.bf16.mxu0 0
        %2547 = vmatpush1.bf16.msra.mxu0 0
        %2548 = vmatprep.subr.bf16.mxu0 0
        %2549 = vmatpush1.bf16.msra.mxu0 0
        %2550 = vmatprep.subr.bf16.mxu0 0
        %2551 = vmatpush1.bf16.msra.mxu0 0
        %2552 = vmatprep.subr.bf16.mxu0 0
        %2553 = vmatpush1.bf16.msra.mxu0 0
        %2554 = vmatprep.subr.bf16.mxu0 0
        %2555 = vmatpush1.bf16.msra.mxu0 0
        %2556 = vmatprep.subr.bf16.mxu0 0
        %2557 = vmatpush1.bf16.msra.mxu0 0
        %2558 = vmatprep.mubr.bf16.mxu0 0
        %2559 = vmatmul.mubr.bf16.gmra.mrb[0].mxu0 %v2518
        %v2560 = vpop.f32.mrb[0].mxu0
        %v2561 = vadd.f32 %v2503, %v2560
        %v2562 = vpop.f32.mrb[0].mxu0
        %v2563 = vpop.f32.mrb[0].mxu0
        %v2564 = vadd.f32 %v2503, %v2563
        %v2565 = vpop.f32.mrb[0].mxu0
        %2566 = vmatprep.mubr.bf16.mxu0 0
        %2567 = vmatmul.mubr.bf16.gmra.mrb[0].mxu0 %v2521
        %v2568 = vpop.f32.mrb[0].mxu0
        %v2569 = vadd.f32 %v2503, %v2568
        %v2570 = vpop.f32.mrb[0].mxu0
        %v2571 = vpop.f32.mrb[0].mxu0
        %v2572 = vadd.f32 %v2503, %v2571
        %v2573 = vpop.f32.mrb[0].mxu0
        %2574 = vmatprep.mubr.bf16.mxu0 0
        %2575 = vmatmul.mubr.bf16.gmra.mrb[0].mxu0 %v2524
        %v2576 = vpop.f32.mrb[0].mxu0
        %v2577 = vadd.f32 %v2503, %v2576
        %v2578 = vpop.f32.mrb[0].mxu0
        %v2579 = vpop.f32.mrb[0].mxu0
        %v2580 = vpop.f32.mrb[0].mxu0
        %2581 = vdwg.mxu0
        %v2582 = vmul.f32 %v2561, 0.5
        %v2583 = vmul.f32 %v2564, 0.5
        %v2584 = vmul.f32 %v2569, 0.5
        %v2585 = vmul.f32 %v2572, 0.5
        %v2586 = vmul.f32 %v2577, 0.5
        %v2587 = vmul.f32 %v2561, 0.044715
        %v2588 = vmul.f32 %v2564, 0.044715
        %v2589 = vmul.f32 %v2569, 0.044715
        %v2590 = vmul.f32 %v2572, 0.044715
        %v2591 = vmul.f32 %v2577, 0.044715
        %v2592 = vmul.f32 %v2587, %v2561
        %v2593 = vmul.f32 %v2588, %v2564
        %v2594 = vmul.f32 %v2589, %v2569
        %v2595 = vmul.f32 %v2590, %v2572
        %v2596 = vmul.f32 %v2591, %v2577
        %v2597 = vmul.f32 %v2592, %v2561
        %v2598 = vmul.f32 %v2593, %v2564
        %v2599 = vmul.f32 %v2594, %v2569
        %v2600 = vmul.f32 %v2595, %v2572
        %v2601 = vmul.f32 %v2596, %v2577
        %v2602 = vadd.f32 %v2561, %v2597
        %v2603 = vadd.f32 %v2564, %v2598
        %v2604 = vadd.f32 %v2569, %v2599
        %v2605 = vadd.f32 %v2572, %v2600
        %v2606 = vadd.f32 %v2577, %v2601
        %v2607 = vmul.f32 %v2602, 0.7978846
        %v2608 = vmul.f32 %v2603, 0.7978846
        %v2609 = vmul.f32 %v2604, 0.7978846
        %v2610 = vmul.f32 %v2605, 0.7978846
        %v2611 = vmul.f32 %v2606, 0.7978846
        %v2612 = vtanh.pop %v2607
        %v2613 = vtanh.pop %v2608
        %v2614 = vtanh.pop %v2609
        %v2615 = vtanh.pop %v2610
        %v2616 = vtanh.pop %v2611
        %v2617 = vadd.f32 %v2612, 1.0
        %v2618 = vadd.f32 %v2613, 1.0
        %v2619 = vadd.f32 %v2614, 1.0
        %v2620 = vadd.f32 %v2615, 1.0
        %v2621 = vadd.f32 %v2616, 1.0
        %v2622 = vmul.f32 %v2582, %v2617
        %v2623 = vmul.f32 %v2583, %v2618
        %v2624 = vmul.f32 %v2584, %v2619
        %v2625 = vmul.f32 %v2585, %v2620
        %v2626 = vmul.f32 %v2586, %v2621
        %v2627 = vpack.c.bf16 %v2623, %v2622
        %v2628 = vpack.c.bf16 %v2625, %v2624
        %v2629 = vpack.c.bf16 %v2626, %v2626
        %v2630 = vld [vmem:[%s747] sm:$0xf]
        %v2631 = vld [vmem:[%s747 + $0x4] sm:$0xf]
        %v2632 = vld [vmem:[%s747 + $0x8] sm:$0xf]
        %v2633 = vld [vmem:[%s747 + $0xc] sm:$0xf]
        %v2634 = vld [vmem:[%s747 + $0x10] sm:$0xf]
        %v2635 = vld [vmem:[%s747 + $0x14] sm:$0xf]
        %v2636 = vld [vmem:[%s747 + $0x18] sm:$0xf]
        %v2637 = vld [vmem:[%s747 + $0x1c] sm:$0xf]
        %v2638 = vld [vmem:[%s747 + $0x20] sm:$0xf]
        %v2639 = vld [vmem:[%s747 + $0x24] sm:$0xf]
        %v2640 = vld [vmem:[%s747 + $0x28] sm:$0xf]
        %v2641 = vld [vmem:[%s747 + $0x2c] sm:$0xf]
        %v2642 = vld [vmem:[%s747 + $0x30] sm:$0xf]
        %v2643 = vld [vmem:[%s747 + $0x34] sm:$0xf]
        %v2644 = vld [vmem:[%s747 + $0x38] sm:$0xf]
        %v2645 = vld [vmem:[%s747 + $0x3c] sm:$0xf]
        %v2662 = vunpack.c.l.b16 %v2630
        %v2663 = vunpack.c.l.b16 %v2631
        %v2664 = vunpack.c.l.b16 %v2632
        %v2665 = vunpack.c.l.b16 %v2633
        %v2666 = vunpack.c.l.b16 %v2634
        %v2667 = vunpack.c.l.b16 %v2635
        %v2668 = vunpack.c.l.b16 %v2636
        %v2669 = vunpack.c.l.b16 %v2637
        %v2670 = vunpack.c.l.b16 %v2638
        %v2671 = vunpack.c.l.b16 %v2639
        %v2672 = vunpack.c.l.b16 %v2640
        %v2673 = vunpack.c.l.b16 %v2641
        %v2674 = vunpack.c.l.b16 %v2642
        %v2675 = vunpack.c.l.b16 %v2643
        %v2676 = vunpack.c.l.b16 %v2644
        %v2677 = vunpack.c.l.b16 %v2645
        %v2678 = vpack.c.b16 %v2663, %v2662
        %v2679 = vpack.c.b16 %v2665, %v2664
        %v2680 = vpack.c.b16 %v2667, %v2666
        %v2681 = vpack.c.b16 %v2669, %v2668
        %v2682 = vpack.c.b16 %v2671, %v2670
        %v2683 = vpack.c.b16 %v2673, %v2672
        %v2684 = vpack.c.b16 %v2675, %v2674
        %v2685 = vpack.c.b16 %v2677, %v2676
        %2694 = vmatprep.subr.bf16.mxu0 0
        %2695 = vmatpush1.bf16.msra.mxu0 %v2678
        %2696 = vmatprep.subr.bf16.mxu0 0
        %2697 = vmatpush1.bf16.msra.mxu0 %v2679
        %2698 = vmatprep.subr.bf16.mxu0 0
        %2699 = vmatpush1.bf16.msra.mxu0 %v2680
        %2700 = vmatprep.subr.bf16.mxu0 0
        %2701 = vmatpush1.bf16.msra.mxu0 %v2681
        %2702 = vmatprep.subr.bf16.mxu0 0
        %2703 = vmatpush1.bf16.msra.mxu0 %v2682
        %2704 = vmatprep.subr.bf16.mxu0 0
        %2705 = vmatpush1.bf16.msra.mxu0 %v2683
        %2706 = vmatprep.subr.bf16.mxu0 0
        %2707 = vmatpush1.bf16.msra.mxu0 %v2684
        %2708 = vmatprep.subr.bf16.mxu0 0
        %2709 = vmatpush1.bf16.msra.mxu0 %v2685
        %2710 = vmatprep.subr.bf16.mxu0 0
        %2711 = vmatpush1.bf16.msra.mxu0 0
        %2712 = vmatprep.subr.bf16.mxu0 0
        %2713 = vmatpush1.bf16.msra.mxu0 0
        %2714 = vmatprep.subr.bf16.mxu0 0
        %2715 = vmatpush1.bf16.msra.mxu0 0
        %2716 = vmatprep.subr.bf16.mxu0 0
        %2717 = vmatpush1.bf16.msra.mxu0 0
        %2718 = vmatprep.subr.bf16.mxu0 0
        %2719 = vmatpush1.bf16.msra.mxu0 0
        %2720 = vmatprep.subr.bf16.mxu0 0
        %2721 = vmatpush1.bf16.msra.mxu0 0
        %2722 = vmatprep.subr.bf16.mxu0 0
        %2723 = vmatpush1.bf16.msra.mxu0 0
        %2724 = vmatprep.subr.bf16.mxu0 0
        %2725 = vmatpush1.bf16.msra.mxu0 0
        %2726 = vmatprep.mubr.bf16.mxu0 0
        %2727 = vmatmul.mubr.bf16.gmra.mrb[0].mxu0 %v2627
        %v2728 = vpop.f32.mrb[0].mxu0
        %v2729 = vadd.f32 0.0, %v2728
        %v2730 = vpop.f32.mrb[0].mxu0
        %v2731 = vpop.f32.mrb[0].mxu0
        %v2732 = vadd.f32 0.0, %v2731
        %v2733 = vpop.f32.mrb[0].mxu0
        %2734 = vmatprep.mubr.bf16.mxu0 0
        %2735 = vmatmul.mubr.bf16.gmra.mrb[0].mxu0 %v2628
        %v2736 = vpop.f32.mrb[0].mxu0
        %v2737 = vadd.f32 0.0, %v2736
        %v2738 = vpop.f32.mrb[0].mxu0
        %v2739 = vpop.f32.mrb[0].mxu0
        %v2740 = vadd.f32 0.0, %v2739
        %v2741 = vpop.f32.mrb[0].mxu0
        %2742 = vmatprep.mubr.bf16.mxu0 0
        %2743 = vmatmul.mubr.bf16.gmra.mrb[0].mxu0 %v2629
        %v2744 = vpop.f32.mrb[0].mxu0
        %v2745 = vadd.f32 0.0, %v2744
        %v2746 = vpop.f32.mrb[0].mxu0
        %v2747 = vpop.f32.mrb[0].mxu0
        %v2748 = vpop.f32.mrb[0].mxu0
        %2749 = vdwg.mxu0
        %v2750 = vadd.f32 %v2397, %v2729
        %v2751 = vadd.f32 %v2398, %v2732
        %v2752 = vadd.f32 %v2399, %v2737
        %v2753 = vadd.f32 %v2400, %v2740
        %v2754 = vadd.f32 %v2401, %v2745
        %v2755 = vld [vmem:[%s750] sm:$0x1]
        %v2757 = vlaneseq
        %v2758 = vshrl.u32 %v2757, 7
        %v2759 = vsub.s32 0, %v2758
        %v2760 = vrot.slane %v2755, %v2759
        %v2762 = vadd.f32 %v2750, %v2760
        %v2763 = vadd.f32 %v2751, %v2760
        %v2764 = vadd.f32 %v2752, %v2760
        %v2765 = vadd.f32 %v2753, %v2760
        %v2766 = vadd.f32 %v2754, %v2760
        %2767 = vst.msk [vmem:[#allocation2] sm:$0xff] %vm821, %v2762
        %2768 = vst.msk [vmem:[#allocation2 + $0x8] sm:$0xff] %vm821, %v2763
        %2769 = vst.msk [vmem:[#allocation2 + $0x10] sm:$0xff] %vm821, %v2764
        %2770 = vst.msk [vmem:[#allocation2 + $0x18] sm:$0xff] %vm821, %v2765
        %2771 = vst.msk [vmem:[#allocation2 + $0x20] sm:$0xff] %vm821, %v2766
        %p2772 = scmp.eq.s32.totalorder %s36, 1
        // Predicated region
        $region93: #{tpu_custom_call.1} parent=87 // pred_check
          %p2773 = pneg %p2772
        $region94: #{tpu_custom_call.1} parent=87 // pred_check_branch
          %2775 = sbr.rel (%p2773) target = $region96
        $region95: #{tpu_custom_call.1} parent=87 // pred_region
          %v2776 = vld [vmem:[%s13] sm:$0x1]
          %v2777 = vld [vmem:[%s14] sm:$0x1]
          %v2778 = vsel %vm821, %v2765, 0.0
          %2779 = vadd.xlane.f32.xlu0 %v2778
          %v2780 = vpop.xlane.xlu0 %2779
          %v2781 = vsel %vm821, %v2766, 0.0
          %2782 = vadd.xlane.f32.xlu0 %v2781
          %v2783 = vpop.xlane.xlu0 %2782
          %v2784 = vmul.f32 %v2780, %v837
          %v2785 = vmul.f32 %v2783, %v837
          %v2786 = vsub.f32 %v2765, %v2784
          %v2787 = vsub.f32 %v2766, %v2785
          %v2788 = vmul.f32 %v2786, %v2786
          %v2789 = vmul.f32 %v2787, %v2787
          %v2790 = vsel %vm821, %v2788, 0.0
          %2791 = vadd.xlane.f32.xlu0 %v2790
          %v2792 = vpop.xlane.xlu0 %2791
          %v2793 = vsel %vm821, %v2789, 0.0
          %2794 = vadd.xlane.f32.xlu0 %v2793
          %v2795 = vpop.xlane.xlu0 %2794
          %v2796 = vmul.f32 %v2792, %v837
          %v2797 = vmul.f32 %v2795, %v837
          %v2798 = vadd.f32 %v2796, 1e-06
          %v2799 = vadd.f32 %v2797, 1e-06
          %v2800 = vrsqrt.pop %v2798
          %v2801 = vrsqrt.pop %v2799
          %v2802 = vmul.f32 %v2786, %v2800
          %v2803 = vmul.f32 %v2787, %v2801
          %v2805 = vlaneseq
          %v2806 = vshrl.u32 %v2805, 7
          %v2807 = vsub.s32 0, %v2806
          %v2808 = vrot.slane %v2776, %v2807
          %v2810 = vmul.f32 %v2802, %v2808
          %v2811 = vmul.f32 %v2803, %v2808
          %v2813 = vlaneseq
          %v2814 = vshrl.u32 %v2813, 7
          %v2815 = vsub.s32 0, %v2814
          %v2816 = vrot.slane %v2777, %v2815
          %v2818 = vadd.f32 %v2810, %v2816
          %v2819 = vadd.f32 %v2811, %v2816
          %v2820 = vld [vmem:[%s15] sm:$0xff]
          %v2821 = vld [vmem:[%s15 + $0x8] sm:$0xff]
          %v2822 = vld [vmem:[%s15 + $0x10] sm:$0xff]
          %v2823 = vld [vmem:[%s15 + $0x18] sm:$0xff]
          %v2824 = vld [vmem:[%s16] sm:$0x1]
          %v2826 = vlaneseq
          %v2827 = vshrl.u32 %v2826, 7
          %v2828 = vsub.s32 0, %v2827
          %v2829 = vrot.slane %v2824, %v2828
          %v2832 = vsel %vm821, %v2818, 0
          %v2835 = vsel %vm821, %v2819, 0
          %2837 = vmatprep.subr.mxu0 0.0
          %2838 = vmatpush1.msra.mxu0 %v2820
          %2839 = vmatprep.subr.mxu0 0.0
          %2840 = vmatpush1.msra.mxu0 %v2821
          %2841 = vmatprep.subr.mxu0 0.0
          %2842 = vmatpush1.msra.mxu0 %v2822
          %2843 = vmatprep.subr.mxu0 0.0
          %2844 = vmatpush1.msra.mxu0 %v2823
          %2845 = vmatprep.subr.mxu0 0.0
          %2846 = vmatpush1.msra.mxu0 0.0
          %2847 = vmatprep.subr.mxu0 0.0
          %2848 = vmatpush1.msra.mxu0 0.0
          %2849 = vmatprep.subr.mxu0 0.0
          %2850 = vmatpush1.msra.mxu0 0.0
          %2851 = vmatprep.subr.mxu0 0.0
          %2852 = vmatpush1.msra.mxu0 0.0
          %2853 = vmatprep.subr.mxu0 0.0
          %2854 = vmatpush1.msra.mxu0 0.0
          %2855 = vmatprep.subr.mxu0 0.0
          %2856 = vmatpush1.msra.mxu0 0.0
          %2857 = vmatprep.subr.mxu0 0.0
          %2858 = vmatpush1.msra.mxu0 0.0
          %2859 = vmatprep.subr.mxu0 0.0
          %2860 = vmatpush1.msra.mxu0 0.0
          %2861 = vmatprep.subr.mxu0 0.0
          %2862 = vmatpush1.msra.mxu0 0.0
          %2863 = vmatprep.subr.mxu0 0.0
          %2864 = vmatpush1.msra.mxu0 0.0
          %2865 = vmatprep.subr.mxu0 0.0
          %2866 = vmatpush1.msra.mxu0 0.0
          %2867 = vmatprep.subr.mxu0 0.0
          %2868 = vmatpush1.msra.mxu0 0.0
          %2869 = vmatprep.subr.mxu0 0.0
          %2870 = vmatpush1.msra.mxu0 0.0
          %2871 = vmatprep.subr.mxu0 0.0
          %2872 = vmatpush1.msra.mxu0 0.0
          %2873 = vmatprep.subr.mxu0 0.0
          %2874 = vmatpush1.msra.mxu0 0.0
          %2875 = vmatprep.subr.mxu0 0.0
          %2876 = vmatpush1.msra.mxu0 0.0
          %2877 = vmatprep.subr.mxu0 0.0
          %2878 = vmatpush1.msra.mxu0 0.0
          %2879 = vmatprep.subr.mxu0 0.0
          %2880 = vmatpush1.msra.mxu0 0.0
          %2881 = vmatprep.subr.mxu0 0.0
          %2882 = vmatpush1.msra.mxu0 0.0
          %2883 = vmatprep.subr.mxu0 0.0
          %2884 = vmatpush1.msra.mxu0 0.0
          %2885 = vmatprep.subr.mxu0 0.0
          %2886 = vmatpush1.msra.mxu0 0.0
          %2887 = vmatprep.subr.mxu0 0.0
          %2888 = vmatpush1.msra.mxu0 0.0
          %2889 = vmatprep.subr.mxu0 0.0
          %2890 = vmatpush1.msra.mxu0 0.0
          %2891 = vmatprep.subr.mxu0 0.0
          %2892 = vmatpush1.msra.mxu0 0.0
          %2893 = vmatprep.subr.mxu0 0.0
          %2894 = vmatpush1.msra.mxu0 0.0
          %2895 = vmatprep.subr.mxu0 0.0
          %2896 = vmatpush1.msra.mxu0 0.0
          %2897 = vmatprep.subr.mxu0 0.0
          %2898 = vmatpush1.msra.mxu0 0.0
          %2899 = vmatprep.subr.mxu0 0.0
          %2900 = vmatpush1.msra.mxu0 0.0
          %2901 = vmatprep.mubr.f32.mxu0 0.0
          %2902 = vmatmul.mubr.f32.gmra.mrb[0].mxu0 %v2832
          %v2903 = vpop.f32.mrb[0].mxu0
          %v2904 = vadd.f32 %v2829, %v2903
          %v2905 = vpop.f32.mrb[0].mxu0
          %2906 = vmatprep.mubr.f32.mxu0 0.0
          %2907 = vmatmul.mubr.f32.gmra.mrb[0].mxu0 %v2835
          %v2908 = vpop.f32.mrb[0].mxu0
          %v2909 = vadd.f32 %v2829, %v2908
          %v2910 = vpop.f32.mrb[0].mxu0
          %2911 = vdwg.mxu0
          %2912 = vst [vmem:[%s701] sm:$0xff] %v2904
          %2913 = vst [vmem:[%s701 + $0x8] sm:$0xff] %v2909
        $region96: #{tpu_custom_call.1} parent=87 // pred_fallthru
          _
        %s2914 = sand.u32 %s473, 1
        %s2915 = scalar_lea.sflag [#allocation6], %s2914
        %s2916 = sand.u32 %s473, 1
        %s2917 = smul.addr %s2916, 16
        %s2918 = scalar_lea.vmem [#allocation5], %s2917
        // Predicated region
        $region97: #{tpu_custom_call.1} parent=87 // pred_check
          %p2919 = pneg %p483
        $region98: #{tpu_custom_call.1} parent=87 // pred_check_branch
          %2921 = sbr.rel (%p2919) target = $region100
        $region99: #{tpu_custom_call.1} parent=87 // pred_region
          %s2923 = ssub.s32 256, 256
          %2924 = vsyncadd %s2915, %s2923
          %s2925 = smul.addr %s35, 2
          %s2926 = smul.addr %s2925, 128
          %s2927 = scalar_lea.hbm %s17, %s2926
          %s2928 = sshll.u32 %s2918, 4
          %s2929 = int_to_ptr.vmem [resolvable:$true] %s2928
          %2934 = dma.vmem_to_hbm [thread:$0]  %s2929, 256, %s2927, %s2915, 128, 128, 8
        $region100: #{tpu_custom_call.1} parent=87 // pred_fallthru
          _
      $region88: #{tpu_custom_call.1} parent=5 // pred_fallthru
        _
      %p2935 = scmp.le.s32.totalorder 2, %s26
      // Predicated region
      $region101: #{tpu_custom_call.1} parent=5 // pred_check
        %p2936 = pneg %p2935
      $region102: #{tpu_custom_call.1} parent=5 // pred_check_branch
        %2938 = sbr.rel (%p2936) target = $region104
      $region103: #{tpu_custom_call.1} parent=5 // pred_region
        %s2939 = ssub.s32 %s26, 2
        // Predicated region
        $region105: #{tpu_custom_call.1} parent=103 // pred_check
          %p2940 = pneg %p489
        $region106: #{tpu_custom_call.1} parent=103 // pred_check_branch
          %2942 = sbr.rel (%p2940) target = $region108
        $region107: #{tpu_custom_call.1} parent=103 // pred_region
          %s2943 = sand.u32 %s474, 1
          %s2944 = scalar_lea.sflag [#allocation6], %s2943
          %s2945 = sand.u32 %s474, 1
          %s2946 = smul.addr %s2945, 16
          %s2947 = scalar_lea.vmem [#allocation5], %s2946
          %2948 = dma.done %s2944, 256
        $region108: #{tpu_custom_call.1} parent=103 // pred_fallthru
          _
      $region104: #{tpu_custom_call.1} parent=5 // pred_fallthru
        _
    $region6: #{tpu_custom_call.1} parent=1 // loop_footer
      %s30 = sadd.s32 1, %s26
    $region7: #{tpu_custom_call.1} parent=1 // loop_footer_branch
      %25 = sbr.rel target = $region3
    $region8: #{tpu_custom_call.1} parent=1 // loop_exit
      _
    %2949 = vsyncpa [#allocation6], 1
    %s2950 = scalar_lea.sflag [#allocation6], 1
    %2951 = vsyncpa %s2950, 1

</llo_original>
